<compile_context>
chip_gen: v6e
topology: v6e:2x2x1
jax: 0.10.0
libtpu: 0.0.40
codegen_flags: <defaults>
</compile_context>

<pallas_src>
import numpy as np
import jax
import jax.numpy as jnp
from jax import lax
from jax.experimental import pallas as pl
from jax.experimental.pallas import tpu as pltpu

d_k = d_v = 3
d_model = 6
n_heads = 2
SRC_VOCAB = 4   # len(source_vocab)
TGT_VOCAB = 5   # len(target_vocab)

_VMEM = pl.BlockSpec(memory_space=pltpu.MemorySpace.VMEM)


# ----------------------------------------------------------------------------
# Single fused Pallas kernel: embeddings -> enc MHA+LN -> dec self MHA+LN
#                             -> dec cross MHA+LN -> final linear
# ----------------------------------------------------------------------------
def fused_transformer_kernel(
        enc_ids_ref, dec_ids_ref, src_emb_ref, tgt_emb_ref,
        enc_wq_ref, enc_wk_ref, enc_wv_ref, enc_g_ref, enc_b_ref,
        dec_wq_ref, dec_wk_ref, dec_wv_ref, dec_g_ref, dec_b_ref,
        fc_w_ref, out_ref):
    B = enc_ids_ref.shape[0]
    scale = 1.0 / float(np.sqrt(d_k))

    def bcast_w(ref):
        w = ref[...]                       # load exactly once
        return jnp.broadcast_to(w, (B,) + w.shape)

    # --- all weights loaded once, hoisted; decoder weights shared twice ------
    src_tab = bcast_w(src_emb_ref)         # (B, SRC_VOCAB, D)
    tgt_tab = bcast_w(tgt_emb_ref)         # (B, TGT_VOCAB, D)
    enc_w = (bcast_w(enc_wq_ref), bcast_w(enc_wk_ref), bcast_w(enc_wv_ref))
    dec_w = (bcast_w(dec_wq_ref), bcast_w(dec_wk_ref), bcast_w(dec_wv_ref))
    fc_w = bcast_w(fc_w_ref)               # (B, D, TGT_VOCAB)
    enc_g, enc_b = enc_g_ref[...], enc_b_ref[...]      # (1, 1, D)
    dec_g, dec_b = dec_g_ref[...], dec_b_ref[...]

    def embed(ids, table_b):
        # ids: (B, L, 1) int32; table_b: (B, V, D).  One-hot matmul gather.
        L = ids.shape[1]
        V = table_b.shape[1]
        lane = lax.broadcasted_iota(jnp.int32, (B, L, V), 2)
        onehot = (ids == lane).astype(jnp.float32)               # (B, L, V)
        return jnp.einsum('blv,bvd->bld', onehot, table_b,
                          preferred_element_type=jnp.float32)    # (B, L, D)

    def mha_ln(q_in, k_in, v_in, w3, gamma, beta):
        # q_in: (B, Lq, D); k_in/v_in: (B, Lk, D); batched over B, no Python
        # batch loop.  Heads: static 2-way unroll over lane slices.
        wq_b, wk_b, wv_b = w3
        Q = jnp.einsum('bld,bde->ble', q_in, wq_b, preferred_element_type=jnp.float32)
        K = jnp.einsum('bld,bde->ble', k_in, wk_b, preferred_element_type=jnp.float32)
        V = jnp.einsum('bld,bde->ble', v_in, wv_b, preferred_element_type=jnp.float32)
        heads = []
        for h in range(n_heads):
            Qh = Q[:, :, h * d_k:(h + 1) * d_k]
            Kh = K[:, :, h * d_k:(h + 1) * d_k]
            Vh = V[:, :, h * d_v:(h + 1) * d_v]
            s = jnp.einsum('bqd,bkd->bqk', Qh, Kh,
                           preferred_element_type=jnp.float32) * scale
            s = s - jnp.max(s, axis=-1, keepdims=True)
            e = jnp.exp(s)
            attn = e * pl.reciprocal(jnp.sum(e, axis=-1, keepdims=True),
                                     approx=True)
            heads.append(jnp.einsum('bqk,bkd->bqd', attn, Vh,
                                    preferred_element_type=jnp.float32))
        prob = jnp.concatenate(heads, axis=-1)                   # (B, Lq, D)
        # residual + LayerNorm (biased variance, eps=1e-5, like torch.nn.LayerNorm)
        x = q_in + prob
        mean = jnp.mean(x, axis=-1, keepdims=True)
        var = jnp.mean((x - mean) ** 2, axis=-1, keepdims=True)
        y = (x - mean) * lax.rsqrt(var + 1e-5)
        return y * gamma + beta

    # Encoder
    enc_emb = embed(enc_ids_ref[...], src_tab)                   # (B, S, D)
    enc_out = mha_ln(enc_emb, enc_emb, enc_emb, enc_w, enc_g, enc_b)

    # Decoder (same attention weights for self- and cross-attention)
    dec_emb = embed(dec_ids_ref[...], tgt_tab)                   # (B, T, D)
    dec_out = mha_ln(dec_emb, dec_emb, dec_emb, dec_w, dec_g, dec_b)
    dec_out = mha_ln(dec_out, enc_out, enc_out, dec_w, dec_g, dec_b)

    # Final projection (only narrow store in the whole kernel)
    out_ref[...] = jnp.einsum('btd,bdv->btv', dec_out, fc_w,
                              preferred_element_type=jnp.float32)


# ----------------------------------------------------------------------------
# Wrapper: one pallas_call for the whole forward
# ----------------------------------------------------------------------------
@jax.jit
def transformer_forward_pallas(params, encoder_input, decoder_input):
    B, S = encoder_input.shape
    _, T = decoder_input.shape
    enc_ids = encoder_input.astype(jnp.int32)[:, :, None]        # (B, S, 1)
    dec_ids = decoder_input.astype(jnp.int32)[:, :, None]        # (B, T, 1)
    ea, da = params["enc_attn"], params["dec_attn"]

    def gb(a, k):
        return a[k].reshape(1, 1, d_model)

    out = pl.pallas_call(
        fused_transformer_kernel,
        out_shape=jax.ShapeDtypeStruct((B, T, TGT_VOCAB), jnp.float32),
        in_specs=[_VMEM] * 15,
        out_specs=_VMEM,
    )(enc_ids, dec_ids, params["src_emb"], params["tgt_emb"],
      ea["wq"], ea["wk"], ea["wv"], gb(ea, "gamma"), gb(ea, "beta"),
      da["wq"], da["wk"], da["wv"], gb(da, "gamma"), gb(da, "beta"),
      params["fc_w"])
    return out.reshape(-1, TGT_VOCAB)                            # .view(-1, vocab)


# ----------------------------------------------------------------------------
# Pure-JAX reference (for correctness check only)
# ----------------------------------------------------------------------------
def _mha_ref(q_in, k_in, v_in, p):
    B, Lq, _ = q_in.shape
    Lk = k_in.shape[1]
    Q = (q_in @ p["wq"]).reshape(B, Lq, n_heads, d_k).transpose(0, 2, 1, 3)
    K = (k_in @ p["wk"]).reshape(B, Lk, n_heads, d_k).transpose(0, 2, 1, 3)
    V = (v_in @ p["wv"]).reshape(B, Lk, n_heads, d_v).transpose(0, 2, 1, 3)
    scores = jnp.einsum("bhqd,bhkd->bhqk", Q, K) / np.sqrt(d_k)
    attn = jax.nn.softmax(scores, axis=-1)
    prob = jnp.einsum("bhqk,bhkd->bhqd", attn, V)
    prob = prob.transpose(0, 2, 1, 3).reshape(B, Lq, n_heads * d_v)
    x = q_in + prob
    mean = x.mean(-1, keepdims=True)
    var = ((x - mean) ** 2).mean(-1, keepdims=True)
    y = (x - mean) / jnp.sqrt(var + 1e-5)
    return y * p["gamma"][0] + p["beta"][0]


def transformer_forward_ref(params, encoder_input, decoder_input):
    enc_emb = jnp.take(params["src_emb"], encoder_input, axis=0)
    enc_out = _mha_ref(enc_emb, enc_emb, enc_emb, params["enc_attn"])
    dec_emb = jnp.take(params["tgt_emb"], decoder_input, axis=0)
    dec_out = _mha_ref(dec_emb, dec_emb, dec_emb, params["dec_attn"])
    dec_out = _mha_ref(dec_out, enc_out, enc_out, params["dec_attn"])
    return dec_out.reshape(-1, d_model) @ params["fc_w"]


# ----------------------------------------------------------------------------
# Deterministic parameter init (synthetic, matches module shapes)
# ----------------------------------------------------------------------------
def init_params(key):
    keys = jax.random.split(key, 10)

    def lin(k, fan_in, fan_out):
        bound = 1.0 / np.sqrt(fan_in)
        # stored as (in, out) == W^T of nn.Linear's (out, in) weight
        return jax.random.uniform(k, (fan_in, fan_out), jnp.float32, -bound, bound)

    def attn_params(ks):
        return {
            "wq": lin(ks[0], d_model, d_k * n_heads),
            "wk": lin(ks[1], d_model, d_k * n_heads),
            "wv": lin(ks[2], d_model, d_v * n_heads),
            "gamma": jnp.ones((1, d_model), jnp.float32),
            "beta": jnp.zeros((1, d_model), jnp.float32),
        }

    return {
        "src_emb": jax.random.normal(keys[0], (SRC_VOCAB, d_model), jnp.float32),
        "tgt_emb": jax.random.normal(keys[1], (TGT_VOCAB, d_model), jnp.float32),
        "enc_attn": attn_params(keys[2:5]),
        "dec_attn": attn_params(keys[5:8]),
        "fc_w": lin(keys[8], d_model, TGT_VOCAB),
    }


if __name__ == "__main__":
    key = jax.random.PRNGKey(0)
    pkey, ekey, dkey = jax.random.split(key, 3)
    params = init_params(pkey)

    B, S, T = 2, 4, TGT_VOCAB   # target_len == len(target_vocab) == 5
    encoder_input = jax.random.randint(ekey, (B, S), 0, SRC_VOCAB, dtype=jnp.int32)
    decoder_input = jax.random.randint(dkey, (B, T), 0, TGT_VOCAB, dtype=jnp.int32)

    logits = transformer_forward_pallas(params, encoder_input, decoder_input)
    logits = jax.block_until_ready(logits)

    ref = transformer_forward_ref(params, encoder_input, decoder_input)
    assert logits.shape == (B * T, TGT_VOCAB), logits.shape
    # Tolerance loosened slightly: softmax uses the EUP approximate reciprocal.
    np.testing.assert_allclose(np.asarray(logits), np.asarray(ref),
                               rtol=1e-2, atol=1e-2)
    print("KERNEL_OK")
</pallas_src>

<mosaic_0001>
module attributes {stable_mosaic.version = 11 : i64} {
  func.func @fused_transformer_kernel(%arg0: memref<2x4x1xi32, #tpu.memory_space<vmem>>, %arg1: memref<2x5x1xi32, #tpu.memory_space<vmem>>, %arg2: memref<4x6xf32, #tpu.memory_space<vmem>>, %arg3: memref<5x6xf32, #tpu.memory_space<vmem>>, %arg4: memref<6x6xf32, #tpu.memory_space<vmem>>, %arg5: memref<6x6xf32, #tpu.memory_space<vmem>>, %arg6: memref<6x6xf32, #tpu.memory_space<vmem>>, %arg7: memref<1x1x6xf32, #tpu.memory_space<vmem>>, %arg8: memref<1x1x6xf32, #tpu.memory_space<vmem>>, %arg9: memref<6x6xf32, #tpu.memory_space<vmem>>, %arg10: memref<6x6xf32, #tpu.memory_space<vmem>>, %arg11: memref<6x6xf32, #tpu.memory_space<vmem>>, %arg12: memref<1x1x6xf32, #tpu.memory_space<vmem>>, %arg13: memref<1x1x6xf32, #tpu.memory_space<vmem>>, %arg14: memref<6x5xf32, #tpu.memory_space<vmem>>, %arg15: memref<2x5x5xf32, #tpu.memory_space<vmem>>) attributes {dimension_semantics = [], scalar_prefetch = 0 : i64, scratch_operands = 0 : i64, tpu.core_type = #tpu.core_type<tc>} {
    %c0 = arith.constant 0 : index
    %c0_0 = arith.constant 0 : index
    %0 = vector.load %arg2[%c0, %c0_0] : memref<4x6xf32, #tpu.memory_space<vmem>>, vector<4x6xf32>
    %1 = vector.shape_cast %0 : vector<4x6xf32> to vector<1x4x6xf32>
    %2 = vector.broadcast %1 : vector<1x4x6xf32> to vector<2x4x6xf32>
    %c0_1 = arith.constant 0 : index
    %c0_2 = arith.constant 0 : index
    %3 = vector.load %arg3[%c0_1, %c0_2] : memref<5x6xf32, #tpu.memory_space<vmem>>, vector<5x6xf32>
    %4 = vector.shape_cast %3 : vector<5x6xf32> to vector<1x5x6xf32>
    %5 = vector.broadcast %4 : vector<1x5x6xf32> to vector<2x5x6xf32>
    %c0_3 = arith.constant 0 : index
    %c0_4 = arith.constant 0 : index
    %6 = vector.load %arg4[%c0_3, %c0_4] : memref<6x6xf32, #tpu.memory_space<vmem>>, vector<6x6xf32>
    %7 = vector.shape_cast %6 : vector<6x6xf32> to vector<1x6x6xf32>
    %8 = vector.broadcast %7 : vector<1x6x6xf32> to vector<2x6x6xf32>
    %c0_5 = arith.constant 0 : index
    %c0_6 = arith.constant 0 : index
    %9 = vector.load %arg5[%c0_5, %c0_6] : memref<6x6xf32, #tpu.memory_space<vmem>>, vector<6x6xf32>
    %10 = vector.shape_cast %9 : vector<6x6xf32> to vector<1x6x6xf32>
    %11 = vector.broadcast %10 : vector<1x6x6xf32> to vector<2x6x6xf32>
    %c0_7 = arith.constant 0 : index
    %c0_8 = arith.constant 0 : index
    %12 = vector.load %arg6[%c0_7, %c0_8] : memref<6x6xf32, #tpu.memory_space<vmem>>, vector<6x6xf32>
    %13 = vector.shape_cast %12 : vector<6x6xf32> to vector<1x6x6xf32>
    %14 = vector.broadcast %13 : vector<1x6x6xf32> to vector<2x6x6xf32>
    %c0_9 = arith.constant 0 : index
    %c0_10 = arith.constant 0 : index
    %15 = vector.load %arg9[%c0_9, %c0_10] : memref<6x6xf32, #tpu.memory_space<vmem>>, vector<6x6xf32>
    %16 = vector.shape_cast %15 : vector<6x6xf32> to vector<1x6x6xf32>
    %17 = vector.broadcast %16 : vector<1x6x6xf32> to vector<2x6x6xf32>
    %c0_11 = arith.constant 0 : index
    %c0_12 = arith.constant 0 : index
    %18 = vector.load %arg10[%c0_11, %c0_12] : memref<6x6xf32, #tpu.memory_space<vmem>>, vector<6x6xf32>
    %19 = vector.shape_cast %18 : vector<6x6xf32> to vector<1x6x6xf32>
    %20 = vector.broadcast %19 : vector<1x6x6xf32> to vector<2x6x6xf32>
    %c0_13 = arith.constant 0 : index
    %c0_14 = arith.constant 0 : index
    %21 = vector.load %arg11[%c0_13, %c0_14] : memref<6x6xf32, #tpu.memory_space<vmem>>, vector<6x6xf32>
    %22 = vector.shape_cast %21 : vector<6x6xf32> to vector<1x6x6xf32>
    %23 = vector.broadcast %22 : vector<1x6x6xf32> to vector<2x6x6xf32>
    %c0_15 = arith.constant 0 : index
    %c0_16 = arith.constant 0 : index
    %24 = vector.load %arg14[%c0_15, %c0_16] : memref<6x5xf32, #tpu.memory_space<vmem>>, vector<6x5xf32>
    %25 = vector.shape_cast %24 : vector<6x5xf32> to vector<1x6x5xf32>
    %26 = vector.broadcast %25 : vector<1x6x5xf32> to vector<2x6x5xf32>
    %c0_17 = arith.constant 0 : index
    %c0_18 = arith.constant 0 : index
    %c0_19 = arith.constant 0 : index
    %27 = vector.load %arg7[%c0_17, %c0_18, %c0_19] : memref<1x1x6xf32, #tpu.memory_space<vmem>>, vector<1x1x6xf32>
    %c0_20 = arith.constant 0 : index
    %c0_21 = arith.constant 0 : index
    %c0_22 = arith.constant 0 : index
    %28 = vector.load %arg8[%c0_20, %c0_21, %c0_22] : memref<1x1x6xf32, #tpu.memory_space<vmem>>, vector<1x1x6xf32>
    %c0_23 = arith.constant 0 : index
    %c0_24 = arith.constant 0 : index
    %c0_25 = arith.constant 0 : index
    %29 = vector.load %arg12[%c0_23, %c0_24, %c0_25] : memref<1x1x6xf32, #tpu.memory_space<vmem>>, vector<1x1x6xf32>
    %c0_26 = arith.constant 0 : index
    %c0_27 = arith.constant 0 : index
    %c0_28 = arith.constant 0 : index
    %30 = vector.load %arg13[%c0_26, %c0_27, %c0_28] : memref<1x1x6xf32, #tpu.memory_space<vmem>>, vector<1x1x6xf32>
    %c0_29 = arith.constant 0 : index
    %c0_30 = arith.constant 0 : index
    %c0_31 = arith.constant 0 : index
    %31 = vector.load %arg0[%c0_29, %c0_30, %c0_31] : memref<2x4x1xi32, #tpu.memory_space<vmem>>, vector<2x4x1xi32>
    %32 = tpu.iota {dimensions = array<i32: 2>} : vector<2x4x4xi32>
    %33 = vector.broadcast %31 : vector<2x4x1xi32> to vector<2x4x4xi32>
    %34 = arith.cmpi eq, %33, %32 : vector<2x4x4xi32>
    %35 = arith.extui %34 : vector<2x4x4xi1> to vector<2x4x4xi32>
    %36 = arith.sitofp %35 : vector<2x4x4xi32> to vector<2x4x4xf32>
    "tpu.trace_start"() <{level = 10 : i32, message = "blv,bvd->bld"}> : () -> ()
    %cst = arith.constant dense<0.000000e+00> : vector<2x4x6xf32>
    %37 = tpu.matmul %36, %2, %cst {dimension_numbers = #tpu.dot_dimension_numbers<[2], [1], [1], [2], [0, 0, 0, 1, 1, 2], [0], [0]>} : vector<2x4x4xf32>, vector<2x4x6xf32>, vector<2x4x6xf32> -> vector<2x4x6xf32>
    "tpu.trace_stop"() : () -> ()
    "tpu.trace_start"() <{level = 10 : i32, message = "bld,bde->ble"}> : () -> ()
    %cst_32 = arith.constant dense<0.000000e+00> : vector<2x4x6xf32>
    %38 = tpu.matmul %37, %8, %cst_32 {dimension_numbers = #tpu.dot_dimension_numbers<[2], [1], [1], [2], [0, 0, 0, 1, 1, 2], [0], [0]>} : vector<2x4x6xf32>, vector<2x6x6xf32>, vector<2x4x6xf32> -> vector<2x4x6xf32>
    %cst_33 = arith.constant dense<0.000000e+00> : vector<2x4x6xf32>
    %39 = tpu.matmul %37, %11, %cst_33 {dimension_numbers = #tpu.dot_dimension_numbers<[2], [1], [1], [2], [0, 0, 0, 1, 1, 2], [0], [0]>} : vector<2x4x6xf32>, vector<2x6x6xf32>, vector<2x4x6xf32> -> vector<2x4x6xf32>
    %cst_34 = arith.constant dense<0.000000e+00> : vector<2x4x6xf32>
    %40 = tpu.matmul %37, %14, %cst_34 {dimension_numbers = #tpu.dot_dimension_numbers<[2], [1], [1], [2], [0, 0, 0, 1, 1, 2], [0], [0]>} : vector<2x4x6xf32>, vector<2x6x6xf32>, vector<2x4x6xf32> -> vector<2x4x6xf32>
    "tpu.trace_stop"() : () -> ()
    %41 = vector.extract_strided_slice %38 {offsets = [0, 0, 0], sizes = [2, 4, 3], strides = [1, 1, 1]} : vector<2x4x6xf32> to vector<2x4x3xf32>
    %42 = vector.extract_strided_slice %39 {offsets = [0, 0, 0], sizes = [2, 4, 3], strides = [1, 1, 1]} : vector<2x4x6xf32> to vector<2x4x3xf32>
    %43 = vector.extract_strided_slice %40 {offsets = [0, 0, 0], sizes = [2, 4, 3], strides = [1, 1, 1]} : vector<2x4x6xf32> to vector<2x4x3xf32>
    "tpu.trace_start"() <{level = 10 : i32, message = "bqd,bkd->bqk"}> : () -> ()
    %cst_35 = arith.constant dense<0.000000e+00> : vector<2x4x4xf32>
    %44 = tpu.matmul %41, %42, %cst_35 {dimension_numbers = #tpu.dot_dimension_numbers<[2], [2], [1], [1], [0, 0, 0, 1, 1, 1], [0], [0]>} : vector<2x4x3xf32>, vector<2x4x3xf32>, vector<2x4x4xf32> -> vector<2x4x4xf32>
    "tpu.trace_stop"() : () -> ()
    %cst_36 = arith.constant 0.577350259 : f32
    %45 = vector.broadcast %cst_36 : f32 to vector<2x4x4xf32>
    %46 = arith.mulf %44, %45 : vector<2x4x4xf32>
    %cst_37 = arith.constant dense<0xFF800000> : vector<2x4xf32>
    %47 = vector.multi_reduction <maximumf>, %46, %cst_37 [2] : vector<2x4x4xf32> to vector<2x4xf32>
    %48 = vector.shape_cast %47 : vector<2x4xf32> to vector<2x4x1xf32>
    %49 = vector.broadcast %48 : vector<2x4x1xf32> to vector<2x4x4xf32>
    %50 = arith.subf %46, %49 : vector<2x4x4xf32>
    %51 = math.exp %50 : vector<2x4x4xf32>
    %cst_38 = arith.constant dense<0.000000e+00> : vector<2x4xf32>
    %52 = vector.multi_reduction <add>, %51, %cst_38 [2] : vector<2x4x4xf32> to vector<2x4xf32>
    %53 = vector.shape_cast %52 : vector<2x4xf32> to vector<2x4x1xf32>
    %54 = tpu.reciprocal %53 {approx = true} : vector<2x4x1xf32> -> vector<2x4x1xf32>
    %55 = vector.broadcast %54 : vector<2x4x1xf32> to vector<2x4x4xf32>
    %56 = arith.mulf %51, %55 : vector<2x4x4xf32>
    "tpu.trace_start"() <{level = 10 : i32, message = "bqk,bkd->bqd"}> : () -> ()
    %cst_39 = arith.constant dense<0.000000e+00> : vector<2x4x3xf32>
    %57 = tpu.matmul %56, %43, %cst_39 {dimension_numbers = #tpu.dot_dimension_numbers<[2], [1], [1], [2], [0, 0, 0, 1, 1, 2], [0], [0]>} : vector<2x4x4xf32>, vector<2x4x3xf32>, vector<2x4x3xf32> -> vector<2x4x3xf32>
    "tpu.trace_stop"() : () -> ()
    %58 = vector.extract_strided_slice %38 {offsets = [0, 0, 3], sizes = [2, 4, 3], strides = [1, 1, 1]} : vector<2x4x6xf32> to vector<2x4x3xf32>
    %59 = vector.extract_strided_slice %39 {offsets = [0, 0, 3], sizes = [2, 4, 3], strides = [1, 1, 1]} : vector<2x4x6xf32> to vector<2x4x3xf32>
    %60 = vector.extract_strided_slice %40 {offsets = [0, 0, 3], sizes = [2, 4, 3], strides = [1, 1, 1]} : vector<2x4x6xf32> to vector<2x4x3xf32>
    "tpu.trace_start"() <{level = 10 : i32, message = "bqd,bkd->bqk"}> : () -> ()
    %cst_40 = arith.constant dense<0.000000e+00> : vector<2x4x4xf32>
    %61 = tpu.matmul %58, %59, %cst_40 {dimension_numbers = #tpu.dot_dimension_numbers<[2], [2], [1], [1], [0, 0, 0, 1, 1, 1], [0], [0]>} : vector<2x4x3xf32>, vector<2x4x3xf32>, vector<2x4x4xf32> -> vector<2x4x4xf32>
    "tpu.trace_stop"() : () -> ()
    %cst_41 = arith.constant 0.577350259 : f32
    %62 = vector.broadcast %cst_41 : f32 to vector<2x4x4xf32>
    %63 = arith.mulf %61, %62 : vector<2x4x4xf32>
    %cst_42 = arith.constant dense<0xFF800000> : vector<2x4xf32>
    %64 = vector.multi_reduction <maximumf>, %63, %cst_42 [2] : vector<2x4x4xf32> to vector<2x4xf32>
    %65 = vector.shape_cast %64 : vector<2x4xf32> to vector<2x4x1xf32>
    %66 = vector.broadcast %65 : vector<2x4x1xf32> to vector<2x4x4xf32>
    %67 = arith.subf %63, %66 : vector<2x4x4xf32>
    %68 = math.exp %67 : vector<2x4x4xf32>
    %cst_43 = arith.constant dense<0.000000e+00> : vector<2x4xf32>
    %69 = vector.multi_reduction <add>, %68, %cst_43 [2] : vector<2x4x4xf32> to vector<2x4xf32>
    %70 = vector.shape_cast %69 : vector<2x4xf32> to vector<2x4x1xf32>
    %71 = tpu.reciprocal %70 {approx = true} : vector<2x4x1xf32> -> vector<2x4x1xf32>
    %72 = vector.broadcast %71 : vector<2x4x1xf32> to vector<2x4x4xf32>
    %73 = arith.mulf %68, %72 : vector<2x4x4xf32>
    "tpu.trace_start"() <{level = 10 : i32, message = "bqk,bkd->bqd"}> : () -> ()
    %cst_44 = arith.constant dense<0.000000e+00> : vector<2x4x3xf32>
    %74 = tpu.matmul %73, %60, %cst_44 {dimension_numbers = #tpu.dot_dimension_numbers<[2], [1], [1], [2], [0, 0, 0, 1, 1, 2], [0], [0]>} : vector<2x4x4xf32>, vector<2x4x3xf32>, vector<2x4x3xf32> -> vector<2x4x3xf32>
    "tpu.trace_stop"() : () -> ()
    %75 = tpu.concatenate %57, %74 in 2 : vector<2x4x3xf32>, vector<2x4x3xf32> -> vector<2x4x6xf32>
    %76 = arith.addf %37, %75 : vector<2x4x6xf32>
    %cst_45 = arith.constant dense<0.000000e+00> : vector<2x4xf32>
    %77 = vector.multi_reduction <add>, %76, %cst_45 [2] : vector<2x4x6xf32> to vector<2x4xf32>
    %78 = vector.shape_cast %77 : vector<2x4xf32> to vector<2x4x1xf32>
    %cst_46 = arith.constant 6.000000e+00 : f32
    %79 = vector.broadcast %cst_46 : f32 to vector<2x4x1xf32>
    %80 = arith.divf %78, %79 : vector<2x4x1xf32>
    %81 = vector.broadcast %80 : vector<2x4x1xf32> to vector<2x4x6xf32>
    %82 = arith.subf %76, %81 : vector<2x4x6xf32>
    %83 = arith.mulf %82, %82 : vector<2x4x6xf32>
    %cst_47 = arith.constant dense<0.000000e+00> : vector<2x4xf32>
    %84 = vector.multi_reduction <add>, %83, %cst_47 [2] : vector<2x4x6xf32> to vector<2x4xf32>
    %85 = vector.shape_cast %84 : vector<2x4xf32> to vector<2x4x1xf32>
    %cst_48 = arith.constant 6.000000e+00 : f32
    %86 = vector.broadcast %cst_48 : f32 to vector<2x4x1xf32>
    %87 = arith.divf %85, %86 : vector<2x4x1xf32>
    %88 = vector.broadcast %80 : vector<2x4x1xf32> to vector<2x4x6xf32>
    %89 = arith.subf %76, %88 : vector<2x4x6xf32>
    %cst_49 = arith.constant 9.99999974E-6 : f32
    %90 = vector.broadcast %cst_49 : f32 to vector<2x4x1xf32>
    %91 = arith.addf %87, %90 : vector<2x4x1xf32>
    %92 = math.rsqrt %91 : vector<2x4x1xf32>
    %93 = vector.broadcast %92 : vector<2x4x1xf32> to vector<2x4x6xf32>
    %94 = arith.mulf %89, %93 : vector<2x4x6xf32>
    %95 = vector.broadcast %27 : vector<1x1x6xf32> to vector<2x4x6xf32>
    %96 = arith.mulf %94, %95 : vector<2x4x6xf32>
    %97 = vector.broadcast %28 : vector<1x1x6xf32> to vector<2x4x6xf32>
    %98 = arith.addf %96, %97 : vector<2x4x6xf32>
    %c0_50 = arith.constant 0 : index
    %c0_51 = arith.constant 0 : index
    %c0_52 = arith.constant 0 : index
    %99 = vector.load %arg1[%c0_50, %c0_51, %c0_52] : memref<2x5x1xi32, #tpu.memory_space<vmem>>, vector<2x5x1xi32>
    %100 = tpu.iota {dimensions = array<i32: 2>} : vector<2x5x5xi32>
    %101 = vector.broadcast %99 : vector<2x5x1xi32> to vector<2x5x5xi32>
    %102 = arith.cmpi eq, %101, %100 : vector<2x5x5xi32>
    %103 = arith.extui %102 : vector<2x5x5xi1> to vector<2x5x5xi32>
    %104 = arith.sitofp %103 : vector<2x5x5xi32> to vector<2x5x5xf32>
    "tpu.trace_start"() <{level = 10 : i32, message = "blv,bvd->bld"}> : () -> ()
    %cst_53 = arith.constant dense<0.000000e+00> : vector<2x5x6xf32>
    %105 = tpu.matmul %104, %5, %cst_53 {dimension_numbers = #tpu.dot_dimension_numbers<[2], [1], [1], [2], [0, 0, 0, 1, 1, 2], [0], [0]>} : vector<2x5x5xf32>, vector<2x5x6xf32>, vector<2x5x6xf32> -> vector<2x5x6xf32>
    "tpu.trace_stop"() : () -> ()
    "tpu.trace_start"() <{level = 10 : i32, message = "bld,bde->ble"}> : () -> ()
    %cst_54 = arith.constant dense<0.000000e+00> : vector<2x5x6xf32>
    %106 = tpu.matmul %105, %17, %cst_54 {dimension_numbers = #tpu.dot_dimension_numbers<[2], [1], [1], [2], [0, 0, 0, 1, 1, 2], [0], [0]>} : vector<2x5x6xf32>, vector<2x6x6xf32>, vector<2x5x6xf32> -> vector<2x5x6xf32>
    %cst_55 = arith.constant dense<0.000000e+00> : vector<2x5x6xf32>
    %107 = tpu.matmul %105, %20, %cst_55 {dimension_numbers = #tpu.dot_dimension_numbers<[2], [1], [1], [2], [0, 0, 0, 1, 1, 2], [0], [0]>} : vector<2x5x6xf32>, vector<2x6x6xf32>, vector<2x5x6xf32> -> vector<2x5x6xf32>
    %cst_56 = arith.constant dense<0.000000e+00> : vector<2x5x6xf32>
    %108 = tpu.matmul %105, %23, %cst_56 {dimension_numbers = #tpu.dot_dimension_numbers<[2], [1], [1], [2], [0, 0, 0, 1, 1, 2], [0], [0]>} : vector<2x5x6xf32>, vector<2x6x6xf32>, vector<2x5x6xf32> -> vector<2x5x6xf32>
    "tpu.trace_stop"() : () -> ()
    %109 = vector.extract_strided_slice %106 {offsets = [0, 0, 0], sizes = [2, 5, 3], strides = [1, 1, 1]} : vector<2x5x6xf32> to vector<2x5x3xf32>
    %110 = vector.extract_strided_slice %107 {offsets = [0, 0, 0], sizes = [2, 5, 3], strides = [1, 1, 1]} : vector<2x5x6xf32> to vector<2x5x3xf32>
    %111 = vector.extract_strided_slice %108 {offsets = [0, 0, 0], sizes = [2, 5, 3], strides = [1, 1, 1]} : vector<2x5x6xf32> to vector<2x5x3xf32>
    "tpu.trace_start"() <{level = 10 : i32, message = "bqd,bkd->bqk"}> : () -> ()
    %cst_57 = arith.constant dense<0.000000e+00> : vector<2x5x5xf32>
    %112 = tpu.matmul %109, %110, %cst_57 {dimension_numbers = #tpu.dot_dimension_numbers<[2], [2], [1], [1], [0, 0, 0, 1, 1, 1], [0], [0]>} : vector<2x5x3xf32>, vector<2x5x3xf32>, vector<2x5x5xf32> -> vector<2x5x5xf32>
    "tpu.trace_stop"() : () -> ()
    %cst_58 = arith.constant 0.577350259 : f32
    %113 = vector.broadcast %cst_58 : f32 to vector<2x5x5xf32>
    %114 = arith.mulf %112, %113 : vector<2x5x5xf32>
    %cst_59 = arith.constant dense<0xFF800000> : vector<2x5xf32>
    %115 = vector.multi_reduction <maximumf>, %114, %cst_59 [2] : vector<2x5x5xf32> to vector<2x5xf32>
    %116 = vector.shape_cast %115 : vector<2x5xf32> to vector<2x5x1xf32>
    %117 = vector.broadcast %116 : vector<2x5x1xf32> to vector<2x5x5xf32>
    %118 = arith.subf %114, %117 : vector<2x5x5xf32>
    %119 = math.exp %118 : vector<2x5x5xf32>
    %cst_60 = arith.constant dense<0.000000e+00> : vector<2x5xf32>
    %120 = vector.multi_reduction <add>, %119, %cst_60 [2] : vector<2x5x5xf32> to vector<2x5xf32>
    %121 = vector.shape_cast %120 : vector<2x5xf32> to vector<2x5x1xf32>
    %122 = tpu.reciprocal %121 {approx = true} : vector<2x5x1xf32> -> vector<2x5x1xf32>
    %123 = vector.broadcast %122 : vector<2x5x1xf32> to vector<2x5x5xf32>
    %124 = arith.mulf %119, %123 : vector<2x5x5xf32>
    "tpu.trace_start"() <{level = 10 : i32, message = "bqk,bkd->bqd"}> : () -> ()
    %cst_61 = arith.constant dense<0.000000e+00> : vector<2x5x3xf32>
    %125 = tpu.matmul %124, %111, %cst_61 {dimension_numbers = #tpu.dot_dimension_numbers<[2], [1], [1], [2], [0, 0, 0, 1, 1, 2], [0], [0]>} : vector<2x5x5xf32>, vector<2x5x3xf32>, vector<2x5x3xf32> -> vector<2x5x3xf32>
    "tpu.trace_stop"() : () -> ()
    %126 = vector.extract_strided_slice %106 {offsets = [0, 0, 3], sizes = [2, 5, 3], strides = [1, 1, 1]} : vector<2x5x6xf32> to vector<2x5x3xf32>
    %127 = vector.extract_strided_slice %107 {offsets = [0, 0, 3], sizes = [2, 5, 3], strides = [1, 1, 1]} : vector<2x5x6xf32> to vector<2x5x3xf32>
    %128 = vector.extract_strided_slice %108 {offsets = [0, 0, 3], sizes = [2, 5, 3], strides = [1, 1, 1]} : vector<2x5x6xf32> to vector<2x5x3xf32>
    "tpu.trace_start"() <{level = 10 : i32, message = "bqd,bkd->bqk"}> : () -> ()
    %cst_62 = arith.constant dense<0.000000e+00> : vector<2x5x5xf32>
    %129 = tpu.matmul %126, %127, %cst_62 {dimension_numbers = #tpu.dot_dimension_numbers<[2], [2], [1], [1], [0, 0, 0, 1, 1, 1], [0], [0]>} : vector<2x5x3xf32>, vector<2x5x3xf32>, vector<2x5x5xf32> -> vector<2x5x5xf32>
    "tpu.trace_stop"() : () -> ()
    %cst_63 = arith.constant 0.577350259 : f32
    %130 = vector.broadcast %cst_63 : f32 to vector<2x5x5xf32>
    %131 = arith.mulf %129, %130 : vector<2x5x5xf32>
    %cst_64 = arith.constant dense<0xFF800000> : vector<2x5xf32>
    %132 = vector.multi_reduction <maximumf>, %131, %cst_64 [2] : vector<2x5x5xf32> to vector<2x5xf32>
    %133 = vector.shape_cast %132 : vector<2x5xf32> to vector<2x5x1xf32>
    %134 = vector.broadcast %133 : vector<2x5x1xf32> to vector<2x5x5xf32>
    %135 = arith.subf %131, %134 : vector<2x5x5xf32>
    %136 = math.exp %135 : vector<2x5x5xf32>
    %cst_65 = arith.constant dense<0.000000e+00> : vector<2x5xf32>
    %137 = vector.multi_reduction <add>, %136, %cst_65 [2] : vector<2x5x5xf32> to vector<2x5xf32>
    %138 = vector.shape_cast %137 : vector<2x5xf32> to vector<2x5x1xf32>
    %139 = tpu.reciprocal %138 {approx = true} : vector<2x5x1xf32> -> vector<2x5x1xf32>
    %140 = vector.broadcast %139 : vector<2x5x1xf32> to vector<2x5x5xf32>
    %141 = arith.mulf %136, %140 : vector<2x5x5xf32>
    "tpu.trace_start"() <{level = 10 : i32, message = "bqk,bkd->bqd"}> : () -> ()
    %cst_66 = arith.constant dense<0.000000e+00> : vector<2x5x3xf32>
    %142 = tpu.matmul %141, %128, %cst_66 {dimension_numbers = #tpu.dot_dimension_numbers<[2], [1], [1], [2], [0, 0, 0, 1, 1, 2], [0], [0]>} : vector<2x5x5xf32>, vector<2x5x3xf32>, vector<2x5x3xf32> -> vector<2x5x3xf32>
    "tpu.trace_stop"() : () -> ()
    %143 = tpu.concatenate %125, %142 in 2 : vector<2x5x3xf32>, vector<2x5x3xf32> -> vector<2x5x6xf32>
    %144 = arith.addf %105, %143 : vector<2x5x6xf32>
    %cst_67 = arith.constant dense<0.000000e+00> : vector<2x5xf32>
    %145 = vector.multi_reduction <add>, %144, %cst_67 [2] : vector<2x5x6xf32> to vector<2x5xf32>
    %146 = vector.shape_cast %145 : vector<2x5xf32> to vector<2x5x1xf32>
    %cst_68 = arith.constant 6.000000e+00 : f32
    %147 = vector.broadcast %cst_68 : f32 to vector<2x5x1xf32>
    %148 = arith.divf %146, %147 : vector<2x5x1xf32>
    %149 = vector.broadcast %148 : vector<2x5x1xf32> to vector<2x5x6xf32>
    %150 = arith.subf %144, %149 : vector<2x5x6xf32>
    %151 = arith.mulf %150, %150 : vector<2x5x6xf32>
    %cst_69 = arith.constant dense<0.000000e+00> : vector<2x5xf32>
    %152 = vector.multi_reduction <add>, %151, %cst_69 [2] : vector<2x5x6xf32> to vector<2x5xf32>
    %153 = vector.shape_cast %152 : vector<2x5xf32> to vector<2x5x1xf32>
    %cst_70 = arith.constant 6.000000e+00 : f32
    %154 = vector.broadcast %cst_70 : f32 to vector<2x5x1xf32>
    %155 = arith.divf %153, %154 : vector<2x5x1xf32>
    %156 = vector.broadcast %148 : vector<2x5x1xf32> to vector<2x5x6xf32>
    %157 = arith.subf %144, %156 : vector<2x5x6xf32>
    %cst_71 = arith.constant 9.99999974E-6 : f32
    %158 = vector.broadcast %cst_71 : f32 to vector<2x5x1xf32>
    %159 = arith.addf %155, %158 : vector<2x5x1xf32>
    %160 = math.rsqrt %159 : vector<2x5x1xf32>
    %161 = vector.broadcast %160 : vector<2x5x1xf32> to vector<2x5x6xf32>
    %162 = arith.mulf %157, %161 : vector<2x5x6xf32>
    %163 = vector.broadcast %29 : vector<1x1x6xf32> to vector<2x5x6xf32>
    %164 = arith.mulf %162, %163 : vector<2x5x6xf32>
    %165 = vector.broadcast %30 : vector<1x1x6xf32> to vector<2x5x6xf32>
    %166 = arith.addf %164, %165 : vector<2x5x6xf32>
    "tpu.trace_start"() <{level = 10 : i32, message = "bld,bde->ble"}> : () -> ()
    %cst_72 = arith.constant dense<0.000000e+00> : vector<2x5x6xf32>
    %167 = tpu.matmul %166, %17, %cst_72 {dimension_numbers = #tpu.dot_dimension_numbers<[2], [1], [1], [2], [0, 0, 0, 1, 1, 2], [0], [0]>} : vector<2x5x6xf32>, vector<2x6x6xf32>, vector<2x5x6xf32> -> vector<2x5x6xf32>
    %cst_73 = arith.constant dense<0.000000e+00> : vector<2x4x6xf32>
    %168 = tpu.matmul %98, %20, %cst_73 {dimension_numbers = #tpu.dot_dimension_numbers<[2], [1], [1], [2], [0, 0, 0, 1, 1, 2], [0], [0]>} : vector<2x4x6xf32>, vector<2x6x6xf32>, vector<2x4x6xf32> -> vector<2x4x6xf32>
    %cst_74 = arith.constant dense<0.000000e+00> : vector<2x4x6xf32>
    %169 = tpu.matmul %98, %23, %cst_74 {dimension_numbers = #tpu.dot_dimension_numbers<[2], [1], [1], [2], [0, 0, 0, 1, 1, 2], [0], [0]>} : vector<2x4x6xf32>, vector<2x6x6xf32>, vector<2x4x6xf32> -> vector<2x4x6xf32>
    "tpu.trace_stop"() : () -> ()
    %170 = vector.extract_strided_slice %167 {offsets = [0, 0, 0], sizes = [2, 5, 3], strides = [1, 1, 1]} : vector<2x5x6xf32> to vector<2x5x3xf32>
    %171 = vector.extract_strided_slice %168 {offsets = [0, 0, 0], sizes = [2, 4, 3], strides = [1, 1, 1]} : vector<2x4x6xf32> to vector<2x4x3xf32>
    %172 = vector.extract_strided_slice %169 {offsets = [0, 0, 0], sizes = [2, 4, 3], strides = [1, 1, 1]} : vector<2x4x6xf32> to vector<2x4x3xf32>
    "tpu.trace_start"() <{level = 10 : i32, message = "bqd,bkd->bqk"}> : () -> ()
    %cst_75 = arith.constant dense<0.000000e+00> : vector<2x5x4xf32>
    %173 = tpu.matmul %170, %171, %cst_75 {dimension_numbers = #tpu.dot_dimension_numbers<[2], [2], [1], [1], [0, 0, 0, 1, 1, 1], [0], [0]>} : vector<2x5x3xf32>, vector<2x4x3xf32>, vector<2x5x4xf32> -> vector<2x5x4xf32>
    "tpu.trace_stop"() : () -> ()
    %cst_76 = arith.constant 0.577350259 : f32
    %174 = vector.broadcast %cst_76 : f32 to vector<2x5x4xf32>
    %175 = arith.mulf %173, %174 : vector<2x5x4xf32>
    %cst_77 = arith.constant dense<0xFF800000> : vector<2x5xf32>
    %176 = vector.multi_reduction <maximumf>, %175, %cst_77 [2] : vector<2x5x4xf32> to vector<2x5xf32>
    %177 = vector.shape_cast %176 : vector<2x5xf32> to vector<2x5x1xf32>
    %178 = vector.broadcast %177 : vector<2x5x1xf32> to vector<2x5x4xf32>
    %179 = arith.subf %175, %178 : vector<2x5x4xf32>
    %180 = math.exp %179 : vector<2x5x4xf32>
    %cst_78 = arith.constant dense<0.000000e+00> : vector<2x5xf32>
    %181 = vector.multi_reduction <add>, %180, %cst_78 [2] : vector<2x5x4xf32> to vector<2x5xf32>
    %182 = vector.shape_cast %181 : vector<2x5xf32> to vector<2x5x1xf32>
    %183 = tpu.reciprocal %182 {approx = true} : vector<2x5x1xf32> -> vector<2x5x1xf32>
    %184 = vector.broadcast %183 : vector<2x5x1xf32> to vector<2x5x4xf32>
    %185 = arith.mulf %180, %184 : vector<2x5x4xf32>
    "tpu.trace_start"() <{level = 10 : i32, message = "bqk,bkd->bqd"}> : () -> ()
    %cst_79 = arith.constant dense<0.000000e+00> : vector<2x5x3xf32>
    %186 = tpu.matmul %185, %172, %cst_79 {dimension_numbers = #tpu.dot_dimension_numbers<[2], [1], [1], [2], [0, 0, 0, 1, 1, 2], [0], [0]>} : vector<2x5x4xf32>, vector<2x4x3xf32>, vector<2x5x3xf32> -> vector<2x5x3xf32>
    "tpu.trace_stop"() : () -> ()
    %187 = vector.extract_strided_slice %167 {offsets = [0, 0, 3], sizes = [2, 5, 3], strides = [1, 1, 1]} : vector<2x5x6xf32> to vector<2x5x3xf32>
    %188 = vector.extract_strided_slice %168 {offsets = [0, 0, 3], sizes = [2, 4, 3], strides = [1, 1, 1]} : vector<2x4x6xf32> to vector<2x4x3xf32>
    %189 = vector.extract_strided_slice %169 {offsets = [0, 0, 3], sizes = [2, 4, 3], strides = [1, 1, 1]} : vector<2x4x6xf32> to vector<2x4x3xf32>
    "tpu.trace_start"() <{level = 10 : i32, message = "bqd,bkd->bqk"}> : () -> ()
    %cst_80 = arith.constant dense<0.000000e+00> : vector<2x5x4xf32>
    %190 = tpu.matmul %187, %188, %cst_80 {dimension_numbers = #tpu.dot_dimension_numbers<[2], [2], [1], [1], [0, 0, 0, 1, 1, 1], [0], [0]>} : vector<2x5x3xf32>, vector<2x4x3xf32>, vector<2x5x4xf32> -> vector<2x5x4xf32>
    "tpu.trace_stop"() : () -> ()
    %cst_81 = arith.constant 0.577350259 : f32
    %191 = vector.broadcast %cst_81 : f32 to vector<2x5x4xf32>
    %192 = arith.mulf %190, %191 : vector<2x5x4xf32>
    %cst_82 = arith.constant dense<0xFF800000> : vector<2x5xf32>
    %193 = vector.multi_reduction <maximumf>, %192, %cst_82 [2] : vector<2x5x4xf32> to vector<2x5xf32>
    %194 = vector.shape_cast %193 : vector<2x5xf32> to vector<2x5x1xf32>
    %195 = vector.broadcast %194 : vector<2x5x1xf32> to vector<2x5x4xf32>
    %196 = arith.subf %192, %195 : vector<2x5x4xf32>
    %197 = math.exp %196 : vector<2x5x4xf32>
    %cst_83 = arith.constant dense<0.000000e+00> : vector<2x5xf32>
    %198 = vector.multi_reduction <add>, %197, %cst_83 [2] : vector<2x5x4xf32> to vector<2x5xf32>
    %199 = vector.shape_cast %198 : vector<2x5xf32> to vector<2x5x1xf32>
    %200 = tpu.reciprocal %199 {approx = true} : vector<2x5x1xf32> -> vector<2x5x1xf32>
    %201 = vector.broadcast %200 : vector<2x5x1xf32> to vector<2x5x4xf32>
    %202 = arith.mulf %197, %201 : vector<2x5x4xf32>
    "tpu.trace_start"() <{level = 10 : i32, message = "bqk,bkd->bqd"}> : () -> ()
    %cst_84 = arith.constant dense<0.000000e+00> : vector<2x5x3xf32>
    %203 = tpu.matmul %202, %189, %cst_84 {dimension_numbers = #tpu.dot_dimension_numbers<[2], [1], [1], [2], [0, 0, 0, 1, 1, 2], [0], [0]>} : vector<2x5x4xf32>, vector<2x4x3xf32>, vector<2x5x3xf32> -> vector<2x5x3xf32>
    "tpu.trace_stop"() : () -> ()
    %204 = tpu.concatenate %186, %203 in 2 : vector<2x5x3xf32>, vector<2x5x3xf32> -> vector<2x5x6xf32>
    %205 = arith.addf %166, %204 : vector<2x5x6xf32>
    %cst_85 = arith.constant dense<0.000000e+00> : vector<2x5xf32>
    %206 = vector.multi_reduction <add>, %205, %cst_85 [2] : vector<2x5x6xf32> to vector<2x5xf32>
    %207 = vector.shape_cast %206 : vector<2x5xf32> to vector<2x5x1xf32>
    %cst_86 = arith.constant 6.000000e+00 : f32
    %208 = vector.broadcast %cst_86 : f32 to vector<2x5x1xf32>
    %209 = arith.divf %207, %208 : vector<2x5x1xf32>
    %210 = vector.broadcast %209 : vector<2x5x1xf32> to vector<2x5x6xf32>
    %211 = arith.subf %205, %210 : vector<2x5x6xf32>
    %212 = arith.mulf %211, %211 : vector<2x5x6xf32>
    %cst_87 = arith.constant dense<0.000000e+00> : vector<2x5xf32>
    %213 = vector.multi_reduction <add>, %212, %cst_87 [2] : vector<2x5x6xf32> to vector<2x5xf32>
    %214 = vector.shape_cast %213 : vector<2x5xf32> to vector<2x5x1xf32>
    %cst_88 = arith.constant 6.000000e+00 : f32
    %215 = vector.broadcast %cst_88 : f32 to vector<2x5x1xf32>
    %216 = arith.divf %214, %215 : vector<2x5x1xf32>
    %217 = vector.broadcast %209 : vector<2x5x1xf32> to vector<2x5x6xf32>
    %218 = arith.subf %205, %217 : vector<2x5x6xf32>
    %cst_89 = arith.constant 9.99999974E-6 : f32
    %219 = vector.broadcast %cst_89 : f32 to vector<2x5x1xf32>
    %220 = arith.addf %216, %219 : vector<2x5x1xf32>
    %221 = math.rsqrt %220 : vector<2x5x1xf32>
    %222 = vector.broadcast %221 : vector<2x5x1xf32> to vector<2x5x6xf32>
    %223 = arith.mulf %218, %222 : vector<2x5x6xf32>
    %224 = vector.broadcast %29 : vector<1x1x6xf32> to vector<2x5x6xf32>
    %225 = arith.mulf %223, %224 : vector<2x5x6xf32>
    %226 = vector.broadcast %30 : vector<1x1x6xf32> to vector<2x5x6xf32>
    %227 = arith.addf %225, %226 : vector<2x5x6xf32>
    "tpu.trace_start"() <{level = 10 : i32, message = "btd,bdv->btv"}> : () -> ()
    %cst_90 = arith.constant dense<0.000000e+00> : vector<2x5x5xf32>
    %228 = tpu.matmul %227, %26, %cst_90 {dimension_numbers = #tpu.dot_dimension_numbers<[2], [1], [1], [2], [0, 0, 0, 1, 1, 2], [0], [0]>} : vector<2x5x6xf32>, vector<2x6x5xf32>, vector<2x5x5xf32> -> vector<2x5x5xf32>
    "tpu.trace_stop"() : () -> ()
    %c0_91 = arith.constant 0 : index
    %c0_92 = arith.constant 0 : index
    %c0_93 = arith.constant 0 : index
    %229 = vector.load %arg15[%c0_91, %c0_92, %c0_93] : memref<2x5x5xf32, #tpu.memory_space<vmem>>, vector<2x5x5xf32>
    tpu.vector_store %arg15[%c0_91, %c0_92, %c0_93], %228 {strides = array<i32>} : memref<2x5x5xf32, #tpu.memory_space<vmem>>, vector<2x5x5xf32>,
    return
  }
}

</mosaic_0001>

<llo_original>
// kernel: transformer_forward_pallas.1
$region0: #{transformer_forward_pallas.1}
  #allocation0 [shape = 'u32[]', space=smem, size = 0x4, offset = 0x4, fixed_abs, tag = 'smem constant byte address 0x4 - core index']
  #allocation1 [shape = 'u32[144,128]{1,0:T(1,128)}', space=vmem, size = 0x12000, scoped, tag = 'internal scratch']
  %s0 = inlined_call_operand.vmem [shape: s32[2,4,1], index: 0, kind: input, shape index: {}]
  %s1 = inlined_call_operand.vmem [shape: s32[2,5,1], index: 1, kind: input, shape index: {}]
  %s2 = inlined_call_operand.vmem [shape: f32[4,6], index: 2, kind: input, shape index: {}]
  %s3 = inlined_call_operand.vmem [shape: f32[5,6], index: 3, kind: input, shape index: {}]
  %s4 = inlined_call_operand.vmem [shape: f32[6,6], index: 4, kind: input, shape index: {}]
  %s5 = inlined_call_operand.vmem [shape: f32[6,6], index: 5, kind: input, shape index: {}]
  %s6 = inlined_call_operand.vmem [shape: f32[6,6], index: 6, kind: input, shape index: {}]
  %s7 = inlined_call_operand.vmem [shape: f32[1,1,6], index: 7, kind: input, shape index: {}]
  %s8 = inlined_call_operand.hbm [shape: f32[1,1,6], index: 8, kind: input, shape index: {}]
  %s9 = inlined_call_operand.vmem [shape: f32[6,6], index: 9, kind: input, shape index: {}]
  %s10 = inlined_call_operand.hbm [shape: f32[6,6], index: 10, kind: input, shape index: {}]
  %s11 = inlined_call_operand.hbm [shape: f32[6,6], index: 11, kind: input, shape index: {}]
  %s12 = inlined_call_operand.hbm [shape: f32[1,1,6], index: 12, kind: input, shape index: {}]
  %s13 = inlined_call_operand.hbm [shape: f32[1,1,6], index: 13, kind: input, shape index: {}]
  %s14 = inlined_call_operand.vmem [shape: f32[6,5], index: 14, kind: input, shape index: {}]
  %s15 = inlined_call_operand.vmem [shape: f32[2,5,5], index: 15, kind: output, shape index: {}]
  %s16 = sld [smem:[#allocation0]]
  $region90: #{transformer_forward_pallas.1} parent=0
    _
  %s18 = ssub.s32 1, %s16
  %s19 = scalar_select 0, %s18, %s16
  $region1: #{transformer_forward_pallas.1} parent=0
    #allocation2 [shape = 'u8[512]{0}', space=vmem, size = 0x400, scoped, tag = 'input window, operand 8, single buffered']
    #allocation3 [shape = 's32[1]{0}', space=sflag, size = 0x4, scoped, tag = 'scoped memory for transformer_forward_pallas.1']
    #allocation4 [shape = 'u8[4096]{0}', space=vmem, size = 0x1000, scoped, tag = 'input window, operand 10, single buffered']
    #allocation5 [shape = 's32[1]{0}', space=sflag, size = 0x4, scoped, tag = 'scoped memory for transformer_forward_pallas.1']
    #allocation6 [shape = 'u8[4096]{0}', space=vmem, size = 0x1000, scoped, tag = 'input window, operand 11, single buffered']
    #allocation7 [shape = 'u8[512]{0}', space=vmem, size = 0x400, scoped, tag = 'input window, operand 12, single buffered']
    #allocation8 [shape = 's32[1]{0}', space=sflag, size = 0x4, scoped, tag = 'scoped memory for transformer_forward_pallas.1']
    #allocation9 [shape = 'u8[512]{0}', space=vmem, size = 0x400, scoped, tag = 'input window, operand 13, single buffered']
    %20 = vsyncpa [#allocation3], 0
    %21 = vsyncpa [#allocation5], 0
    %22 = vsyncpa [#allocation8], 0
    // Predicated region
    $region2: #{transformer_forward_pallas.1} parent=1 // pred_check
      _
    $region3: #{transformer_forward_pallas.1} parent=1 // pred_check_branch
      %24 = sbr.rel (0) target = $region5
    $region4: #{transformer_forward_pallas.1} parent=1 // pred_region
      _
    $region5: #{transformer_forward_pallas.1} parent=1 // pred_fallthru
      _
    // Predicated region
    $region6: #{transformer_forward_pallas.1} parent=1 // pred_check
      _
    $region7: #{transformer_forward_pallas.1} parent=1 // pred_check_branch
      %26 = sbr.rel (0) target = $region9
    $region8: #{transformer_forward_pallas.1} parent=1 // pred_region
      _
    $region9: #{transformer_forward_pallas.1} parent=1 // pred_fallthru
      _
    // Predicated region
    $region10: #{transformer_forward_pallas.1} parent=1 // pred_check
      _
    $region11: #{transformer_forward_pallas.1} parent=1 // pred_check_branch
      %28 = sbr.rel (0) target = $region13
    $region12: #{transformer_forward_pallas.1} parent=1 // pred_region
      _
    $region13: #{transformer_forward_pallas.1} parent=1 // pred_fallthru
      _
    // Predicated region
    $region14: #{transformer_forward_pallas.1} parent=1 // pred_check
      _
    $region15: #{transformer_forward_pallas.1} parent=1 // pred_check_branch
      %30 = sbr.rel (0) target = $region17
    $region16: #{transformer_forward_pallas.1} parent=1 // pred_region
      _
    $region17: #{transformer_forward_pallas.1} parent=1 // pred_fallthru
      _
    // Predicated region
    $region18: #{transformer_forward_pallas.1} parent=1 // pred_check
      _
    $region19: #{transformer_forward_pallas.1} parent=1 // pred_check_branch
      %32 = sbr.rel (0) target = $region21
    $region20: #{transformer_forward_pallas.1} parent=1 // pred_region
      _
    $region21: #{transformer_forward_pallas.1} parent=1 // pred_fallthru
      _
    // Predicated region
    $region22: #{transformer_forward_pallas.1} parent=1 // pred_check
      _
    $region23: #{transformer_forward_pallas.1} parent=1 // pred_check_branch
      %34 = sbr.rel (0) target = $region25
    $region24: #{transformer_forward_pallas.1} parent=1 // pred_region
      _
    $region25: #{transformer_forward_pallas.1} parent=1 // pred_fallthru
      _
    // Predicated region
    $region26: #{transformer_forward_pallas.1} parent=1 // pred_check
      _
    $region27: #{transformer_forward_pallas.1} parent=1 // pred_check_branch
      %36 = sbr.rel (0) target = $region29
    $region28: #{transformer_forward_pallas.1} parent=1 // pred_region
      _
    $region29: #{transformer_forward_pallas.1} parent=1 // pred_fallthru
      _
    // Predicated region
    $region30: #{transformer_forward_pallas.1} parent=1 // pred_check
      _
    $region31: #{transformer_forward_pallas.1} parent=1 // pred_check_branch
      %38 = sbr.rel (0) target = $region33
    $region32: #{transformer_forward_pallas.1} parent=1 // pred_region
      _
    $region33: #{transformer_forward_pallas.1} parent=1 // pred_fallthru
      _
    // Predicated region
    $region34: #{transformer_forward_pallas.1} parent=1 // pred_check
      _
    $region35: #{transformer_forward_pallas.1} parent=1 // pred_check_branch
      %40 = sbr.rel (0) target = $region37
    $region36: #{transformer_forward_pallas.1} parent=1 // pred_region
      %s42 = ssub.s32 16, 16
      %43 = vsyncadd [#allocation3], %s42
      %s45 = sshll.u32 [#allocation2], 4
      %s46 = int_to_ptr.vmem [resolvable:$true] %s45
      %48 = dma.hbm_to_vmem [thread:$0]  %s8, 16, %s46, [#allocation3]
    $region37: #{transformer_forward_pallas.1} parent=1 // pred_fallthru
      _
    // Predicated region
    $region38: #{transformer_forward_pallas.1} parent=1 // pred_check
      _
    $region39: #{transformer_forward_pallas.1} parent=1 // pred_check_branch
      %50 = sbr.rel (0) target = $region41
    $region40: #{transformer_forward_pallas.1} parent=1 // pred_region
      _
    $region41: #{transformer_forward_pallas.1} parent=1 // pred_fallthru
      _
    // Predicated region
    $region42: #{transformer_forward_pallas.1} parent=1 // pred_check
      _
    $region43: #{transformer_forward_pallas.1} parent=1 // pred_check_branch
      %52 = sbr.rel (0) target = $region45
    $region44: #{transformer_forward_pallas.1} parent=1 // pred_region
      %s54 = ssub.s32 128, 128
      %55 = vsyncadd [#allocation5], %s54
      %s57 = sshll.u32 [#allocation4], 4
      %s58 = int_to_ptr.vmem [resolvable:$true] %s57
      %60 = dma.hbm_to_vmem [thread:$0]  %s10, 128, %s58, [#allocation5]
    $region45: #{transformer_forward_pallas.1} parent=1 // pred_fallthru
      _
    // Predicated region
    $region46: #{transformer_forward_pallas.1} parent=1 // pred_check
      _
    $region47: #{transformer_forward_pallas.1} parent=1 // pred_check_branch
      %62 = sbr.rel (0) target = $region49
    $region48: #{transformer_forward_pallas.1} parent=1 // pred_region
      %s64 = ssub.s32 128, 128
      %65 = vsyncadd [#allocation5], %s64
      %s67 = sshll.u32 [#allocation6], 4
      %s68 = int_to_ptr.vmem [resolvable:$true] %s67
      %70 = dma.hbm_to_vmem [thread:$0]  %s11, 128, %s68, [#allocation5]
    $region49: #{transformer_forward_pallas.1} parent=1 // pred_fallthru
      _
    // Predicated region
    $region50: #{transformer_forward_pallas.1} parent=1 // pred_check
      _
    $region51: #{transformer_forward_pallas.1} parent=1 // pred_check_branch
      %72 = sbr.rel (0) target = $region53
    $region52: #{transformer_forward_pallas.1} parent=1 // pred_region
      %s74 = ssub.s32 16, 16
      %75 = vsyncadd [#allocation8], %s74
      %s77 = sshll.u32 [#allocation7], 4
      %s78 = int_to_ptr.vmem [resolvable:$true] %s77
      %80 = dma.hbm_to_vmem [thread:$0]  %s12, 16, %s78, [#allocation8]
    $region53: #{transformer_forward_pallas.1} parent=1 // pred_fallthru
      _
    // Predicated region
    $region54: #{transformer_forward_pallas.1} parent=1 // pred_check
      _
    $region55: #{transformer_forward_pallas.1} parent=1 // pred_check_branch
      %82 = sbr.rel (0) target = $region57
    $region56: #{transformer_forward_pallas.1} parent=1 // pred_region
      %s84 = ssub.s32 16, 16
      %85 = vsyncadd [#allocation8], %s84
      %s87 = sshll.u32 [#allocation9], 4
      %s88 = int_to_ptr.vmem [resolvable:$true] %s87
      %90 = dma.hbm_to_vmem [thread:$0]  %s13, 16, %s88, [#allocation8]
    $region57: #{transformer_forward_pallas.1} parent=1 // pred_fallthru
      _
    // Predicated region
    $region58: #{transformer_forward_pallas.1} parent=1 // pred_check
      _
    $region59: #{transformer_forward_pallas.1} parent=1 // pred_check_branch
      %92 = sbr.rel (0) target = $region61
    $region60: #{transformer_forward_pallas.1} parent=1 // pred_region
      _
    $region61: #{transformer_forward_pallas.1} parent=1 // pred_fallthru
      _
    // Predicated region
    $region62: #{transformer_forward_pallas.1} parent=1 // pred_check
      _
    $region63: #{transformer_forward_pallas.1} parent=1 // pred_check_branch
      %94 = sbr.rel (0) target = $region65
    $region64: #{transformer_forward_pallas.1} parent=1 // pred_region
      %95 = dma.done [#allocation3], 16
    $region65: #{transformer_forward_pallas.1} parent=1 // pred_fallthru
      _
    // Predicated region
    $region66: #{transformer_forward_pallas.1} parent=1 // pred_check
      _
    $region67: #{transformer_forward_pallas.1} parent=1 // pred_check_branch
      %97 = sbr.rel (0) target = $region69
    $region68: #{transformer_forward_pallas.1} parent=1 // pred_region
      %98 = dma.done [#allocation5], 128
    $region69: #{transformer_forward_pallas.1} parent=1 // pred_fallthru
      _
    // Predicated region
    $region70: #{transformer_forward_pallas.1} parent=1 // pred_check
      _
    $region71: #{transformer_forward_pallas.1} parent=1 // pred_check_branch
      %100 = sbr.rel (0) target = $region73
    $region72: #{transformer_forward_pallas.1} parent=1 // pred_region
      %101 = dma.done [#allocation5], 128
    $region73: #{transformer_forward_pallas.1} parent=1 // pred_fallthru
      _
    // Predicated region
    $region74: #{transformer_forward_pallas.1} parent=1 // pred_check
      _
    $region75: #{transformer_forward_pallas.1} parent=1 // pred_check_branch
      %103 = sbr.rel (0) target = $region77
    $region76: #{transformer_forward_pallas.1} parent=1 // pred_region
      %104 = dma.done [#allocation8], 16
    $region77: #{transformer_forward_pallas.1} parent=1 // pred_fallthru
      _
    // Predicated region
    $region78: #{transformer_forward_pallas.1} parent=1 // pred_check
      _
    $region79: #{transformer_forward_pallas.1} parent=1 // pred_check_branch
      %106 = sbr.rel (0) target = $region81
    $region80: #{transformer_forward_pallas.1} parent=1 // pred_region
      %107 = dma.done [#allocation8], 16
    $region81: #{transformer_forward_pallas.1} parent=1 // pred_fallthru
      _
    %v108 = vld [vmem:[%s2] sm:$0xf]
    %v109 = vld [vmem:[%s3] sm:$0x1f]
    %v110 = vld [vmem:[%s4] sm:$0x3f]
    %v111 = vld [vmem:[%s5] sm:$0x3f]
    %v112 = vld [vmem:[%s6] sm:$0x3f]
    %v113 = vld [vmem:[%s9] sm:$0x3f]
    %v114 = vld [vmem:[#allocation4] sm:$0x3f]
    %v115 = vld [vmem:[#allocation6] sm:$0x3f]
    %v116 = vld [vmem:[%s14] sm:$0x3f]
    %v117 = vld [vmem:[%s7] sm:$0x1]
    %v118 = vld [vmem:[#allocation2] sm:$0x1]
    %v119 = vld [vmem:[#allocation7] sm:$0x1]
    %v120 = vld [vmem:[#allocation9] sm:$0x1]
    %v121 = vld [vmem:[%s0] sm:$0xf]
    %v122 = vld [vmem:[%s0 + $0x4] sm:$0xf]
    %v123 = vlaneseq
    %v124 = vand.u32 %v123, 127
    %125 = vset.pattern.permute.xlu0 0
    %126 = vperm.xlu0 %125, %v121
    %v127 = vpop.permute.xlu0 %126
    %128 = vset.pattern.permute.xlu0 0
    %129 = vperm.xlu0 %128, %v122
    %v130 = vpop.permute.xlu0 %129
    %vm131 = vcmp.eq.s32.totalorder %v127, %v124
    %vm132 = vcmp.eq.s32.totalorder %v130, %v124
    %v133 = vsel %vm131, 1, 0
    %v134 = vsel %vm132, 1, 0
    %v135 = vcvt.s32.f32 %v133
    %v136 = vcvt.s32.f32 %v134
    %vm137 = vcmask 31744
    %v139 = vsel %vm137, %v135, 0
    %vm141 = vcmask 1043456
    %v143 = vsel %vm141, %v108, 0
    %145 = vmatprep.subr.mxu0 0.0
    %146 = vmatpush1.msra.mxu0 0.0
    %147 = vmatprep.subr.mxu0 0.0
    %148 = vmatpush1.msra.mxu0 0.0
    %149 = vmatprep.subr.mxu0 0.0
    %150 = vmatpush1.msra.mxu0 0.0
    %151 = vmatprep.subr.mxu0 0.0
    %152 = vmatpush1.msra.mxu0 0.0
    %153 = vmatprep.subr.mxu0 0.0
    %154 = vmatpush1.msra.mxu0 0.0
    %155 = vmatprep.subr.mxu0 0.0
    %156 = vmatpush1.msra.mxu0 0.0
    %157 = vmatprep.subr.mxu0 0.0
    %158 = vmatpush1.msra.mxu0 0.0
    %159 = vmatprep.subr.mxu0 0.0
    %160 = vmatpush1.msra.mxu0 0.0
    %161 = vmatprep.subr.mxu0 0.0
    %162 = vmatpush1.msra.mxu0 0.0
    %163 = vmatprep.subr.mxu0 0.0
    %164 = vmatpush1.msra.mxu0 0.0
    %165 = vmatprep.subr.mxu0 0.0
    %166 = vmatpush1.msra.mxu0 0.0
    %167 = vmatprep.subr.mxu0 0.0
    %168 = vmatpush1.msra.mxu0 0.0
    %169 = vmatprep.subr.mxu0 0.0
    %170 = vmatpush1.msra.mxu0 0.0
    %171 = vmatprep.subr.mxu0 0.0
    %172 = vmatpush1.msra.mxu0 0.0
    %173 = vmatprep.subr.mxu0 0.0
    %174 = vmatpush1.msra.mxu0 0.0
    %175 = vmatprep.subr.mxu0 0.0
    %176 = vmatpush1.msra.mxu0 %v143
    %177 = vmatprep.subr.mxu0 0.0
    %178 = vmatpush2.msra.mxu0 0.0
    %179 = vmatprep.subr.mxu0 0.0
    %180 = vmatpush2.msra.mxu0 0.0
    %181 = vmatprep.subr.mxu0 0.0
    %182 = vmatpush2.msra.mxu0 0.0
    %183 = vmatprep.subr.mxu0 0.0
    %184 = vmatpush2.msra.mxu0 0.0
    %185 = vmatprep.subr.mxu0 0.0
    %186 = vmatpush2.msra.mxu0 0.0
    %187 = vmatprep.subr.mxu0 0.0
    %188 = vmatpush2.msra.mxu0 0.0
    %189 = vmatprep.subr.mxu0 0.0
    %190 = vmatpush2.msra.mxu0 0.0
    %191 = vmatprep.subr.mxu0 0.0
    %192 = vmatpush2.msra.mxu0 0.0
    %193 = vmatprep.subr.mxu0 0.0
    %194 = vmatpush2.msra.mxu0 0.0
    %195 = vmatprep.subr.mxu0 0.0
    %196 = vmatpush2.msra.mxu0 0.0
    %197 = vmatprep.subr.mxu0 0.0
    %198 = vmatpush2.msra.mxu0 0.0
    %199 = vmatprep.subr.mxu0 0.0
    %200 = vmatpush2.msra.mxu0 0.0
    %201 = vmatprep.subr.mxu0 0.0
    %202 = vmatpush2.msra.mxu0 0.0
    %203 = vmatprep.subr.mxu0 0.0
    %204 = vmatpush2.msra.mxu0 0.0
    %205 = vmatprep.subr.mxu0 0.0
    %206 = vmatpush2.msra.mxu0 0.0
    %207 = vmatprep.subr.mxu0 0.0
    %208 = vmatpush2.msra.mxu0 0.0
    %209 = vmatprep.mubr.f32.mxu0 0.0
    %210 = vmatmul.mubr.f32.gmra.mxu0 %v139
    %v211 = vpop.f32.mrf.mxu0
    %v212 = vadd.f32 0.0, %v211
    %v213 = vpop.f32.mrf.mxu0
    %214 = vdwg.mxu0
    %v216 = vsel %vm137, %v136, 0
    %218 = vmatprep.subr.mxu0 0.0
    %219 = vmatpush1.msra.mxu0 0.0
    %220 = vmatprep.subr.mxu0 0.0
    %221 = vmatpush1.msra.mxu0 0.0
    %222 = vmatprep.subr.mxu0 0.0
    %223 = vmatpush1.msra.mxu0 0.0
    %224 = vmatprep.subr.mxu0 0.0
    %225 = vmatpush1.msra.mxu0 0.0
    %226 = vmatprep.subr.mxu0 0.0
    %227 = vmatpush1.msra.mxu0 0.0
    %228 = vmatprep.subr.mxu0 0.0
    %229 = vmatpush1.msra.mxu0 0.0
    %230 = vmatprep.subr.mxu0 0.0
    %231 = vmatpush1.msra.mxu0 0.0
    %232 = vmatprep.subr.mxu0 0.0
    %233 = vmatpush1.msra.mxu0 0.0
    %234 = vmatprep.subr.mxu0 0.0
    %235 = vmatpush1.msra.mxu0 0.0
    %236 = vmatprep.subr.mxu0 0.0
    %237 = vmatpush1.msra.mxu0 0.0
    %238 = vmatprep.subr.mxu0 0.0
    %239 = vmatpush1.msra.mxu0 0.0
    %240 = vmatprep.subr.mxu0 0.0
    %241 = vmatpush1.msra.mxu0 0.0
    %242 = vmatprep.subr.mxu0 0.0
    %243 = vmatpush1.msra.mxu0 0.0
    %244 = vmatprep.subr.mxu0 0.0
    %245 = vmatpush1.msra.mxu0 0.0
    %246 = vmatprep.subr.mxu0 0.0
    %247 = vmatpush1.msra.mxu0 0.0
    %248 = vmatprep.subr.mxu0 0.0
    %249 = vmatpush1.msra.mxu0 %v143
    %250 = vmatprep.subr.mxu0 0.0
    %251 = vmatpush2.msra.mxu0 0.0
    %252 = vmatprep.subr.mxu0 0.0
    %253 = vmatpush2.msra.mxu0 0.0
    %254 = vmatprep.subr.mxu0 0.0
    %255 = vmatpush2.msra.mxu0 0.0
    %256 = vmatprep.subr.mxu0 0.0
    %257 = vmatpush2.msra.mxu0 0.0
    %258 = vmatprep.subr.mxu0 0.0
    %259 = vmatpush2.msra.mxu0 0.0
    %260 = vmatprep.subr.mxu0 0.0
    %261 = vmatpush2.msra.mxu0 0.0
    %262 = vmatprep.subr.mxu0 0.0
    %263 = vmatpush2.msra.mxu0 0.0
    %264 = vmatprep.subr.mxu0 0.0
    %265 = vmatpush2.msra.mxu0 0.0
    %266 = vmatprep.subr.mxu0 0.0
    %267 = vmatpush2.msra.mxu0 0.0
    %268 = vmatprep.subr.mxu0 0.0
    %269 = vmatpush2.msra.mxu0 0.0
    %270 = vmatprep.subr.mxu0 0.0
    %271 = vmatpush2.msra.mxu0 0.0
    %272 = vmatprep.subr.mxu0 0.0
    %273 = vmatpush2.msra.mxu0 0.0
    %274 = vmatprep.subr.mxu0 0.0
    %275 = vmatpush2.msra.mxu0 0.0
    %276 = vmatprep.subr.mxu0 0.0
    %277 = vmatpush2.msra.mxu0 0.0
    %278 = vmatprep.subr.mxu0 0.0
    %279 = vmatpush2.msra.mxu0 0.0
    %280 = vmatprep.subr.mxu0 0.0
    %281 = vmatpush2.msra.mxu0 0.0
    %282 = vmatprep.mubr.f32.mxu0 0.0
    %283 = vmatmul.mubr.f32.gmra.mxu0 %v216
    %v284 = vpop.f32.mrf.mxu0
    %v285 = vadd.f32 0.0, %v284
    %v286 = vpop.f32.mrf.mxu0
    %287 = vdwg.mxu0
    %vm288 = vcmask 48128
    %v290 = vsel %vm288, %v212, 0
    %vm292 = vcmask 1045504
    %v294 = vsel %vm292, %v110, 0
    %296 = vmatprep.subr.mxu0 0.0
    %297 = vmatpush1.msra.mxu0 0.0
    %298 = vmatprep.subr.mxu0 0.0
    %299 = vmatpush1.msra.mxu0 0.0
    %300 = vmatprep.subr.mxu0 0.0
    %301 = vmatpush1.msra.mxu0 0.0
    %302 = vmatprep.subr.mxu0 0.0
    %303 = vmatpush1.msra.mxu0 0.0
    %304 = vmatprep.subr.mxu0 0.0
    %305 = vmatpush1.msra.mxu0 0.0
    %306 = vmatprep.subr.mxu0 0.0
    %307 = vmatpush1.msra.mxu0 0.0
    %308 = vmatprep.subr.mxu0 0.0
    %309 = vmatpush1.msra.mxu0 0.0
    %310 = vmatprep.subr.mxu0 0.0
    %311 = vmatpush1.msra.mxu0 0.0
    %312 = vmatprep.subr.mxu0 0.0
    %313 = vmatpush1.msra.mxu0 0.0
    %314 = vmatprep.subr.mxu0 0.0
    %315 = vmatpush1.msra.mxu0 0.0
    %316 = vmatprep.subr.mxu0 0.0
    %317 = vmatpush1.msra.mxu0 0.0
    %318 = vmatprep.subr.mxu0 0.0
    %319 = vmatpush1.msra.mxu0 0.0
    %320 = vmatprep.subr.mxu0 0.0
    %321 = vmatpush1.msra.mxu0 0.0
    %322 = vmatprep.subr.mxu0 0.0
    %323 = vmatpush1.msra.mxu0 0.0
    %324 = vmatprep.subr.mxu0 0.0
    %325 = vmatpush1.msra.mxu0 0.0
    %326 = vmatprep.subr.mxu0 0.0
    %327 = vmatpush1.msra.mxu0 %v294
    %328 = vmatprep.subr.mxu0 0.0
    %329 = vmatpush2.msra.mxu0 0.0
    %330 = vmatprep.subr.mxu0 0.0
    %331 = vmatpush2.msra.mxu0 0.0
    %332 = vmatprep.subr.mxu0 0.0
    %333 = vmatpush2.msra.mxu0 0.0
    %334 = vmatprep.subr.mxu0 0.0
    %335 = vmatpush2.msra.mxu0 0.0
    %336 = vmatprep.subr.mxu0 0.0
    %337 = vmatpush2.msra.mxu0 0.0
    %338 = vmatprep.subr.mxu0 0.0
    %339 = vmatpush2.msra.mxu0 0.0
    %340 = vmatprep.subr.mxu0 0.0
    %341 = vmatpush2.msra.mxu0 0.0
    %342 = vmatprep.subr.mxu0 0.0
    %343 = vmatpush2.msra.mxu0 0.0
    %344 = vmatprep.subr.mxu0 0.0
    %345 = vmatpush2.msra.mxu0 0.0
    %346 = vmatprep.subr.mxu0 0.0
    %347 = vmatpush2.msra.mxu0 0.0
    %348 = vmatprep.subr.mxu0 0.0
    %349 = vmatpush2.msra.mxu0 0.0
    %350 = vmatprep.subr.mxu0 0.0
    %351 = vmatpush2.msra.mxu0 0.0
    %352 = vmatprep.subr.mxu0 0.0
    %353 = vmatpush2.msra.mxu0 0.0
    %354 = vmatprep.subr.mxu0 0.0
    %355 = vmatpush2.msra.mxu0 0.0
    %356 = vmatprep.subr.mxu0 0.0
    %357 = vmatpush2.msra.mxu0 0.0
    %358 = vmatprep.subr.mxu0 0.0
    %359 = vmatpush2.msra.mxu0 0.0
    %360 = vmatprep.mubr.f32.mxu0 0.0
    %361 = vmatmul.mubr.f32.gmra.mxu0 %v290
    %v362 = vpop.f32.mrf.mxu0
    %v363 = vadd.f32 0.0, %v362
    %v364 = vpop.f32.mrf.mxu0
    %365 = vdwg.mxu0
    %v367 = vsel %vm288, %v285, 0
    %369 = vmatprep.subr.mxu0 0.0
    %370 = vmatpush1.msra.mxu0 0.0
    %371 = vmatprep.subr.mxu0 0.0
    %372 = vmatpush1.msra.mxu0 0.0
    %373 = vmatprep.subr.mxu0 0.0
    %374 = vmatpush1.msra.mxu0 0.0
    %375 = vmatprep.subr.mxu0 0.0
    %376 = vmatpush1.msra.mxu0 0.0
    %377 = vmatprep.subr.mxu0 0.0
    %378 = vmatpush1.msra.mxu0 0.0
    %379 = vmatprep.subr.mxu0 0.0
    %380 = vmatpush1.msra.mxu0 0.0
    %381 = vmatprep.subr.mxu0 0.0
    %382 = vmatpush1.msra.mxu0 0.0
    %383 = vmatprep.subr.mxu0 0.0
    %384 = vmatpush1.msra.mxu0 0.0
    %385 = vmatprep.subr.mxu0 0.0
    %386 = vmatpush1.msra.mxu0 0.0
    %387 = vmatprep.subr.mxu0 0.0
    %388 = vmatpush1.msra.mxu0 0.0
    %389 = vmatprep.subr.mxu0 0.0
    %390 = vmatpush1.msra.mxu0 0.0
    %391 = vmatprep.subr.mxu0 0.0
    %392 = vmatpush1.msra.mxu0 0.0
    %393 = vmatprep.subr.mxu0 0.0
    %394 = vmatpush1.msra.mxu0 0.0
    %395 = vmatprep.subr.mxu0 0.0
    %396 = vmatpush1.msra.mxu0 0.0
    %397 = vmatprep.subr.mxu0 0.0
    %398 = vmatpush1.msra.mxu0 0.0
    %399 = vmatprep.subr.mxu0 0.0
    %400 = vmatpush1.msra.mxu0 %v294
    %401 = vmatprep.subr.mxu0 0.0
    %402 = vmatpush2.msra.mxu0 0.0
    %403 = vmatprep.subr.mxu0 0.0
    %404 = vmatpush2.msra.mxu0 0.0
    %405 = vmatprep.subr.mxu0 0.0
    %406 = vmatpush2.msra.mxu0 0.0
    %407 = vmatprep.subr.mxu0 0.0
    %408 = vmatpush2.msra.mxu0 0.0
    %409 = vmatprep.subr.mxu0 0.0
    %410 = vmatpush2.msra.mxu0 0.0
    %411 = vmatprep.subr.mxu0 0.0
    %412 = vmatpush2.msra.mxu0 0.0
    %413 = vmatprep.subr.mxu0 0.0
    %414 = vmatpush2.msra.mxu0 0.0
    %415 = vmatprep.subr.mxu0 0.0
    %416 = vmatpush2.msra.mxu0 0.0
    %417 = vmatprep.subr.mxu0 0.0
    %418 = vmatpush2.msra.mxu0 0.0
    %419 = vmatprep.subr.mxu0 0.0
    %420 = vmatpush2.msra.mxu0 0.0
    %421 = vmatprep.subr.mxu0 0.0
    %422 = vmatpush2.msra.mxu0 0.0
    %423 = vmatprep.subr.mxu0 0.0
    %424 = vmatpush2.msra.mxu0 0.0
    %425 = vmatprep.subr.mxu0 0.0
    %426 = vmatpush2.msra.mxu0 0.0
    %427 = vmatprep.subr.mxu0 0.0
    %428 = vmatpush2.msra.mxu0 0.0
    %429 = vmatprep.subr.mxu0 0.0
    %430 = vmatpush2.msra.mxu0 0.0
    %431 = vmatprep.subr.mxu0 0.0
    %432 = vmatpush2.msra.mxu0 0.0
    %433 = vmatprep.mubr.f32.mxu0 0.0
    %434 = vmatmul.mubr.f32.gmra.mxu0 %v367
    %v435 = vpop.f32.mrf.mxu0
    %v436 = vadd.f32 0.0, %v435
    %v437 = vpop.f32.mrf.mxu0
    %438 = vdwg.mxu0
    %v440 = vsel %vm292, %v111, 0
    %442 = vmatprep.subr.mxu0 0.0
    %443 = vmatpush1.msra.mxu0 0.0
    %444 = vmatprep.subr.mxu0 0.0
    %445 = vmatpush1.msra.mxu0 0.0
    %446 = vmatprep.subr.mxu0 0.0
    %447 = vmatpush1.msra.mxu0 0.0
    %448 = vmatprep.subr.mxu0 0.0
    %449 = vmatpush1.msra.mxu0 0.0
    %450 = vmatprep.subr.mxu0 0.0
    %451 = vmatpush1.msra.mxu0 0.0
    %452 = vmatprep.subr.mxu0 0.0
    %453 = vmatpush1.msra.mxu0 0.0
    %454 = vmatprep.subr.mxu0 0.0
    %455 = vmatpush1.msra.mxu0 0.0
    %456 = vmatprep.subr.mxu0 0.0
    %457 = vmatpush1.msra.mxu0 0.0
    %458 = vmatprep.subr.mxu0 0.0
    %459 = vmatpush1.msra.mxu0 0.0
    %460 = vmatprep.subr.mxu0 0.0
    %461 = vmatpush1.msra.mxu0 0.0
    %462 = vmatprep.subr.mxu0 0.0
    %463 = vmatpush1.msra.mxu0 0.0
    %464 = vmatprep.subr.mxu0 0.0
    %465 = vmatpush1.msra.mxu0 0.0
    %466 = vmatprep.subr.mxu0 0.0
    %467 = vmatpush1.msra.mxu0 0.0
    %468 = vmatprep.subr.mxu0 0.0
    %469 = vmatpush1.msra.mxu0 0.0
    %470 = vmatprep.subr.mxu0 0.0
    %471 = vmatpush1.msra.mxu0 0.0
    %472 = vmatprep.subr.mxu0 0.0
    %473 = vmatpush1.msra.mxu0 %v440
    %474 = vmatprep.subr.mxu0 0.0
    %475 = vmatpush2.msra.mxu0 0.0
    %476 = vmatprep.subr.mxu0 0.0
    %477 = vmatpush2.msra.mxu0 0.0
    %478 = vmatprep.subr.mxu0 0.0
    %479 = vmatpush2.msra.mxu0 0.0
    %480 = vmatprep.subr.mxu0 0.0
    %481 = vmatpush2.msra.mxu0 0.0
    %482 = vmatprep.subr.mxu0 0.0
    %483 = vmatpush2.msra.mxu0 0.0
    %484 = vmatprep.subr.mxu0 0.0
    %485 = vmatpush2.msra.mxu0 0.0
    %486 = vmatprep.subr.mxu0 0.0
    %487 = vmatpush2.msra.mxu0 0.0
    %488 = vmatprep.subr.mxu0 0.0
    %489 = vmatpush2.msra.mxu0 0.0
    %490 = vmatprep.subr.mxu0 0.0
    %491 = vmatpush2.msra.mxu0 0.0
    %492 = vmatprep.subr.mxu0 0.0
    %493 = vmatpush2.msra.mxu0 0.0
    %494 = vmatprep.subr.mxu0 0.0
    %495 = vmatpush2.msra.mxu0 0.0
    %496 = vmatprep.subr.mxu0 0.0
    %497 = vmatpush2.msra.mxu0 0.0
    %498 = vmatprep.subr.mxu0 0.0
    %499 = vmatpush2.msra.mxu0 0.0
    %500 = vmatprep.subr.mxu0 0.0
    %501 = vmatpush2.msra.mxu0 0.0
    %502 = vmatprep.subr.mxu0 0.0
    %503 = vmatpush2.msra.mxu0 0.0
    %504 = vmatprep.subr.mxu0 0.0
    %505 = vmatpush2.msra.mxu0 0.0
    %506 = vmatprep.mubr.f32.mxu0 0.0
    %507 = vmatmul.mubr.f32.gmra.mxu0 %v290
    %v508 = vpop.f32.mrf.mxu0
    %v509 = vadd.f32 0.0, %v508
    %v510 = vpop.f32.mrf.mxu0
    %511 = vdwg.mxu0
    %512 = vmatprep.subr.mxu0 0.0
    %513 = vmatpush1.msra.mxu0 0.0
    %514 = vmatprep.subr.mxu0 0.0
    %515 = vmatpush1.msra.mxu0 0.0
    %516 = vmatprep.subr.mxu0 0.0
    %517 = vmatpush1.msra.mxu0 0.0
    %518 = vmatprep.subr.mxu0 0.0
    %519 = vmatpush1.msra.mxu0 0.0
    %520 = vmatprep.subr.mxu0 0.0
    %521 = vmatpush1.msra.mxu0 0.0
    %522 = vmatprep.subr.mxu0 0.0
    %523 = vmatpush1.msra.mxu0 0.0
    %524 = vmatprep.subr.mxu0 0.0
    %525 = vmatpush1.msra.mxu0 0.0
    %526 = vmatprep.subr.mxu0 0.0
    %527 = vmatpush1.msra.mxu0 0.0
    %528 = vmatprep.subr.mxu0 0.0
    %529 = vmatpush1.msra.mxu0 0.0
    %530 = vmatprep.subr.mxu0 0.0
    %531 = vmatpush1.msra.mxu0 0.0
    %532 = vmatprep.subr.mxu0 0.0
    %533 = vmatpush1.msra.mxu0 0.0
    %534 = vmatprep.subr.mxu0 0.0
    %535 = vmatpush1.msra.mxu0 0.0
    %536 = vmatprep.subr.mxu0 0.0
    %537 = vmatpush1.msra.mxu0 0.0
    %538 = vmatprep.subr.mxu0 0.0
    %539 = vmatpush1.msra.mxu0 0.0
    %540 = vmatprep.subr.mxu0 0.0
    %541 = vmatpush1.msra.mxu0 0.0
    %542 = vmatprep.subr.mxu0 0.0
    %543 = vmatpush1.msra.mxu0 %v440
    %544 = vmatprep.subr.mxu0 0.0
    %545 = vmatpush2.msra.mxu0 0.0
    %546 = vmatprep.subr.mxu0 0.0
    %547 = vmatpush2.msra.mxu0 0.0
    %548 = vmatprep.subr.mxu0 0.0
    %549 = vmatpush2.msra.mxu0 0.0
    %550 = vmatprep.subr.mxu0 0.0
    %551 = vmatpush2.msra.mxu0 0.0
    %552 = vmatprep.subr.mxu0 0.0
    %553 = vmatpush2.msra.mxu0 0.0
    %554 = vmatprep.subr.mxu0 0.0
    %555 = vmatpush2.msra.mxu0 0.0
    %556 = vmatprep.subr.mxu0 0.0
    %557 = vmatpush2.msra.mxu0 0.0
    %558 = vmatprep.subr.mxu0 0.0
    %559 = vmatpush2.msra.mxu0 0.0
    %560 = vmatprep.subr.mxu0 0.0
    %561 = vmatpush2.msra.mxu0 0.0
    %562 = vmatprep.subr.mxu0 0.0
    %563 = vmatpush2.msra.mxu0 0.0
    %564 = vmatprep.subr.mxu0 0.0
    %565 = vmatpush2.msra.mxu0 0.0
    %566 = vmatprep.subr.mxu0 0.0
    %567 = vmatpush2.msra.mxu0 0.0
    %568 = vmatprep.subr.mxu0 0.0
    %569 = vmatpush2.msra.mxu0 0.0
    %570 = vmatprep.subr.mxu0 0.0
    %571 = vmatpush2.msra.mxu0 0.0
    %572 = vmatprep.subr.mxu0 0.0
    %573 = vmatpush2.msra.mxu0 0.0
    %574 = vmatprep.subr.mxu0 0.0
    %575 = vmatpush2.msra.mxu0 0.0
    %576 = vmatprep.mubr.f32.mxu0 0.0
    %577 = vmatmul.mubr.f32.gmra.mxu0 %v367
    %v578 = vpop.f32.mrf.mxu0
    %v579 = vadd.f32 0.0, %v578
    %v580 = vpop.f32.mrf.mxu0
    %581 = vdwg.mxu0
    %v583 = vsel %vm292, %v112, 0
    %585 = vmatprep.subr.mxu0 0.0
    %586 = vmatpush1.msra.mxu0 0.0
    %587 = vmatprep.subr.mxu0 0.0
    %588 = vmatpush1.msra.mxu0 0.0
    %589 = vmatprep.subr.mxu0 0.0
    %590 = vmatpush1.msra.mxu0 0.0
    %591 = vmatprep.subr.mxu0 0.0
    %592 = vmatpush1.msra.mxu0 0.0
    %593 = vmatprep.subr.mxu0 0.0
    %594 = vmatpush1.msra.mxu0 0.0
    %595 = vmatprep.subr.mxu0 0.0
    %596 = vmatpush1.msra.mxu0 0.0
    %597 = vmatprep.subr.mxu0 0.0
    %598 = vmatpush1.msra.mxu0 0.0
    %599 = vmatprep.subr.mxu0 0.0
    %600 = vmatpush1.msra.mxu0 0.0
    %601 = vmatprep.subr.mxu0 0.0
    %602 = vmatpush1.msra.mxu0 0.0
    %603 = vmatprep.subr.mxu0 0.0
    %604 = vmatpush1.msra.mxu0 0.0
    %605 = vmatprep.subr.mxu0 0.0
    %606 = vmatpush1.msra.mxu0 0.0
    %607 = vmatprep.subr.mxu0 0.0
    %608 = vmatpush1.msra.mxu0 0.0
    %609 = vmatprep.subr.mxu0 0.0
    %610 = vmatpush1.msra.mxu0 0.0
    %611 = vmatprep.subr.mxu0 0.0
    %612 = vmatpush1.msra.mxu0 0.0
    %613 = vmatprep.subr.mxu0 0.0
    %614 = vmatpush1.msra.mxu0 0.0
    %615 = vmatprep.subr.mxu0 0.0
    %616 = vmatpush1.msra.mxu0 %v583
    %617 = vmatprep.subr.mxu0 0.0
    %618 = vmatpush2.msra.mxu0 0.0
    %619 = vmatprep.subr.mxu0 0.0
    %620 = vmatpush2.msra.mxu0 0.0
    %621 = vmatprep.subr.mxu0 0.0
    %622 = vmatpush2.msra.mxu0 0.0
    %623 = vmatprep.subr.mxu0 0.0
    %624 = vmatpush2.msra.mxu0 0.0
    %625 = vmatprep.subr.mxu0 0.0
    %626 = vmatpush2.msra.mxu0 0.0
    %627 = vmatprep.subr.mxu0 0.0
    %628 = vmatpush2.msra.mxu0 0.0
    %629 = vmatprep.subr.mxu0 0.0
    %630 = vmatpush2.msra.mxu0 0.0
    %631 = vmatprep.subr.mxu0 0.0
    %632 = vmatpush2.msra.mxu0 0.0
    %633 = vmatprep.subr.mxu0 0.0
    %634 = vmatpush2.msra.mxu0 0.0
    %635 = vmatprep.subr.mxu0 0.0
    %636 = vmatpush2.msra.mxu0 0.0
    %637 = vmatprep.subr.mxu0 0.0
    %638 = vmatpush2.msra.mxu0 0.0
    %639 = vmatprep.subr.mxu0 0.0
    %640 = vmatpush2.msra.mxu0 0.0
    %641 = vmatprep.subr.mxu0 0.0
    %642 = vmatpush2.msra.mxu0 0.0
    %643 = vmatprep.subr.mxu0 0.0
    %644 = vmatpush2.msra.mxu0 0.0
    %645 = vmatprep.subr.mxu0 0.0
    %646 = vmatpush2.msra.mxu0 0.0
    %647 = vmatprep.subr.mxu0 0.0
    %648 = vmatpush2.msra.mxu0 0.0
    %649 = vmatprep.mubr.f32.mxu0 0.0
    %650 = vmatmul.mubr.f32.gmra.mxu0 %v290
    %v651 = vpop.f32.mrf.mxu0
    %v652 = vadd.f32 0.0, %v651
    %v653 = vpop.f32.mrf.mxu0
    %654 = vdwg.mxu0
    %655 = vmatprep.subr.mxu0 0.0
    %656 = vmatpush1.msra.mxu0 0.0
    %657 = vmatprep.subr.mxu0 0.0
    %658 = vmatpush1.msra.mxu0 0.0
    %659 = vmatprep.subr.mxu0 0.0
    %660 = vmatpush1.msra.mxu0 0.0
    %661 = vmatprep.subr.mxu0 0.0
    %662 = vmatpush1.msra.mxu0 0.0
    %663 = vmatprep.subr.mxu0 0.0
    %664 = vmatpush1.msra.mxu0 0.0
    %665 = vmatprep.subr.mxu0 0.0
    %666 = vmatpush1.msra.mxu0 0.0
    %667 = vmatprep.subr.mxu0 0.0
    %668 = vmatpush1.msra.mxu0 0.0
    %669 = vmatprep.subr.mxu0 0.0
    %670 = vmatpush1.msra.mxu0 0.0
    %671 = vmatprep.subr.mxu0 0.0
    %672 = vmatpush1.msra.mxu0 0.0
    %673 = vmatprep.subr.mxu0 0.0
    %674 = vmatpush1.msra.mxu0 0.0
    %675 = vmatprep.subr.mxu0 0.0
    %676 = vmatpush1.msra.mxu0 0.0
    %677 = vmatprep.subr.mxu0 0.0
    %678 = vmatpush1.msra.mxu0 0.0
    %679 = vmatprep.subr.mxu0 0.0
    %680 = vmatpush1.msra.mxu0 0.0
    %681 = vmatprep.subr.mxu0 0.0
    %682 = vmatpush1.msra.mxu0 0.0
    %683 = vmatprep.subr.mxu0 0.0
    %684 = vmatpush1.msra.mxu0 0.0
    %685 = vmatprep.subr.mxu0 0.0
    %686 = vmatpush1.msra.mxu0 %v583
    %687 = vmatprep.subr.mxu0 0.0
    %688 = vmatpush2.msra.mxu0 0.0
    %689 = vmatprep.subr.mxu0 0.0
    %690 = vmatpush2.msra.mxu0 0.0
    %691 = vmatprep.subr.mxu0 0.0
    %692 = vmatpush2.msra.mxu0 0.0
    %693 = vmatprep.subr.mxu0 0.0
    %694 = vmatpush2.msra.mxu0 0.0
    %695 = vmatprep.subr.mxu0 0.0
    %696 = vmatpush2.msra.mxu0 0.0
    %697 = vmatprep.subr.mxu0 0.0
    %698 = vmatpush2.msra.mxu0 0.0
    %699 = vmatprep.subr.mxu0 0.0
    %700 = vmatpush2.msra.mxu0 0.0
    %701 = vmatprep.subr.mxu0 0.0
    %702 = vmatpush2.msra.mxu0 0.0
    %703 = vmatprep.subr.mxu0 0.0
    %704 = vmatpush2.msra.mxu0 0.0
    %705 = vmatprep.subr.mxu0 0.0
    %706 = vmatpush2.msra.mxu0 0.0
    %707 = vmatprep.subr.mxu0 0.0
    %708 = vmatpush2.msra.mxu0 0.0
    %709 = vmatprep.subr.mxu0 0.0
    %710 = vmatpush2.msra.mxu0 0.0
    %711 = vmatprep.subr.mxu0 0.0
    %712 = vmatpush2.msra.mxu0 0.0
    %713 = vmatprep.subr.mxu0 0.0
    %714 = vmatpush2.msra.mxu0 0.0
    %715 = vmatprep.subr.mxu0 0.0
    %716 = vmatpush2.msra.mxu0 0.0
    %717 = vmatprep.subr.mxu0 0.0
    %718 = vmatpush2.msra.mxu0 0.0
    %719 = vmatprep.mubr.f32.mxu0 0.0
    %720 = vmatmul.mubr.f32.gmra.mxu0 %v367
    %v721 = vpop.f32.mrf.mxu0
    %v722 = vadd.f32 0.0, %v721
    %v723 = vpop.f32.mrf.mxu0
    %724 = vdwg.mxu0
    %vm725 = vcmask 23552
    %v727 = vsel %vm725, %v363, 0
    %v730 = vsel %vm725, %v509, 0
    %732 = vmatprep.subr.mxu0 0.0
    %733 = vmatpush1.xpose.msra.mxu0 0.0
    %734 = vmatprep.subr.mxu0 0.0
    %735 = vmatpush1.xpose.msra.mxu0 0.0
    %736 = vmatprep.subr.mxu0 0.0
    %737 = vmatpush1.xpose.msra.mxu0 0.0
    %738 = vmatprep.subr.mxu0 0.0
    %739 = vmatpush1.xpose.msra.mxu0 0.0
    %740 = vmatprep.subr.mxu0 0.0
    %741 = vmatpush1.xpose.msra.mxu0 0.0
    %742 = vmatprep.subr.mxu0 0.0
    %743 = vmatpush1.xpose.msra.mxu0 0.0
    %744 = vmatprep.subr.mxu0 0.0
    %745 = vmatpush1.xpose.msra.mxu0 0.0
    %746 = vmatprep.subr.mxu0 0.0
    %747 = vmatpush1.xpose.msra.mxu0 0.0
    %748 = vmatprep.subr.mxu0 0.0
    %749 = vmatpush1.xpose.msra.mxu0 0.0
    %750 = vmatprep.subr.mxu0 0.0
    %751 = vmatpush1.xpose.msra.mxu0 0.0
    %752 = vmatprep.subr.mxu0 0.0
    %753 = vmatpush1.xpose.msra.mxu0 0.0
    %754 = vmatprep.subr.mxu0 0.0
    %755 = vmatpush1.xpose.msra.mxu0 0.0
    %756 = vmatprep.subr.mxu0 0.0
    %757 = vmatpush1.xpose.msra.mxu0 0.0
    %758 = vmatprep.subr.mxu0 0.0
    %759 = vmatpush1.xpose.msra.mxu0 0.0
    %760 = vmatprep.subr.mxu0 0.0
    %761 = vmatpush1.xpose.msra.mxu0 0.0
    %762 = vmatprep.subr.mxu0 0.0
    %763 = vmatpush1.xpose.msra.mxu0 %v730
    %764 = vmatprep.subr.mxu0 0.0
    %765 = vmatpush2.xpose.msra.mxu0 0.0
    %766 = vmatprep.subr.mxu0 0.0
    %767 = vmatpush2.xpose.msra.mxu0 0.0
    %768 = vmatprep.subr.mxu0 0.0
    %769 = vmatpush2.xpose.msra.mxu0 0.0
    %770 = vmatprep.subr.mxu0 0.0
    %771 = vmatpush2.xpose.msra.mxu0 0.0
    %772 = vmatprep.subr.mxu0 0.0
    %773 = vmatpush2.xpose.msra.mxu0 0.0
    %774 = vmatprep.subr.mxu0 0.0
    %775 = vmatpush2.xpose.msra.mxu0 0.0
    %776 = vmatprep.subr.mxu0 0.0
    %777 = vmatpush2.xpose.msra.mxu0 0.0
    %778 = vmatprep.subr.mxu0 0.0
    %779 = vmatpush2.xpose.msra.mxu0 0.0
    %780 = vmatprep.subr.mxu0 0.0
    %781 = vmatpush2.xpose.msra.mxu0 0.0
    %782 = vmatprep.subr.mxu0 0.0
    %783 = vmatpush2.xpose.msra.mxu0 0.0
    %784 = vmatprep.subr.mxu0 0.0
    %785 = vmatpush2.xpose.msra.mxu0 0.0
    %786 = vmatprep.subr.mxu0 0.0
    %787 = vmatpush2.xpose.msra.mxu0 0.0
    %788 = vmatprep.subr.mxu0 0.0
    %789 = vmatpush2.xpose.msra.mxu0 0.0
    %790 = vmatprep.subr.mxu0 0.0
    %791 = vmatpush2.xpose.msra.mxu0 0.0
    %792 = vmatprep.subr.mxu0 0.0
    %793 = vmatpush2.xpose.msra.mxu0 0.0
    %794 = vmatprep.subr.mxu0 0.0
    %795 = vmatpush2.xpose.msra.mxu0 0.0
    %796 = vmatprep.mubr.f32.mxu0 0.0
    %797 = vmatmul.mubr.f32.gmra.mxu0 %v727
    %v798 = vpop.f32.mrf.mxu0
    %v799 = vadd.f32 0.0, %v798
    %v800 = vpop.f32.mrf.mxu0
    %801 = vdwg.mxu0
    %v803 = vsel %vm725, %v436, 0
    %v806 = vsel %vm725, %v579, 0
    %808 = vmatprep.subr.mxu0 0.0
    %809 = vmatpush1.xpose.msra.mxu0 0.0
    %810 = vmatprep.subr.mxu0 0.0
    %811 = vmatpush1.xpose.msra.mxu0 0.0
    %812 = vmatprep.subr.mxu0 0.0
    %813 = vmatpush1.xpose.msra.mxu0 0.0
    %814 = vmatprep.subr.mxu0 0.0
    %815 = vmatpush1.xpose.msra.mxu0 0.0
    %816 = vmatprep.subr.mxu0 0.0
    %817 = vmatpush1.xpose.msra.mxu0 0.0
    %818 = vmatprep.subr.mxu0 0.0
    %819 = vmatpush1.xpose.msra.mxu0 0.0
    %820 = vmatprep.subr.mxu0 0.0
    %821 = vmatpush1.xpose.msra.mxu0 0.0
    %822 = vmatprep.subr.mxu0 0.0
    %823 = vmatpush1.xpose.msra.mxu0 0.0
    %824 = vmatprep.subr.mxu0 0.0
    %825 = vmatpush1.xpose.msra.mxu0 0.0
    %826 = vmatprep.subr.mxu0 0.0
    %827 = vmatpush1.xpose.msra.mxu0 0.0
    %828 = vmatprep.subr.mxu0 0.0
    %829 = vmatpush1.xpose.msra.mxu0 0.0
    %830 = vmatprep.subr.mxu0 0.0
    %831 = vmatpush1.xpose.msra.mxu0 0.0
    %832 = vmatprep.subr.mxu0 0.0
    %833 = vmatpush1.xpose.msra.mxu0 0.0
    %834 = vmatprep.subr.mxu0 0.0
    %835 = vmatpush1.xpose.msra.mxu0 0.0
    %836 = vmatprep.subr.mxu0 0.0
    %837 = vmatpush1.xpose.msra.mxu0 0.0
    %838 = vmatprep.subr.mxu0 0.0
    %839 = vmatpush1.xpose.msra.mxu0 %v806
    %840 = vmatprep.subr.mxu0 0.0
    %841 = vmatpush2.xpose.msra.mxu0 0.0
    %842 = vmatprep.subr.mxu0 0.0
    %843 = vmatpush2.xpose.msra.mxu0 0.0
    %844 = vmatprep.subr.mxu0 0.0
    %845 = vmatpush2.xpose.msra.mxu0 0.0
    %846 = vmatprep.subr.mxu0 0.0
    %847 = vmatpush2.xpose.msra.mxu0 0.0
    %848 = vmatprep.subr.mxu0 0.0
    %849 = vmatpush2.xpose.msra.mxu0 0.0
    %850 = vmatprep.subr.mxu0 0.0
    %851 = vmatpush2.xpose.msra.mxu0 0.0
    %852 = vmatprep.subr.mxu0 0.0
    %853 = vmatpush2.xpose.msra.mxu0 0.0
    %854 = vmatprep.subr.mxu0 0.0
    %855 = vmatpush2.xpose.msra.mxu0 0.0
    %856 = vmatprep.subr.mxu0 0.0
    %857 = vmatpush2.xpose.msra.mxu0 0.0
    %858 = vmatprep.subr.mxu0 0.0
    %859 = vmatpush2.xpose.msra.mxu0 0.0
    %860 = vmatprep.subr.mxu0 0.0
    %861 = vmatpush2.xpose.msra.mxu0 0.0
    %862 = vmatprep.subr.mxu0 0.0
    %863 = vmatpush2.xpose.msra.mxu0 0.0
    %864 = vmatprep.subr.mxu0 0.0
    %865 = vmatpush2.xpose.msra.mxu0 0.0
    %866 = vmatprep.subr.mxu0 0.0
    %867 = vmatpush2.xpose.msra.mxu0 0.0
    %868 = vmatprep.subr.mxu0 0.0
    %869 = vmatpush2.xpose.msra.mxu0 0.0
    %870 = vmatprep.subr.mxu0 0.0
    %871 = vmatpush2.xpose.msra.mxu0 0.0
    %872 = vmatprep.mubr.f32.mxu0 0.0
    %873 = vmatmul.mubr.f32.gmra.mxu0 %v803
    %v874 = vpop.f32.mrf.mxu0
    %v875 = vadd.f32 0.0, %v874
    %v876 = vpop.f32.mrf.mxu0
    %877 = vdwg.mxu0
    %v878 = vmul.f32 %v799, 0.57735026
    %v879 = vmul.f32 %v875, 0.57735026
    %vm880 = vcmask 27648
    %v881 = vsel %vm880, %v878, -inf
    %882 = vmax.xlane.f32.xlu0 %v881
    %v883 = vpop.xlane.xlu0 %882
    %v884 = vsel %vm880, %v879, -inf
    %885 = vmax.xlane.f32.xlu0 %v884
    %v886 = vpop.xlane.xlu0 %885
    %v887 = vsub.f32 %v878, %v883
    %v888 = vsub.f32 %v879, %v886
    %v889 = vmul.f32 %v887, 1.442695
    %v890 = vpow.pop %v889
    %v891 = vmul.f32 %v888, 1.442695
    %v892 = vpow.pop %v891
    %v893 = vsel %vm880, %v890, 0.0
    %894 = vadd.xlane.f32.xlu0 %v893
    %v895 = vpop.xlane.xlu0 %894
    %v896 = vsel %vm880, %v892, 0.0
    %897 = vadd.xlane.f32.xlu0 %v896
    %v898 = vpop.xlane.xlu0 %897
    %v899 = vrcp.pop %v895
    %v900 = vrcp.pop %v898
    %v901 = vmul.f32 %v890, %v899
    %v902 = vmul.f32 %v892, %v900
    %v904 = vsel %vm137, %v901, 0
    %v907 = vsel %vm141, %v652, 0
    %909 = vmatprep.subr.mxu0 0.0
    %910 = vmatpush1.msra.mxu0 0.0
    %911 = vmatprep.subr.mxu0 0.0
    %912 = vmatpush1.msra.mxu0 0.0
    %913 = vmatprep.subr.mxu0 0.0
    %914 = vmatpush1.msra.mxu0 0.0
    %915 = vmatprep.subr.mxu0 0.0
    %916 = vmatpush1.msra.mxu0 0.0
    %917 = vmatprep.subr.mxu0 0.0
    %918 = vmatpush1.msra.mxu0 0.0
    %919 = vmatprep.subr.mxu0 0.0
    %920 = vmatpush1.msra.mxu0 0.0
    %921 = vmatprep.subr.mxu0 0.0
    %922 = vmatpush1.msra.mxu0 0.0
    %923 = vmatprep.subr.mxu0 0.0
    %924 = vmatpush1.msra.mxu0 0.0
    %925 = vmatprep.subr.mxu0 0.0
    %926 = vmatpush1.msra.mxu0 0.0
    %927 = vmatprep.subr.mxu0 0.0
    %928 = vmatpush1.msra.mxu0 0.0
    %929 = vmatprep.subr.mxu0 0.0
    %930 = vmatpush1.msra.mxu0 0.0
    %931 = vmatprep.subr.mxu0 0.0
    %932 = vmatpush1.msra.mxu0 0.0
    %933 = vmatprep.subr.mxu0 0.0
    %934 = vmatpush1.msra.mxu0 0.0
    %935 = vmatprep.subr.mxu0 0.0
    %936 = vmatpush1.msra.mxu0 0.0
    %937 = vmatprep.subr.mxu0 0.0
    %938 = vmatpush1.msra.mxu0 0.0
    %939 = vmatprep.subr.mxu0 0.0
    %940 = vmatpush1.msra.mxu0 %v907
    %941 = vmatprep.subr.mxu0 0.0
    %942 = vmatpush2.msra.mxu0 0.0
    %943 = vmatprep.subr.mxu0 0.0
    %944 = vmatpush2.msra.mxu0 0.0
    %945 = vmatprep.subr.mxu0 0.0
    %946 = vmatpush2.msra.mxu0 0.0
    %947 = vmatprep.subr.mxu0 0.0
    %948 = vmatpush2.msra.mxu0 0.0
    %949 = vmatprep.subr.mxu0 0.0
    %950 = vmatpush2.msra.mxu0 0.0
    %951 = vmatprep.subr.mxu0 0.0
    %952 = vmatpush2.msra.mxu0 0.0
    %953 = vmatprep.subr.mxu0 0.0
    %954 = vmatpush2.msra.mxu0 0.0
    %955 = vmatprep.subr.mxu0 0.0
    %956 = vmatpush2.msra.mxu0 0.0
    %957 = vmatprep.subr.mxu0 0.0
    %958 = vmatpush2.msra.mxu0 0.0
    %959 = vmatprep.subr.mxu0 0.0
    %960 = vmatpush2.msra.mxu0 0.0
    %961 = vmatprep.subr.mxu0 0.0
    %962 = vmatpush2.msra.mxu0 0.0
    %963 = vmatprep.subr.mxu0 0.0
    %964 = vmatpush2.msra.mxu0 0.0
    %965 = vmatprep.subr.mxu0 0.0
    %966 = vmatpush2.msra.mxu0 0.0
    %967 = vmatprep.subr.mxu0 0.0
    %968 = vmatpush2.msra.mxu0 0.0
    %969 = vmatprep.subr.mxu0 0.0
    %970 = vmatpush2.msra.mxu0 0.0
    %971 = vmatprep.subr.mxu0 0.0
    %972 = vmatpush2.msra.mxu0 0.0
    %973 = vmatprep.mubr.f32.mxu0 0.0
    %974 = vmatmul.mubr.f32.gmra.mxu0 %v904
    %v975 = vpop.f32.mrf.mxu0
    %v976 = vadd.f32 0.0, %v975
    %v977 = vpop.f32.mrf.mxu0
    %978 = vdwg.mxu0
    %v980 = vsel %vm137, %v902, 0
    %v983 = vsel %vm141, %v722, 0
    %985 = vmatprep.subr.mxu0 0.0
    %986 = vmatpush1.msra.mxu0 0.0
    %987 = vmatprep.subr.mxu0 0.0
    %988 = vmatpush1.msra.mxu0 0.0
    %989 = vmatprep.subr.mxu0 0.0
    %990 = vmatpush1.msra.mxu0 0.0
    %991 = vmatprep.subr.mxu0 0.0
    %992 = vmatpush1.msra.mxu0 0.0
    %993 = vmatprep.subr.mxu0 0.0
    %994 = vmatpush1.msra.mxu0 0.0
    %995 = vmatprep.subr.mxu0 0.0
    %996 = vmatpush1.msra.mxu0 0.0
    %997 = vmatprep.subr.mxu0 0.0
    %998 = vmatpush1.msra.mxu0 0.0
    %999 = vmatprep.subr.mxu0 0.0
    %1000 = vmatpush1.msra.mxu0 0.0
    %1001 = vmatprep.subr.mxu0 0.0
    %1002 = vmatpush1.msra.mxu0 0.0
    %1003 = vmatprep.subr.mxu0 0.0
    %1004 = vmatpush1.msra.mxu0 0.0
    %1005 = vmatprep.subr.mxu0 0.0
    %1006 = vmatpush1.msra.mxu0 0.0
    %1007 = vmatprep.subr.mxu0 0.0
    %1008 = vmatpush1.msra.mxu0 0.0
    %1009 = vmatprep.subr.mxu0 0.0
    %1010 = vmatpush1.msra.mxu0 0.0
    %1011 = vmatprep.subr.mxu0 0.0
    %1012 = vmatpush1.msra.mxu0 0.0
    %1013 = vmatprep.subr.mxu0 0.0
    %1014 = vmatpush1.msra.mxu0 0.0
    %1015 = vmatprep.subr.mxu0 0.0
    %1016 = vmatpush1.msra.mxu0 %v983
    %1017 = vmatprep.subr.mxu0 0.0
    %1018 = vmatpush2.msra.mxu0 0.0
    %1019 = vmatprep.subr.mxu0 0.0
    %1020 = vmatpush2.msra.mxu0 0.0
    %1021 = vmatprep.subr.mxu0 0.0
    %1022 = vmatpush2.msra.mxu0 0.0
    %1023 = vmatprep.subr.mxu0 0.0
    %1024 = vmatpush2.msra.mxu0 0.0
    %1025 = vmatprep.subr.mxu0 0.0
    %1026 = vmatpush2.msra.mxu0 0.0
    %1027 = vmatprep.subr.mxu0 0.0
    %1028 = vmatpush2.msra.mxu0 0.0
    %1029 = vmatprep.subr.mxu0 0.0
    %1030 = vmatpush2.msra.mxu0 0.0
    %1031 = vmatprep.subr.mxu0 0.0
    %1032 = vmatpush2.msra.mxu0 0.0
    %1033 = vmatprep.subr.mxu0 0.0
    %1034 = vmatpush2.msra.mxu0 0.0
    %1035 = vmatprep.subr.mxu0 0.0
    %1036 = vmatpush2.msra.mxu0 0.0
    %1037 = vmatprep.subr.mxu0 0.0
    %1038 = vmatpush2.msra.mxu0 0.0
    %1039 = vmatprep.subr.mxu0 0.0
    %1040 = vmatpush2.msra.mxu0 0.0
    %1041 = vmatprep.subr.mxu0 0.0
    %1042 = vmatpush2.msra.mxu0 0.0
    %1043 = vmatprep.subr.mxu0 0.0
    %1044 = vmatpush2.msra.mxu0 0.0
    %1045 = vmatprep.subr.mxu0 0.0
    %1046 = vmatpush2.msra.mxu0 0.0
    %1047 = vmatprep.subr.mxu0 0.0
    %1048 = vmatpush2.msra.mxu0 0.0
    %1049 = vmatprep.mubr.f32.mxu0 0.0
    %1050 = vmatmul.mubr.f32.gmra.mxu0 %v980
    %v1051 = vpop.f32.mrf.mxu0
    %v1052 = vadd.f32 0.0, %v1051
    %v1053 = vpop.f32.mrf.mxu0
    %1054 = vdwg.mxu0
    %1055 = vrot.lane.b32.xlu0 %v363, 125
    %v1056 = vpop.permute.xlu0 %1055
    %1057 = vrot.lane.b32.xlu0 %v509, 125
    %v1058 = vpop.permute.xlu0 %1057
    %v1059 = vsel %vm725, %v1056, 0
    %v1061 = vsel %vm725, %v1058, 0
    %1063 = vmatprep.subr.mxu0 0.0
    %1064 = vmatpush1.xpose.msra.mxu0 0.0
    %1065 = vmatprep.subr.mxu0 0.0
    %1066 = vmatpush1.xpose.msra.mxu0 0.0
    %1067 = vmatprep.subr.mxu0 0.0
    %1068 = vmatpush1.xpose.msra.mxu0 0.0
    %1069 = vmatprep.subr.mxu0 0.0
    %1070 = vmatpush1.xpose.msra.mxu0 0.0
    %1071 = vmatprep.subr.mxu0 0.0
    %1072 = vmatpush1.xpose.msra.mxu0 0.0
    %1073 = vmatprep.subr.mxu0 0.0
    %1074 = vmatpush1.xpose.msra.mxu0 0.0
    %1075 = vmatprep.subr.mxu0 0.0
    %1076 = vmatpush1.xpose.msra.mxu0 0.0
    %1077 = vmatprep.subr.mxu0 0.0
    %1078 = vmatpush1.xpose.msra.mxu0 0.0
    %1079 = vmatprep.subr.mxu0 0.0
    %1080 = vmatpush1.xpose.msra.mxu0 0.0
    %1081 = vmatprep.subr.mxu0 0.0
    %1082 = vmatpush1.xpose.msra.mxu0 0.0
    %1083 = vmatprep.subr.mxu0 0.0
    %1084 = vmatpush1.xpose.msra.mxu0 0.0
    %1085 = vmatprep.subr.mxu0 0.0
    %1086 = vmatpush1.xpose.msra.mxu0 0.0
    %1087 = vmatprep.subr.mxu0 0.0
    %1088 = vmatpush1.xpose.msra.mxu0 0.0
    %1089 = vmatprep.subr.mxu0 0.0
    %1090 = vmatpush1.xpose.msra.mxu0 0.0
    %1091 = vmatprep.subr.mxu0 0.0
    %1092 = vmatpush1.xpose.msra.mxu0 0.0
    %1093 = vmatprep.subr.mxu0 0.0
    %1094 = vmatpush1.xpose.msra.mxu0 %v1061
    %1095 = vmatprep.subr.mxu0 0.0
    %1096 = vmatpush2.xpose.msra.mxu0 0.0
    %1097 = vmatprep.subr.mxu0 0.0
    %1098 = vmatpush2.xpose.msra.mxu0 0.0
    %1099 = vmatprep.subr.mxu0 0.0
    %1100 = vmatpush2.xpose.msra.mxu0 0.0
    %1101 = vmatprep.subr.mxu0 0.0
    %1102 = vmatpush2.xpose.msra.mxu0 0.0
    %1103 = vmatprep.subr.mxu0 0.0
    %1104 = vmatpush2.xpose.msra.mxu0 0.0
    %1105 = vmatprep.subr.mxu0 0.0
    %1106 = vmatpush2.xpose.msra.mxu0 0.0
    %1107 = vmatprep.subr.mxu0 0.0
    %1108 = vmatpush2.xpose.msra.mxu0 0.0
    %1109 = vmatprep.subr.mxu0 0.0
    %1110 = vmatpush2.xpose.msra.mxu0 0.0
    %1111 = vmatprep.subr.mxu0 0.0
    %1112 = vmatpush2.xpose.msra.mxu0 0.0
    %1113 = vmatprep.subr.mxu0 0.0
    %1114 = vmatpush2.xpose.msra.mxu0 0.0
    %1115 = vmatprep.subr.mxu0 0.0
    %1116 = vmatpush2.xpose.msra.mxu0 0.0
    %1117 = vmatprep.subr.mxu0 0.0
    %1118 = vmatpush2.xpose.msra.mxu0 0.0
    %1119 = vmatprep.subr.mxu0 0.0
    %1120 = vmatpush2.xpose.msra.mxu0 0.0
    %1121 = vmatprep.subr.mxu0 0.0
    %1122 = vmatpush2.xpose.msra.mxu0 0.0
    %1123 = vmatprep.subr.mxu0 0.0
    %1124 = vmatpush2.xpose.msra.mxu0 0.0
    %1125 = vmatprep.subr.mxu0 0.0
    %1126 = vmatpush2.xpose.msra.mxu0 0.0
    %1127 = vmatprep.mubr.f32.mxu0 0.0
    %1128 = vmatmul.mubr.f32.gmra.mxu0 %v1059
    %v1129 = vpop.f32.mrf.mxu0
    %v1130 = vadd.f32 0.0, %v1129
    %v1131 = vpop.f32.mrf.mxu0
    %1132 = vdwg.mxu0
    %1133 = vrot.lane.b32.xlu0 %v436, 125
    %v1134 = vpop.permute.xlu0 %1133
    %1135 = vrot.lane.b32.xlu0 %v579, 125
    %v1136 = vpop.permute.xlu0 %1135
    %v1137 = vsel %vm725, %v1134, 0
    %v1139 = vsel %vm725, %v1136, 0
    %1141 = vmatprep.subr.mxu0 0.0
    %1142 = vmatpush1.xpose.msra.mxu0 0.0
    %1143 = vmatprep.subr.mxu0 0.0
    %1144 = vmatpush1.xpose.msra.mxu0 0.0
    %1145 = vmatprep.subr.mxu0 0.0
    %1146 = vmatpush1.xpose.msra.mxu0 0.0
    %1147 = vmatprep.subr.mxu0 0.0
    %1148 = vmatpush1.xpose.msra.mxu0 0.0
    %1149 = vmatprep.subr.mxu0 0.0
    %1150 = vmatpush1.xpose.msra.mxu0 0.0
    %1151 = vmatprep.subr.mxu0 0.0
    %1152 = vmatpush1.xpose.msra.mxu0 0.0
    %1153 = vmatprep.subr.mxu0 0.0
    %1154 = vmatpush1.xpose.msra.mxu0 0.0
    %1155 = vmatprep.subr.mxu0 0.0
    %1156 = vmatpush1.xpose.msra.mxu0 0.0
    %1157 = vmatprep.subr.mxu0 0.0
    %1158 = vmatpush1.xpose.msra.mxu0 0.0
    %1159 = vmatprep.subr.mxu0 0.0
    %1160 = vmatpush1.xpose.msra.mxu0 0.0
    %1161 = vmatprep.subr.mxu0 0.0
    %1162 = vmatpush1.xpose.msra.mxu0 0.0
    %1163 = vmatprep.subr.mxu0 0.0
    %1164 = vmatpush1.xpose.msra.mxu0 0.0
    %1165 = vmatprep.subr.mxu0 0.0
    %1166 = vmatpush1.xpose.msra.mxu0 0.0
    %1167 = vmatprep.subr.mxu0 0.0
    %1168 = vmatpush1.xpose.msra.mxu0 0.0
    %1169 = vmatprep.subr.mxu0 0.0
    %1170 = vmatpush1.xpose.msra.mxu0 0.0
    %1171 = vmatprep.subr.mxu0 0.0
    %1172 = vmatpush1.xpose.msra.mxu0 %v1139
    %1173 = vmatprep.subr.mxu0 0.0
    %1174 = vmatpush2.xpose.msra.mxu0 0.0
    %1175 = vmatprep.subr.mxu0 0.0
    %1176 = vmatpush2.xpose.msra.mxu0 0.0
    %1177 = vmatprep.subr.mxu0 0.0
    %1178 = vmatpush2.xpose.msra.mxu0 0.0
    %1179 = vmatprep.subr.mxu0 0.0
    %1180 = vmatpush2.xpose.msra.mxu0 0.0
    %1181 = vmatprep.subr.mxu0 0.0
    %1182 = vmatpush2.xpose.msra.mxu0 0.0
    %1183 = vmatprep.subr.mxu0 0.0
    %1184 = vmatpush2.xpose.msra.mxu0 0.0
    %1185 = vmatprep.subr.mxu0 0.0
    %1186 = vmatpush2.xpose.msra.mxu0 0.0
    %1187 = vmatprep.subr.mxu0 0.0
    %1188 = vmatpush2.xpose.msra.mxu0 0.0
    %1189 = vmatprep.subr.mxu0 0.0
    %1190 = vmatpush2.xpose.msra.mxu0 0.0
    %1191 = vmatprep.subr.mxu0 0.0
    %1192 = vmatpush2.xpose.msra.mxu0 0.0
    %1193 = vmatprep.subr.mxu0 0.0
    %1194 = vmatpush2.xpose.msra.mxu0 0.0
    %1195 = vmatprep.subr.mxu0 0.0
    %1196 = vmatpush2.xpose.msra.mxu0 0.0
    %1197 = vmatprep.subr.mxu0 0.0
    %1198 = vmatpush2.xpose.msra.mxu0 0.0
    %1199 = vmatprep.subr.mxu0 0.0
    %1200 = vmatpush2.xpose.msra.mxu0 0.0
    %1201 = vmatprep.subr.mxu0 0.0
    %1202 = vmatpush2.xpose.msra.mxu0 0.0
    %1203 = vmatprep.subr.mxu0 0.0
    %1204 = vmatpush2.xpose.msra.mxu0 0.0
    %1205 = vmatprep.mubr.f32.mxu0 0.0
    %1206 = vmatmul.mubr.f32.gmra.mxu0 %v1137
    %v1207 = vpop.f32.mrf.mxu0
    %v1208 = vadd.f32 0.0, %v1207
    %v1209 = vpop.f32.mrf.mxu0
    %1210 = vdwg.mxu0
    %v1211 = vmul.f32 %v1130, 0.57735026
    %v1212 = vmul.f32 %v1208, 0.57735026
    %v1213 = vsel %vm880, %v1211, -inf
    %1214 = vmax.xlane.f32.xlu0 %v1213
    %v1215 = vpop.xlane.xlu0 %1214
    %v1216 = vsel %vm880, %v1212, -inf
    %1217 = vmax.xlane.f32.xlu0 %v1216
    %v1218 = vpop.xlane.xlu0 %1217
    %v1219 = vsub.f32 %v1211, %v1215
    %v1220 = vsub.f32 %v1212, %v1218
    %v1221 = vmul.f32 %v1219, 1.442695
    %v1222 = vpow.pop %v1221
    %v1223 = vmul.f32 %v1220, 1.442695
    %v1224 = vpow.pop %v1223
    %v1225 = vsel %vm880, %v1222, 0.0
    %1226 = vadd.xlane.f32.xlu0 %v1225
    %v1227 = vpop.xlane.xlu0 %1226
    %v1228 = vsel %vm880, %v1224, 0.0
    %1229 = vadd.xlane.f32.xlu0 %v1228
    %v1230 = vpop.xlane.xlu0 %1229
    %v1231 = vrcp.pop %v1227
    %v1232 = vrcp.pop %v1230
    %v1233 = vmul.f32 %v1222, %v1231
    %v1234 = vmul.f32 %v1224, %v1232
    %1235 = vrot.lane.b32.xlu0 %v652, 125
    %v1236 = vpop.permute.xlu0 %1235
    %v1238 = vsel %vm137, %v1233, 0
    %v1240 = vsel %vm141, %v1236, 0
    %1242 = vmatprep.subr.mxu0 0.0
    %1243 = vmatpush1.msra.mxu0 0.0
    %1244 = vmatprep.subr.mxu0 0.0
    %1245 = vmatpush1.msra.mxu0 0.0
    %1246 = vmatprep.subr.mxu0 0.0
    %1247 = vmatpush1.msra.mxu0 0.0
    %1248 = vmatprep.subr.mxu0 0.0
    %1249 = vmatpush1.msra.mxu0 0.0
    %1250 = vmatprep.subr.mxu0 0.0
    %1251 = vmatpush1.msra.mxu0 0.0
    %1252 = vmatprep.subr.mxu0 0.0
    %1253 = vmatpush1.msra.mxu0 0.0
    %1254 = vmatprep.subr.mxu0 0.0
    %1255 = vmatpush1.msra.mxu0 0.0
    %1256 = vmatprep.subr.mxu0 0.0
    %1257 = vmatpush1.msra.mxu0 0.0
    %1258 = vmatprep.subr.mxu0 0.0
    %1259 = vmatpush1.msra.mxu0 0.0
    %1260 = vmatprep.subr.mxu0 0.0
    %1261 = vmatpush1.msra.mxu0 0.0
    %1262 = vmatprep.subr.mxu0 0.0
    %1263 = vmatpush1.msra.mxu0 0.0
    %1264 = vmatprep.subr.mxu0 0.0
    %1265 = vmatpush1.msra.mxu0 0.0
    %1266 = vmatprep.subr.mxu0 0.0
    %1267 = vmatpush1.msra.mxu0 0.0
    %1268 = vmatprep.subr.mxu0 0.0
    %1269 = vmatpush1.msra.mxu0 0.0
    %1270 = vmatprep.subr.mxu0 0.0
    %1271 = vmatpush1.msra.mxu0 0.0
    %1272 = vmatprep.subr.mxu0 0.0
    %1273 = vmatpush1.msra.mxu0 %v1240
    %1274 = vmatprep.subr.mxu0 0.0
    %1275 = vmatpush2.msra.mxu0 0.0
    %1276 = vmatprep.subr.mxu0 0.0
    %1277 = vmatpush2.msra.mxu0 0.0
    %1278 = vmatprep.subr.mxu0 0.0
    %1279 = vmatpush2.msra.mxu0 0.0
    %1280 = vmatprep.subr.mxu0 0.0
    %1281 = vmatpush2.msra.mxu0 0.0
    %1282 = vmatprep.subr.mxu0 0.0
    %1283 = vmatpush2.msra.mxu0 0.0
    %1284 = vmatprep.subr.mxu0 0.0
    %1285 = vmatpush2.msra.mxu0 0.0
    %1286 = vmatprep.subr.mxu0 0.0
    %1287 = vmatpush2.msra.mxu0 0.0
    %1288 = vmatprep.subr.mxu0 0.0
    %1289 = vmatpush2.msra.mxu0 0.0
    %1290 = vmatprep.subr.mxu0 0.0
    %1291 = vmatpush2.msra.mxu0 0.0
    %1292 = vmatprep.subr.mxu0 0.0
    %1293 = vmatpush2.msra.mxu0 0.0
    %1294 = vmatprep.subr.mxu0 0.0
    %1295 = vmatpush2.msra.mxu0 0.0
    %1296 = vmatprep.subr.mxu0 0.0
    %1297 = vmatpush2.msra.mxu0 0.0
    %1298 = vmatprep.subr.mxu0 0.0
    %1299 = vmatpush2.msra.mxu0 0.0
    %1300 = vmatprep.subr.mxu0 0.0
    %1301 = vmatpush2.msra.mxu0 0.0
    %1302 = vmatprep.subr.mxu0 0.0
    %1303 = vmatpush2.msra.mxu0 0.0
    %1304 = vmatprep.subr.mxu0 0.0
    %1305 = vmatpush2.msra.mxu0 0.0
    %1306 = vmatprep.mubr.f32.mxu0 0.0
    %1307 = vmatmul.mubr.f32.gmra.mxu0 %v1238
    %v1308 = vpop.f32.mrf.mxu0
    %v1309 = vadd.f32 0.0, %v1308
    %v1310 = vpop.f32.mrf.mxu0
    %1311 = vdwg.mxu0
    %1312 = vrot.lane.b32.xlu0 %v722, 125
    %v1313 = vpop.permute.xlu0 %1312
    %v1315 = vsel %vm137, %v1234, 0
    %v1317 = vsel %vm141, %v1313, 0
    %1319 = vmatprep.subr.mxu0 0.0
    %1320 = vmatpush1.msra.mxu0 0.0
    %1321 = vmatprep.subr.mxu0 0.0
    %1322 = vmatpush1.msra.mxu0 0.0
    %1323 = vmatprep.subr.mxu0 0.0
    %1324 = vmatpush1.msra.mxu0 0.0
    %1325 = vmatprep.subr.mxu0 0.0
    %1326 = vmatpush1.msra.mxu0 0.0
    %1327 = vmatprep.subr.mxu0 0.0
    %1328 = vmatpush1.msra.mxu0 0.0
    %1329 = vmatprep.subr.mxu0 0.0
    %1330 = vmatpush1.msra.mxu0 0.0
    %1331 = vmatprep.subr.mxu0 0.0
    %1332 = vmatpush1.msra.mxu0 0.0
    %1333 = vmatprep.subr.mxu0 0.0
    %1334 = vmatpush1.msra.mxu0 0.0
    %1335 = vmatprep.subr.mxu0 0.0
    %1336 = vmatpush1.msra.mxu0 0.0
    %1337 = vmatprep.subr.mxu0 0.0
    %1338 = vmatpush1.msra.mxu0 0.0
    %1339 = vmatprep.subr.mxu0 0.0
    %1340 = vmatpush1.msra.mxu0 0.0
    %1341 = vmatprep.subr.mxu0 0.0
    %1342 = vmatpush1.msra.mxu0 0.0
    %1343 = vmatprep.subr.mxu0 0.0
    %1344 = vmatpush1.msra.mxu0 0.0
    %1345 = vmatprep.subr.mxu0 0.0
    %1346 = vmatpush1.msra.mxu0 0.0
    %1347 = vmatprep.subr.mxu0 0.0
    %1348 = vmatpush1.msra.mxu0 0.0
    %1349 = vmatprep.subr.mxu0 0.0
    %1350 = vmatpush1.msra.mxu0 %v1317
    %1351 = vmatprep.subr.mxu0 0.0
    %1352 = vmatpush2.msra.mxu0 0.0
    %1353 = vmatprep.subr.mxu0 0.0
    %1354 = vmatpush2.msra.mxu0 0.0
    %1355 = vmatprep.subr.mxu0 0.0
    %1356 = vmatpush2.msra.mxu0 0.0
    %1357 = vmatprep.subr.mxu0 0.0
    %1358 = vmatpush2.msra.mxu0 0.0
    %1359 = vmatprep.subr.mxu0 0.0
    %1360 = vmatpush2.msra.mxu0 0.0
    %1361 = vmatprep.subr.mxu0 0.0
    %1362 = vmatpush2.msra.mxu0 0.0
    %1363 = vmatprep.subr.mxu0 0.0
    %1364 = vmatpush2.msra.mxu0 0.0
    %1365 = vmatprep.subr.mxu0 0.0
    %1366 = vmatpush2.msra.mxu0 0.0
    %1367 = vmatprep.subr.mxu0 0.0
    %1368 = vmatpush2.msra.mxu0 0.0
    %1369 = vmatprep.subr.mxu0 0.0
    %1370 = vmatpush2.msra.mxu0 0.0
    %1371 = vmatprep.subr.mxu0 0.0
    %1372 = vmatpush2.msra.mxu0 0.0
    %1373 = vmatprep.subr.mxu0 0.0
    %1374 = vmatpush2.msra.mxu0 0.0
    %1375 = vmatprep.subr.mxu0 0.0
    %1376 = vmatpush2.msra.mxu0 0.0
    %1377 = vmatprep.subr.mxu0 0.0
    %1378 = vmatpush2.msra.mxu0 0.0
    %1379 = vmatprep.subr.mxu0 0.0
    %1380 = vmatpush2.msra.mxu0 0.0
    %1381 = vmatprep.subr.mxu0 0.0
    %1382 = vmatpush2.msra.mxu0 0.0
    %1383 = vmatprep.mubr.f32.mxu0 0.0
    %1384 = vmatmul.mubr.f32.gmra.mxu0 %v1315
    %v1385 = vpop.f32.mrf.mxu0
    %v1386 = vadd.f32 0.0, %v1385
    %v1387 = vpop.f32.mrf.mxu0
    %1388 = vdwg.mxu0
    %1391 = vrot.lane.b32.xlu0 %v1309, 3
    %v1392 = vpop.permute.xlu0 %1391
    %1393 = vrot.lane.b32.xlu0 %v1386, 3
    %v1394 = vpop.permute.xlu0 %1393
    %v1397 = vsel %vm725, %v976, %v1392
    %v1398 = vsel %vm725, %v1052, %v1394
    %v1399 = vadd.f32 %v212, %v1397
    %v1400 = vadd.f32 %v285, %v1398
    %vm1401 = vcmask 44032
    %v1402 = vsel %vm1401, %v1399, 0.0
    %1403 = vadd.xlane.f32.xlu0 %v1402
    %v1404 = vpop.xlane.xlu0 %1403
    %v1405 = vsel %vm1401, %v1400, 0.0
    %1406 = vadd.xlane.f32.xlu0 %v1405
    %v1407 = vpop.xlane.xlu0 %1406
    %v1408 = vrcp.pop 6.0
    %v1409 = vmul.f32 %v1404, %v1408
    %v1410 = vmul.f32 %v1407, %v1408
    %v1411 = vsub.f32 %v1399, %v1409
    %v1412 = vsub.f32 %v1400, %v1410
    %v1413 = vmul.f32 %v1411, %v1411
    %v1414 = vmul.f32 %v1412, %v1412
    %v1415 = vsel %vm1401, %v1413, 0.0
    %1416 = vadd.xlane.f32.xlu0 %v1415
    %v1417 = vpop.xlane.xlu0 %1416
    %v1418 = vsel %vm1401, %v1414, 0.0
    %1419 = vadd.xlane.f32.xlu0 %v1418
    %v1420 = vpop.xlane.xlu0 %1419
    %v1421 = vmul.f32 %v1417, %v1408
    %v1422 = vmul.f32 %v1420, %v1408
    %v1423 = vadd.f32 %v1421, 1e-05
    %v1424 = vadd.f32 %v1422, 1e-05
    %v1425 = vrsqrt.pop %v1423
    %v1426 = vrsqrt.pop %v1424
    %v1427 = vmul.f32 %v1411, %v1425
    %v1428 = vmul.f32 %v1412, %v1426
    %v1430 = vlaneseq
    %v1431 = vshrl.u32 %v1430, 7
    %v1432 = vsub.s32 0, %v1431
    %v1433 = vrot.slane %v117, %v1432
    %v1435 = vmul.f32 %v1427, %v1433
    %v1436 = vmul.f32 %v1428, %v1433
    %v1438 = vlaneseq
    %v1439 = vshrl.u32 %v1438, 7
    %v1440 = vsub.s32 0, %v1439
    %v1441 = vrot.slane %v118, %v1440
    %v1443 = vadd.f32 %v1435, %v1441
    %v1444 = vadd.f32 %v1436, %v1441
    %v1445 = vld [vmem:[%s1] sm:$0x1f]
    %v1446 = vld [vmem:[%s1 + $0x8] sm:$0x1f]
    %1447 = vset.pattern.permute.xlu0 0
    %1448 = vperm.xlu0 %1447, %v1445
    %v1449 = vpop.permute.xlu0 %1448
    %1450 = vset.pattern.permute.xlu0 0
    %1451 = vperm.xlu0 %1450, %v1446
    %v1452 = vpop.permute.xlu0 %1451
    %vm1453 = vcmp.eq.s32.totalorder %v1449, %v124
    %vm1454 = vcmp.eq.s32.totalorder %v1452, %v124
    %v1455 = vsel %vm1453, 1, 0
    %v1456 = vsel %vm1454, 1, 0
    %v1457 = vcvt.s32.f32 %v1455
    %v1458 = vcvt.s32.f32 %v1456
    %vm1459 = vcmask 39936
    %v1461 = vsel %vm1459, %v1457, 0
    %vm1463 = vcmask 1044480
    %v1465 = vsel %vm1463, %v109, 0
    %1467 = vmatprep.subr.mxu0 0.0
    %1468 = vmatpush1.msra.mxu0 0.0
    %1469 = vmatprep.subr.mxu0 0.0
    %1470 = vmatpush1.msra.mxu0 0.0
    %1471 = vmatprep.subr.mxu0 0.0
    %1472 = vmatpush1.msra.mxu0 0.0
    %1473 = vmatprep.subr.mxu0 0.0
    %1474 = vmatpush1.msra.mxu0 0.0
    %1475 = vmatprep.subr.mxu0 0.0
    %1476 = vmatpush1.msra.mxu0 0.0
    %1477 = vmatprep.subr.mxu0 0.0
    %1478 = vmatpush1.msra.mxu0 0.0
    %1479 = vmatprep.subr.mxu0 0.0
    %1480 = vmatpush1.msra.mxu0 0.0
    %1481 = vmatprep.subr.mxu0 0.0
    %1482 = vmatpush1.msra.mxu0 0.0
    %1483 = vmatprep.subr.mxu0 0.0
    %1484 = vmatpush1.msra.mxu0 0.0
    %1485 = vmatprep.subr.mxu0 0.0
    %1486 = vmatpush1.msra.mxu0 0.0
    %1487 = vmatprep.subr.mxu0 0.0
    %1488 = vmatpush1.msra.mxu0 0.0
    %1489 = vmatprep.subr.mxu0 0.0
    %1490 = vmatpush1.msra.mxu0 0.0
    %1491 = vmatprep.subr.mxu0 0.0
    %1492 = vmatpush1.msra.mxu0 0.0
    %1493 = vmatprep.subr.mxu0 0.0
    %1494 = vmatpush1.msra.mxu0 0.0
    %1495 = vmatprep.subr.mxu0 0.0
    %1496 = vmatpush1.msra.mxu0 0.0
    %1497 = vmatprep.subr.mxu0 0.0
    %1498 = vmatpush1.msra.mxu0 %v1465
    %1499 = vmatprep.subr.mxu0 0.0
    %1500 = vmatpush2.msra.mxu0 0.0
    %1501 = vmatprep.subr.mxu0 0.0
    %1502 = vmatpush2.msra.mxu0 0.0
    %1503 = vmatprep.subr.mxu0 0.0
    %1504 = vmatpush2.msra.mxu0 0.0
    %1505 = vmatprep.subr.mxu0 0.0
    %1506 = vmatpush2.msra.mxu0 0.0
    %1507 = vmatprep.subr.mxu0 0.0
    %1508 = vmatpush2.msra.mxu0 0.0
    %1509 = vmatprep.subr.mxu0 0.0
    %1510 = vmatpush2.msra.mxu0 0.0
    %1511 = vmatprep.subr.mxu0 0.0
    %1512 = vmatpush2.msra.mxu0 0.0
    %1513 = vmatprep.subr.mxu0 0.0
    %1514 = vmatpush2.msra.mxu0 0.0
    %1515 = vmatprep.subr.mxu0 0.0
    %1516 = vmatpush2.msra.mxu0 0.0
    %1517 = vmatprep.subr.mxu0 0.0
    %1518 = vmatpush2.msra.mxu0 0.0
    %1519 = vmatprep.subr.mxu0 0.0
    %1520 = vmatpush2.msra.mxu0 0.0
    %1521 = vmatprep.subr.mxu0 0.0
    %1522 = vmatpush2.msra.mxu0 0.0
    %1523 = vmatprep.subr.mxu0 0.0
    %1524 = vmatpush2.msra.mxu0 0.0
    %1525 = vmatprep.subr.mxu0 0.0
    %1526 = vmatpush2.msra.mxu0 0.0
    %1527 = vmatprep.subr.mxu0 0.0
    %1528 = vmatpush2.msra.mxu0 0.0
    %1529 = vmatprep.subr.mxu0 0.0
    %1530 = vmatpush2.msra.mxu0 0.0
    %1531 = vmatprep.mubr.f32.mxu0 0.0
    %1532 = vmatmul.mubr.f32.gmra.mxu0 %v1461
    %v1533 = vpop.f32.mrf.mxu0
    %v1534 = vadd.f32 0.0, %v1533
    %v1535 = vpop.f32.mrf.mxu0
    %1536 = vdwg.mxu0
    %v1538 = vsel %vm1459, %v1458, 0
    %1540 = vmatprep.subr.mxu0 0.0
    %1541 = vmatpush1.msra.mxu0 0.0
    %1542 = vmatprep.subr.mxu0 0.0
    %1543 = vmatpush1.msra.mxu0 0.0
    %1544 = vmatprep.subr.mxu0 0.0
    %1545 = vmatpush1.msra.mxu0 0.0
    %1546 = vmatprep.subr.mxu0 0.0
    %1547 = vmatpush1.msra.mxu0 0.0
    %1548 = vmatprep.subr.mxu0 0.0
    %1549 = vmatpush1.msra.mxu0 0.0
    %1550 = vmatprep.subr.mxu0 0.0
    %1551 = vmatpush1.msra.mxu0 0.0
    %1552 = vmatprep.subr.mxu0 0.0
    %1553 = vmatpush1.msra.mxu0 0.0
    %1554 = vmatprep.subr.mxu0 0.0
    %1555 = vmatpush1.msra.mxu0 0.0
    %1556 = vmatprep.subr.mxu0 0.0
    %1557 = vmatpush1.msra.mxu0 0.0
    %1558 = vmatprep.subr.mxu0 0.0
    %1559 = vmatpush1.msra.mxu0 0.0
    %1560 = vmatprep.subr.mxu0 0.0
    %1561 = vmatpush1.msra.mxu0 0.0
    %1562 = vmatprep.subr.mxu0 0.0
    %1563 = vmatpush1.msra.mxu0 0.0
    %1564 = vmatprep.subr.mxu0 0.0
    %1565 = vmatpush1.msra.mxu0 0.0
    %1566 = vmatprep.subr.mxu0 0.0
    %1567 = vmatpush1.msra.mxu0 0.0
    %1568 = vmatprep.subr.mxu0 0.0
    %1569 = vmatpush1.msra.mxu0 0.0
    %1570 = vmatprep.subr.mxu0 0.0
    %1571 = vmatpush1.msra.mxu0 %v1465
    %1572 = vmatprep.subr.mxu0 0.0
    %1573 = vmatpush2.msra.mxu0 0.0
    %1574 = vmatprep.subr.mxu0 0.0
    %1575 = vmatpush2.msra.mxu0 0.0
    %1576 = vmatprep.subr.mxu0 0.0
    %1577 = vmatpush2.msra.mxu0 0.0
    %1578 = vmatprep.subr.mxu0 0.0
    %1579 = vmatpush2.msra.mxu0 0.0
    %1580 = vmatprep.subr.mxu0 0.0
    %1581 = vmatpush2.msra.mxu0 0.0
    %1582 = vmatprep.subr.mxu0 0.0
    %1583 = vmatpush2.msra.mxu0 0.0
    %1584 = vmatprep.subr.mxu0 0.0
    %1585 = vmatpush2.msra.mxu0 0.0
    %1586 = vmatprep.subr.mxu0 0.0
    %1587 = vmatpush2.msra.mxu0 0.0
    %1588 = vmatprep.subr.mxu0 0.0
    %1589 = vmatpush2.msra.mxu0 0.0
    %1590 = vmatprep.subr.mxu0 0.0
    %1591 = vmatpush2.msra.mxu0 0.0
    %1592 = vmatprep.subr.mxu0 0.0
    %1593 = vmatpush2.msra.mxu0 0.0
    %1594 = vmatprep.subr.mxu0 0.0
    %1595 = vmatpush2.msra.mxu0 0.0
    %1596 = vmatprep.subr.mxu0 0.0
    %1597 = vmatpush2.msra.mxu0 0.0
    %1598 = vmatprep.subr.mxu0 0.0
    %1599 = vmatpush2.msra.mxu0 0.0
    %1600 = vmatprep.subr.mxu0 0.0
    %1601 = vmatpush2.msra.mxu0 0.0
    %1602 = vmatprep.subr.mxu0 0.0
    %1603 = vmatpush2.msra.mxu0 0.0
    %1604 = vmatprep.mubr.f32.mxu0 0.0
    %1605 = vmatmul.mubr.f32.gmra.mxu0 %v1538
    %v1606 = vpop.f32.mrf.mxu0
    %v1607 = vadd.f32 0.0, %v1606
    %v1608 = vpop.f32.mrf.mxu0
    %1609 = vdwg.mxu0
    %v1611 = vsel %vm288, %v1534, 0
    %v1614 = vsel %vm292, %v113, 0
    %1616 = vmatprep.subr.mxu0 0.0
    %1617 = vmatpush1.msra.mxu0 0.0
    %1618 = vmatprep.subr.mxu0 0.0
    %1619 = vmatpush1.msra.mxu0 0.0
    %1620 = vmatprep.subr.mxu0 0.0
    %1621 = vmatpush1.msra.mxu0 0.0
    %1622 = vmatprep.subr.mxu0 0.0
    %1623 = vmatpush1.msra.mxu0 0.0
    %1624 = vmatprep.subr.mxu0 0.0
    %1625 = vmatpush1.msra.mxu0 0.0
    %1626 = vmatprep.subr.mxu0 0.0
    %1627 = vmatpush1.msra.mxu0 0.0
    %1628 = vmatprep.subr.mxu0 0.0
    %1629 = vmatpush1.msra.mxu0 0.0
    %1630 = vmatprep.subr.mxu0 0.0
    %1631 = vmatpush1.msra.mxu0 0.0
    %1632 = vmatprep.subr.mxu0 0.0
    %1633 = vmatpush1.msra.mxu0 0.0
    %1634 = vmatprep.subr.mxu0 0.0
    %1635 = vmatpush1.msra.mxu0 0.0
    %1636 = vmatprep.subr.mxu0 0.0
    %1637 = vmatpush1.msra.mxu0 0.0
    %1638 = vmatprep.subr.mxu0 0.0
    %1639 = vmatpush1.msra.mxu0 0.0
    %1640 = vmatprep.subr.mxu0 0.0
    %1641 = vmatpush1.msra.mxu0 0.0
    %1642 = vmatprep.subr.mxu0 0.0
    %1643 = vmatpush1.msra.mxu0 0.0
    %1644 = vmatprep.subr.mxu0 0.0
    %1645 = vmatpush1.msra.mxu0 0.0
    %1646 = vmatprep.subr.mxu0 0.0
    %1647 = vmatpush1.msra.mxu0 %v1614
    %1648 = vmatprep.subr.mxu0 0.0
    %1649 = vmatpush2.msra.mxu0 0.0
    %1650 = vmatprep.subr.mxu0 0.0
    %1651 = vmatpush2.msra.mxu0 0.0
    %1652 = vmatprep.subr.mxu0 0.0
    %1653 = vmatpush2.msra.mxu0 0.0
    %1654 = vmatprep.subr.mxu0 0.0
    %1655 = vmatpush2.msra.mxu0 0.0
    %1656 = vmatprep.subr.mxu0 0.0
    %1657 = vmatpush2.msra.mxu0 0.0
    %1658 = vmatprep.subr.mxu0 0.0
    %1659 = vmatpush2.msra.mxu0 0.0
    %1660 = vmatprep.subr.mxu0 0.0
    %1661 = vmatpush2.msra.mxu0 0.0
    %1662 = vmatprep.subr.mxu0 0.0
    %1663 = vmatpush2.msra.mxu0 0.0
    %1664 = vmatprep.subr.mxu0 0.0
    %1665 = vmatpush2.msra.mxu0 0.0
    %1666 = vmatprep.subr.mxu0 0.0
    %1667 = vmatpush2.msra.mxu0 0.0
    %1668 = vmatprep.subr.mxu0 0.0
    %1669 = vmatpush2.msra.mxu0 0.0
    %1670 = vmatprep.subr.mxu0 0.0
    %1671 = vmatpush2.msra.mxu0 0.0
    %1672 = vmatprep.subr.mxu0 0.0
    %1673 = vmatpush2.msra.mxu0 0.0
    %1674 = vmatprep.subr.mxu0 0.0
    %1675 = vmatpush2.msra.mxu0 0.0
    %1676 = vmatprep.subr.mxu0 0.0
    %1677 = vmatpush2.msra.mxu0 0.0
    %1678 = vmatprep.subr.mxu0 0.0
    %1679 = vmatpush2.msra.mxu0 0.0
    %1680 = vmatprep.mubr.f32.mxu0 0.0
    %1681 = vmatmul.mubr.f32.gmra.mxu0 %v1611
    %v1682 = vpop.f32.mrf.mxu0
    %v1683 = vadd.f32 0.0, %v1682
    %v1684 = vpop.f32.mrf.mxu0
    %1685 = vdwg.mxu0
    %v1687 = vsel %vm288, %v1607, 0
    %1689 = vmatprep.subr.mxu0 0.0
    %1690 = vmatpush1.msra.mxu0 0.0
    %1691 = vmatprep.subr.mxu0 0.0
    %1692 = vmatpush1.msra.mxu0 0.0
    %1693 = vmatprep.subr.mxu0 0.0
    %1694 = vmatpush1.msra.mxu0 0.0
    %1695 = vmatprep.subr.mxu0 0.0
    %1696 = vmatpush1.msra.mxu0 0.0
    %1697 = vmatprep.subr.mxu0 0.0
    %1698 = vmatpush1.msra.mxu0 0.0
    %1699 = vmatprep.subr.mxu0 0.0
    %1700 = vmatpush1.msra.mxu0 0.0
    %1701 = vmatprep.subr.mxu0 0.0
    %1702 = vmatpush1.msra.mxu0 0.0
    %1703 = vmatprep.subr.mxu0 0.0
    %1704 = vmatpush1.msra.mxu0 0.0
    %1705 = vmatprep.subr.mxu0 0.0
    %1706 = vmatpush1.msra.mxu0 0.0
    %1707 = vmatprep.subr.mxu0 0.0
    %1708 = vmatpush1.msra.mxu0 0.0
    %1709 = vmatprep.subr.mxu0 0.0
    %1710 = vmatpush1.msra.mxu0 0.0
    %1711 = vmatprep.subr.mxu0 0.0
    %1712 = vmatpush1.msra.mxu0 0.0
    %1713 = vmatprep.subr.mxu0 0.0
    %1714 = vmatpush1.msra.mxu0 0.0
    %1715 = vmatprep.subr.mxu0 0.0
    %1716 = vmatpush1.msra.mxu0 0.0
    %1717 = vmatprep.subr.mxu0 0.0
    %1718 = vmatpush1.msra.mxu0 0.0
    %1719 = vmatprep.subr.mxu0 0.0
    %1720 = vmatpush1.msra.mxu0 %v1614
    %1721 = vmatprep.subr.mxu0 0.0
    %1722 = vmatpush2.msra.mxu0 0.0
    %1723 = vmatprep.subr.mxu0 0.0
    %1724 = vmatpush2.msra.mxu0 0.0
    %1725 = vmatprep.subr.mxu0 0.0
    %1726 = vmatpush2.msra.mxu0 0.0
    %1727 = vmatprep.subr.mxu0 0.0
    %1728 = vmatpush2.msra.mxu0 0.0
    %1729 = vmatprep.subr.mxu0 0.0
    %1730 = vmatpush2.msra.mxu0 0.0
    %1731 = vmatprep.subr.mxu0 0.0
    %1732 = vmatpush2.msra.mxu0 0.0
    %1733 = vmatprep.subr.mxu0 0.0
    %1734 = vmatpush2.msra.mxu0 0.0
    %1735 = vmatprep.subr.mxu0 0.0
    %1736 = vmatpush2.msra.mxu0 0.0
    %1737 = vmatprep.subr.mxu0 0.0
    %1738 = vmatpush2.msra.mxu0 0.0
    %1739 = vmatprep.subr.mxu0 0.0
    %1740 = vmatpush2.msra.mxu0 0.0
    %1741 = vmatprep.subr.mxu0 0.0
    %1742 = vmatpush2.msra.mxu0 0.0
    %1743 = vmatprep.subr.mxu0 0.0
    %1744 = vmatpush2.msra.mxu0 0.0
    %1745 = vmatprep.subr.mxu0 0.0
    %1746 = vmatpush2.msra.mxu0 0.0
    %1747 = vmatprep.subr.mxu0 0.0
    %1748 = vmatpush2.msra.mxu0 0.0
    %1749 = vmatprep.subr.mxu0 0.0
    %1750 = vmatpush2.msra.mxu0 0.0
    %1751 = vmatprep.subr.mxu0 0.0
    %1752 = vmatpush2.msra.mxu0 0.0
    %1753 = vmatprep.mubr.f32.mxu0 0.0
    %1754 = vmatmul.mubr.f32.gmra.mxu0 %v1687
    %v1755 = vpop.f32.mrf.mxu0
    %v1756 = vadd.f32 0.0, %v1755
    %v1757 = vpop.f32.mrf.mxu0
    %1758 = vdwg.mxu0
    %v1760 = vsel %vm292, %v114, 0
    %1762 = vmatprep.subr.mxu0 0.0
    %1763 = vmatpush1.msra.mxu0 0.0
    %1764 = vmatprep.subr.mxu0 0.0
    %1765 = vmatpush1.msra.mxu0 0.0
    %1766 = vmatprep.subr.mxu0 0.0
    %1767 = vmatpush1.msra.mxu0 0.0
    %1768 = vmatprep.subr.mxu0 0.0
    %1769 = vmatpush1.msra.mxu0 0.0
    %1770 = vmatprep.subr.mxu0 0.0
    %1771 = vmatpush1.msra.mxu0 0.0
    %1772 = vmatprep.subr.mxu0 0.0
    %1773 = vmatpush1.msra.mxu0 0.0
    %1774 = vmatprep.subr.mxu0 0.0
    %1775 = vmatpush1.msra.mxu0 0.0
    %1776 = vmatprep.subr.mxu0 0.0
    %1777 = vmatpush1.msra.mxu0 0.0
    %1778 = vmatprep.subr.mxu0 0.0
    %1779 = vmatpush1.msra.mxu0 0.0
    %1780 = vmatprep.subr.mxu0 0.0
    %1781 = vmatpush1.msra.mxu0 0.0
    %1782 = vmatprep.subr.mxu0 0.0
    %1783 = vmatpush1.msra.mxu0 0.0
    %1784 = vmatprep.subr.mxu0 0.0
    %1785 = vmatpush1.msra.mxu0 0.0
    %1786 = vmatprep.subr.mxu0 0.0
    %1787 = vmatpush1.msra.mxu0 0.0
    %1788 = vmatprep.subr.mxu0 0.0
    %1789 = vmatpush1.msra.mxu0 0.0
    %1790 = vmatprep.subr.mxu0 0.0
    %1791 = vmatpush1.msra.mxu0 0.0
    %1792 = vmatprep.subr.mxu0 0.0
    %1793 = vmatpush1.msra.mxu0 %v1760
    %1794 = vmatprep.subr.mxu0 0.0
    %1795 = vmatpush2.msra.mxu0 0.0
    %1796 = vmatprep.subr.mxu0 0.0
    %1797 = vmatpush2.msra.mxu0 0.0
    %1798 = vmatprep.subr.mxu0 0.0
    %1799 = vmatpush2.msra.mxu0 0.0
    %1800 = vmatprep.subr.mxu0 0.0
    %1801 = vmatpush2.msra.mxu0 0.0
    %1802 = vmatprep.subr.mxu0 0.0
    %1803 = vmatpush2.msra.mxu0 0.0
    %1804 = vmatprep.subr.mxu0 0.0
    %1805 = vmatpush2.msra.mxu0 0.0
    %1806 = vmatprep.subr.mxu0 0.0
    %1807 = vmatpush2.msra.mxu0 0.0
    %1808 = vmatprep.subr.mxu0 0.0
    %1809 = vmatpush2.msra.mxu0 0.0
    %1810 = vmatprep.subr.mxu0 0.0
    %1811 = vmatpush2.msra.mxu0 0.0
    %1812 = vmatprep.subr.mxu0 0.0
    %1813 = vmatpush2.msra.mxu0 0.0
    %1814 = vmatprep.subr.mxu0 0.0
    %1815 = vmatpush2.msra.mxu0 0.0
    %1816 = vmatprep.subr.mxu0 0.0
    %1817 = vmatpush2.msra.mxu0 0.0
    %1818 = vmatprep.subr.mxu0 0.0
    %1819 = vmatpush2.msra.mxu0 0.0
    %1820 = vmatprep.subr.mxu0 0.0
    %1821 = vmatpush2.msra.mxu0 0.0
    %1822 = vmatprep.subr.mxu0 0.0
    %1823 = vmatpush2.msra.mxu0 0.0
    %1824 = vmatprep.subr.mxu0 0.0
    %1825 = vmatpush2.msra.mxu0 0.0
    %1826 = vmatprep.mubr.f32.mxu0 0.0
    %1827 = vmatmul.mubr.f32.gmra.mxu0 %v1611
    %v1828 = vpop.f32.mrf.mxu0
    %v1829 = vadd.f32 0.0, %v1828
    %v1830 = vpop.f32.mrf.mxu0
    %1831 = vdwg.mxu0
    %1832 = vmatprep.subr.mxu0 0.0
    %1833 = vmatpush1.msra.mxu0 0.0
    %1834 = vmatprep.subr.mxu0 0.0
    %1835 = vmatpush1.msra.mxu0 0.0
    %1836 = vmatprep.subr.mxu0 0.0
    %1837 = vmatpush1.msra.mxu0 0.0
    %1838 = vmatprep.subr.mxu0 0.0
    %1839 = vmatpush1.msra.mxu0 0.0
    %1840 = vmatprep.subr.mxu0 0.0
    %1841 = vmatpush1.msra.mxu0 0.0
    %1842 = vmatprep.subr.mxu0 0.0
    %1843 = vmatpush1.msra.mxu0 0.0
    %1844 = vmatprep.subr.mxu0 0.0
    %1845 = vmatpush1.msra.mxu0 0.0
    %1846 = vmatprep.subr.mxu0 0.0
    %1847 = vmatpush1.msra.mxu0 0.0
    %1848 = vmatprep.subr.mxu0 0.0
    %1849 = vmatpush1.msra.mxu0 0.0
    %1850 = vmatprep.subr.mxu0 0.0
    %1851 = vmatpush1.msra.mxu0 0.0
    %1852 = vmatprep.subr.mxu0 0.0
    %1853 = vmatpush1.msra.mxu0 0.0
    %1854 = vmatprep.subr.mxu0 0.0
    %1855 = vmatpush1.msra.mxu0 0.0
    %1856 = vmatprep.subr.mxu0 0.0
    %1857 = vmatpush1.msra.mxu0 0.0
    %1858 = vmatprep.subr.mxu0 0.0
    %1859 = vmatpush1.msra.mxu0 0.0
    %1860 = vmatprep.subr.mxu0 0.0
    %1861 = vmatpush1.msra.mxu0 0.0
    %1862 = vmatprep.subr.mxu0 0.0
    %1863 = vmatpush1.msra.mxu0 %v1760
    %1864 = vmatprep.subr.mxu0 0.0
    %1865 = vmatpush2.msra.mxu0 0.0
    %1866 = vmatprep.subr.mxu0 0.0
    %1867 = vmatpush2.msra.mxu0 0.0
    %1868 = vmatprep.subr.mxu0 0.0
    %1869 = vmatpush2.msra.mxu0 0.0
    %1870 = vmatprep.subr.mxu0 0.0
    %1871 = vmatpush2.msra.mxu0 0.0
    %1872 = vmatprep.subr.mxu0 0.0
    %1873 = vmatpush2.msra.mxu0 0.0
    %1874 = vmatprep.subr.mxu0 0.0
    %1875 = vmatpush2.msra.mxu0 0.0
    %1876 = vmatprep.subr.mxu0 0.0
    %1877 = vmatpush2.msra.mxu0 0.0
    %1878 = vmatprep.subr.mxu0 0.0
    %1879 = vmatpush2.msra.mxu0 0.0
    %1880 = vmatprep.subr.mxu0 0.0
    %1881 = vmatpush2.msra.mxu0 0.0
    %1882 = vmatprep.subr.mxu0 0.0
    %1883 = vmatpush2.msra.mxu0 0.0
    %1884 = vmatprep.subr.mxu0 0.0
    %1885 = vmatpush2.msra.mxu0 0.0
    %1886 = vmatprep.subr.mxu0 0.0
    %1887 = vmatpush2.msra.mxu0 0.0
    %1888 = vmatprep.subr.mxu0 0.0
    %1889 = vmatpush2.msra.mxu0 0.0
    %1890 = vmatprep.subr.mxu0 0.0
    %1891 = vmatpush2.msra.mxu0 0.0
    %1892 = vmatprep.subr.mxu0 0.0
    %1893 = vmatpush2.msra.mxu0 0.0
    %1894 = vmatprep.subr.mxu0 0.0
    %1895 = vmatpush2.msra.mxu0 0.0
    %1896 = vmatprep.mubr.f32.mxu0 0.0
    %1897 = vmatmul.mubr.f32.gmra.mxu0 %v1687
    %v1898 = vpop.f32.mrf.mxu0
    %v1899 = vadd.f32 0.0, %v1898
    %v1900 = vpop.f32.mrf.mxu0
    %1901 = vdwg.mxu0
    %v1903 = vsel %vm292, %v115, 0
    %1905 = vmatprep.subr.mxu0 0.0
    %1906 = vmatpush1.msra.mxu0 0.0
    %1907 = vmatprep.subr.mxu0 0.0
    %1908 = vmatpush1.msra.mxu0 0.0
    %1909 = vmatprep.subr.mxu0 0.0
    %1910 = vmatpush1.msra.mxu0 0.0
    %1911 = vmatprep.subr.mxu0 0.0
    %1912 = vmatpush1.msra.mxu0 0.0
    %1913 = vmatprep.subr.mxu0 0.0
    %1914 = vmatpush1.msra.mxu0 0.0
    %1915 = vmatprep.subr.mxu0 0.0
    %1916 = vmatpush1.msra.mxu0 0.0
    %1917 = vmatprep.subr.mxu0 0.0
    %1918 = vmatpush1.msra.mxu0 0.0
    %1919 = vmatprep.subr.mxu0 0.0
    %1920 = vmatpush1.msra.mxu0 0.0
    %1921 = vmatprep.subr.mxu0 0.0
    %1922 = vmatpush1.msra.mxu0 0.0
    %1923 = vmatprep.subr.mxu0 0.0
    %1924 = vmatpush1.msra.mxu0 0.0
    %1925 = vmatprep.subr.mxu0 0.0
    %1926 = vmatpush1.msra.mxu0 0.0
    %1927 = vmatprep.subr.mxu0 0.0
    %1928 = vmatpush1.msra.mxu0 0.0
    %1929 = vmatprep.subr.mxu0 0.0
    %1930 = vmatpush1.msra.mxu0 0.0
    %1931 = vmatprep.subr.mxu0 0.0
    %1932 = vmatpush1.msra.mxu0 0.0
    %1933 = vmatprep.subr.mxu0 0.0
    %1934 = vmatpush1.msra.mxu0 0.0
    %1935 = vmatprep.subr.mxu0 0.0
    %1936 = vmatpush1.msra.mxu0 %v1903
    %1937 = vmatprep.subr.mxu0 0.0
    %1938 = vmatpush2.msra.mxu0 0.0
    %1939 = vmatprep.subr.mxu0 0.0
    %1940 = vmatpush2.msra.mxu0 0.0
    %1941 = vmatprep.subr.mxu0 0.0
    %1942 = vmatpush2.msra.mxu0 0.0
    %1943 = vmatprep.subr.mxu0 0.0
    %1944 = vmatpush2.msra.mxu0 0.0
    %1945 = vmatprep.subr.mxu0 0.0
    %1946 = vmatpush2.msra.mxu0 0.0
    %1947 = vmatprep.subr.mxu0 0.0
    %1948 = vmatpush2.msra.mxu0 0.0
    %1949 = vmatprep.subr.mxu0 0.0
    %1950 = vmatpush2.msra.mxu0 0.0
    %1951 = vmatprep.subr.mxu0 0.0
    %1952 = vmatpush2.msra.mxu0 0.0
    %1953 = vmatprep.subr.mxu0 0.0
    %1954 = vmatpush2.msra.mxu0 0.0
    %1955 = vmatprep.subr.mxu0 0.0
    %1956 = vmatpush2.msra.mxu0 0.0
    %1957 = vmatprep.subr.mxu0 0.0
    %1958 = vmatpush2.msra.mxu0 0.0
    %1959 = vmatprep.subr.mxu0 0.0
    %1960 = vmatpush2.msra.mxu0 0.0
    %1961 = vmatprep.subr.mxu0 0.0
    %1962 = vmatpush2.msra.mxu0 0.0
    %1963 = vmatprep.subr.mxu0 0.0
    %1964 = vmatpush2.msra.mxu0 0.0
    %1965 = vmatprep.subr.mxu0 0.0
    %1966 = vmatpush2.msra.mxu0 0.0
    %1967 = vmatprep.subr.mxu0 0.0
    %1968 = vmatpush2.msra.mxu0 0.0
    %1969 = vmatprep.mubr.f32.mxu0 0.0
    %1970 = vmatmul.mubr.f32.gmra.mxu0 %v1611
    %v1971 = vpop.f32.mrf.mxu0
    %v1972 = vadd.f32 0.0, %v1971
    %v1973 = vpop.f32.mrf.mxu0
    %1974 = vdwg.mxu0
    %1975 = vmatprep.subr.mxu0 0.0
    %1976 = vmatpush1.msra.mxu0 0.0
    %1977 = vmatprep.subr.mxu0 0.0
    %1978 = vmatpush1.msra.mxu0 0.0
    %1979 = vmatprep.subr.mxu0 0.0
    %1980 = vmatpush1.msra.mxu0 0.0
    %1981 = vmatprep.subr.mxu0 0.0
    %1982 = vmatpush1.msra.mxu0 0.0
    %1983 = vmatprep.subr.mxu0 0.0
    %1984 = vmatpush1.msra.mxu0 0.0
    %1985 = vmatprep.subr.mxu0 0.0
    %1986 = vmatpush1.msra.mxu0 0.0
    %1987 = vmatprep.subr.mxu0 0.0
    %1988 = vmatpush1.msra.mxu0 0.0
    %1989 = vmatprep.subr.mxu0 0.0
    %1990 = vmatpush1.msra.mxu0 0.0
    %1991 = vmatprep.subr.mxu0 0.0
    %1992 = vmatpush1.msra.mxu0 0.0
    %1993 = vmatprep.subr.mxu0 0.0
    %1994 = vmatpush1.msra.mxu0 0.0
    %1995 = vmatprep.subr.mxu0 0.0
    %1996 = vmatpush1.msra.mxu0 0.0
    %1997 = vmatprep.subr.mxu0 0.0
    %1998 = vmatpush1.msra.mxu0 0.0
    %1999 = vmatprep.subr.mxu0 0.0
    %2000 = vmatpush1.msra.mxu0 0.0
    %2001 = vmatprep.subr.mxu0 0.0
    %2002 = vmatpush1.msra.mxu0 0.0
    %2003 = vmatprep.subr.mxu0 0.0
    %2004 = vmatpush1.msra.mxu0 0.0
    %2005 = vmatprep.subr.mxu0 0.0
    %2006 = vmatpush1.msra.mxu0 %v1903
    %2007 = vmatprep.subr.mxu0 0.0
    %2008 = vmatpush2.msra.mxu0 0.0
    %2009 = vmatprep.subr.mxu0 0.0
    %2010 = vmatpush2.msra.mxu0 0.0
    %2011 = vmatprep.subr.mxu0 0.0
    %2012 = vmatpush2.msra.mxu0 0.0
    %2013 = vmatprep.subr.mxu0 0.0
    %2014 = vmatpush2.msra.mxu0 0.0
    %2015 = vmatprep.subr.mxu0 0.0
    %2016 = vmatpush2.msra.mxu0 0.0
    %2017 = vmatprep.subr.mxu0 0.0
    %2018 = vmatpush2.msra.mxu0 0.0
    %2019 = vmatprep.subr.mxu0 0.0
    %2020 = vmatpush2.msra.mxu0 0.0
    %2021 = vmatprep.subr.mxu0 0.0
    %2022 = vmatpush2.msra.mxu0 0.0
    %2023 = vmatprep.subr.mxu0 0.0
    %2024 = vmatpush2.msra.mxu0 0.0
    %2025 = vmatprep.subr.mxu0 0.0
    %2026 = vmatpush2.msra.mxu0 0.0
    %2027 = vmatprep.subr.mxu0 0.0
    %2028 = vmatpush2.msra.mxu0 0.0
    %2029 = vmatprep.subr.mxu0 0.0
    %2030 = vmatpush2.msra.mxu0 0.0
    %2031 = vmatprep.subr.mxu0 0.0
    %2032 = vmatpush2.msra.mxu0 0.0
    %2033 = vmatprep.subr.mxu0 0.0
    %2034 = vmatpush2.msra.mxu0 0.0
    %2035 = vmatprep.subr.mxu0 0.0
    %2036 = vmatpush2.msra.mxu0 0.0
    %2037 = vmatprep.subr.mxu0 0.0
    %2038 = vmatpush2.msra.mxu0 0.0
    %2039 = vmatprep.mubr.f32.mxu0 0.0
    %2040 = vmatmul.mubr.f32.gmra.mxu0 %v1687
    %v2041 = vpop.f32.mrf.mxu0
    %v2042 = vadd.f32 0.0, %v2041
    %v2043 = vpop.f32.mrf.mxu0
    %2044 = vdwg.mxu0
    %v2046 = vsel %vm725, %v1683, 0
    %v2049 = vsel %vm725, %v1829, 0
    %2051 = vmatprep.subr.mxu0 0.0
    %2052 = vmatpush1.xpose.msra.mxu0 0.0
    %2053 = vmatprep.subr.mxu0 0.0
    %2054 = vmatpush1.xpose.msra.mxu0 0.0
    %2055 = vmatprep.subr.mxu0 0.0
    %2056 = vmatpush1.xpose.msra.mxu0 0.0
    %2057 = vmatprep.subr.mxu0 0.0
    %2058 = vmatpush1.xpose.msra.mxu0 0.0
    %2059 = vmatprep.subr.mxu0 0.0
    %2060 = vmatpush1.xpose.msra.mxu0 0.0
    %2061 = vmatprep.subr.mxu0 0.0
    %2062 = vmatpush1.xpose.msra.mxu0 0.0
    %2063 = vmatprep.subr.mxu0 0.0
    %2064 = vmatpush1.xpose.msra.mxu0 0.0
    %2065 = vmatprep.subr.mxu0 0.0
    %2066 = vmatpush1.xpose.msra.mxu0 0.0
    %2067 = vmatprep.subr.mxu0 0.0
    %2068 = vmatpush1.xpose.msra.mxu0 0.0
    %2069 = vmatprep.subr.mxu0 0.0
    %2070 = vmatpush1.xpose.msra.mxu0 0.0
    %2071 = vmatprep.subr.mxu0 0.0
    %2072 = vmatpush1.xpose.msra.mxu0 0.0
    %2073 = vmatprep.subr.mxu0 0.0
    %2074 = vmatpush1.xpose.msra.mxu0 0.0
    %2075 = vmatprep.subr.mxu0 0.0
    %2076 = vmatpush1.xpose.msra.mxu0 0.0
    %2077 = vmatprep.subr.mxu0 0.0
    %2078 = vmatpush1.xpose.msra.mxu0 0.0
    %2079 = vmatprep.subr.mxu0 0.0
    %2080 = vmatpush1.xpose.msra.mxu0 0.0
    %2081 = vmatprep.subr.mxu0 0.0
    %2082 = vmatpush1.xpose.msra.mxu0 %v2049
    %2083 = vmatprep.subr.mxu0 0.0
    %2084 = vmatpush2.xpose.msra.mxu0 0.0
    %2085 = vmatprep.subr.mxu0 0.0
    %2086 = vmatpush2.xpose.msra.mxu0 0.0
    %2087 = vmatprep.subr.mxu0 0.0
    %2088 = vmatpush2.xpose.msra.mxu0 0.0
    %2089 = vmatprep.subr.mxu0 0.0
    %2090 = vmatpush2.xpose.msra.mxu0 0.0
    %2091 = vmatprep.subr.mxu0 0.0
    %2092 = vmatpush2.xpose.msra.mxu0 0.0
    %2093 = vmatprep.subr.mxu0 0.0
    %2094 = vmatpush2.xpose.msra.mxu0 0.0
    %2095 = vmatprep.subr.mxu0 0.0
    %2096 = vmatpush2.xpose.msra.mxu0 0.0
    %2097 = vmatprep.subr.mxu0 0.0
    %2098 = vmatpush2.xpose.msra.mxu0 0.0
    %2099 = vmatprep.subr.mxu0 0.0
    %2100 = vmatpush2.xpose.msra.mxu0 0.0
    %2101 = vmatprep.subr.mxu0 0.0
    %2102 = vmatpush2.xpose.msra.mxu0 0.0
    %2103 = vmatprep.subr.mxu0 0.0
    %2104 = vmatpush2.xpose.msra.mxu0 0.0
    %2105 = vmatprep.subr.mxu0 0.0
    %2106 = vmatpush2.xpose.msra.mxu0 0.0
    %2107 = vmatprep.subr.mxu0 0.0
    %2108 = vmatpush2.xpose.msra.mxu0 0.0
    %2109 = vmatprep.subr.mxu0 0.0
    %2110 = vmatpush2.xpose.msra.mxu0 0.0
    %2111 = vmatprep.subr.mxu0 0.0
    %2112 = vmatpush2.xpose.msra.mxu0 0.0
    %2113 = vmatprep.subr.mxu0 0.0
    %2114 = vmatpush2.xpose.msra.mxu0 0.0
    %2115 = vmatprep.mubr.f32.mxu0 0.0
    %2116 = vmatmul.mubr.f32.gmra.mxu0 %v2046
    %v2117 = vpop.f32.mrf.mxu0
    %v2118 = vadd.f32 0.0, %v2117
    %v2119 = vpop.f32.mrf.mxu0
    %2120 = vdwg.mxu0
    %v2122 = vsel %vm725, %v1756, 0
    %v2125 = vsel %vm725, %v1899, 0
    %2127 = vmatprep.subr.mxu0 0.0
    %2128 = vmatpush1.xpose.msra.mxu0 0.0
    %2129 = vmatprep.subr.mxu0 0.0
    %2130 = vmatpush1.xpose.msra.mxu0 0.0
    %2131 = vmatprep.subr.mxu0 0.0
    %2132 = vmatpush1.xpose.msra.mxu0 0.0
    %2133 = vmatprep.subr.mxu0 0.0
    %2134 = vmatpush1.xpose.msra.mxu0 0.0
    %2135 = vmatprep.subr.mxu0 0.0
    %2136 = vmatpush1.xpose.msra.mxu0 0.0
    %2137 = vmatprep.subr.mxu0 0.0
    %2138 = vmatpush1.xpose.msra.mxu0 0.0
    %2139 = vmatprep.subr.mxu0 0.0
    %2140 = vmatpush1.xpose.msra.mxu0 0.0
    %2141 = vmatprep.subr.mxu0 0.0
    %2142 = vmatpush1.xpose.msra.mxu0 0.0
    %2143 = vmatprep.subr.mxu0 0.0
    %2144 = vmatpush1.xpose.msra.mxu0 0.0
    %2145 = vmatprep.subr.mxu0 0.0
    %2146 = vmatpush1.xpose.msra.mxu0 0.0
    %2147 = vmatprep.subr.mxu0 0.0
    %2148 = vmatpush1.xpose.msra.mxu0 0.0
    %2149 = vmatprep.subr.mxu0 0.0
    %2150 = vmatpush1.xpose.msra.mxu0 0.0
    %2151 = vmatprep.subr.mxu0 0.0
    %2152 = vmatpush1.xpose.msra.mxu0 0.0
    %2153 = vmatprep.subr.mxu0 0.0
    %2154 = vmatpush1.xpose.msra.mxu0 0.0
    %2155 = vmatprep.subr.mxu0 0.0
    %2156 = vmatpush1.xpose.msra.mxu0 0.0
    %2157 = vmatprep.subr.mxu0 0.0
    %2158 = vmatpush1.xpose.msra.mxu0 %v2125
    %2159 = vmatprep.subr.mxu0 0.0
    %2160 = vmatpush2.xpose.msra.mxu0 0.0
    %2161 = vmatprep.subr.mxu0 0.0
    %2162 = vmatpush2.xpose.msra.mxu0 0.0
    %2163 = vmatprep.subr.mxu0 0.0
    %2164 = vmatpush2.xpose.msra.mxu0 0.0
    %2165 = vmatprep.subr.mxu0 0.0
    %2166 = vmatpush2.xpose.msra.mxu0 0.0
    %2167 = vmatprep.subr.mxu0 0.0
    %2168 = vmatpush2.xpose.msra.mxu0 0.0
    %2169 = vmatprep.subr.mxu0 0.0
    %2170 = vmatpush2.xpose.msra.mxu0 0.0
    %2171 = vmatprep.subr.mxu0 0.0
    %2172 = vmatpush2.xpose.msra.mxu0 0.0
    %2173 = vmatprep.subr.mxu0 0.0
    %2174 = vmatpush2.xpose.msra.mxu0 0.0
    %2175 = vmatprep.subr.mxu0 0.0
    %2176 = vmatpush2.xpose.msra.mxu0 0.0
    %2177 = vmatprep.subr.mxu0 0.0
    %2178 = vmatpush2.xpose.msra.mxu0 0.0
    %2179 = vmatprep.subr.mxu0 0.0
    %2180 = vmatpush2.xpose.msra.mxu0 0.0
    %2181 = vmatprep.subr.mxu0 0.0
    %2182 = vmatpush2.xpose.msra.mxu0 0.0
    %2183 = vmatprep.subr.mxu0 0.0
    %2184 = vmatpush2.xpose.msra.mxu0 0.0
    %2185 = vmatprep.subr.mxu0 0.0
    %2186 = vmatpush2.xpose.msra.mxu0 0.0
    %2187 = vmatprep.subr.mxu0 0.0
    %2188 = vmatpush2.xpose.msra.mxu0 0.0
    %2189 = vmatprep.subr.mxu0 0.0
    %2190 = vmatpush2.xpose.msra.mxu0 0.0
    %2191 = vmatprep.mubr.f32.mxu0 0.0
    %2192 = vmatmul.mubr.f32.gmra.mxu0 %v2122
    %v2193 = vpop.f32.mrf.mxu0
    %v2194 = vadd.f32 0.0, %v2193
    %v2195 = vpop.f32.mrf.mxu0
    %2196 = vdwg.mxu0
    %v2197 = vmul.f32 %v2118, 0.57735026
    %v2198 = vmul.f32 %v2194, 0.57735026
    %vm2199 = vcmask 36864
    %v2200 = vsel %vm2199, %v2197, -inf
    %2201 = vmax.xlane.f32.xlu0 %v2200
    %v2202 = vpop.xlane.xlu0 %2201
    %v2203 = vsel %vm2199, %v2198, -inf
    %2204 = vmax.xlane.f32.xlu0 %v2203
    %v2205 = vpop.xlane.xlu0 %2204
    %v2206 = vsub.f32 %v2197, %v2202
    %v2207 = vsub.f32 %v2198, %v2205
    %v2208 = vmul.f32 %v2206, 1.442695
    %v2209 = vpow.pop %v2208
    %v2210 = vmul.f32 %v2207, 1.442695
    %v2211 = vpow.pop %v2210
    %v2212 = vsel %vm2199, %v2209, 0.0
    %2213 = vadd.xlane.f32.xlu0 %v2212
    %v2214 = vpop.xlane.xlu0 %2213
    %v2215 = vsel %vm2199, %v2211, 0.0
    %2216 = vadd.xlane.f32.xlu0 %v2215
    %v2217 = vpop.xlane.xlu0 %2216
    %v2218 = vrcp.pop %v2214
    %v2219 = vrcp.pop %v2217
    %v2220 = vmul.f32 %v2209, %v2218
    %v2221 = vmul.f32 %v2211, %v2219
    %v2223 = vsel %vm1459, %v2220, 0
    %v2226 = vsel %vm1463, %v1972, 0
    %2228 = vmatprep.subr.mxu0 0.0
    %2229 = vmatpush1.msra.mxu0 0.0
    %2230 = vmatprep.subr.mxu0 0.0
    %2231 = vmatpush1.msra.mxu0 0.0
    %2232 = vmatprep.subr.mxu0 0.0
    %2233 = vmatpush1.msra.mxu0 0.0
    %2234 = vmatprep.subr.mxu0 0.0
    %2235 = vmatpush1.msra.mxu0 0.0
    %2236 = vmatprep.subr.mxu0 0.0
    %2237 = vmatpush1.msra.mxu0 0.0
    %2238 = vmatprep.subr.mxu0 0.0
    %2239 = vmatpush1.msra.mxu0 0.0
    %2240 = vmatprep.subr.mxu0 0.0
    %2241 = vmatpush1.msra.mxu0 0.0
    %2242 = vmatprep.subr.mxu0 0.0
    %2243 = vmatpush1.msra.mxu0 0.0
    %2244 = vmatprep.subr.mxu0 0.0
    %2245 = vmatpush1.msra.mxu0 0.0
    %2246 = vmatprep.subr.mxu0 0.0
    %2247 = vmatpush1.msra.mxu0 0.0
    %2248 = vmatprep.subr.mxu0 0.0
    %2249 = vmatpush1.msra.mxu0 0.0
    %2250 = vmatprep.subr.mxu0 0.0
    %2251 = vmatpush1.msra.mxu0 0.0
    %2252 = vmatprep.subr.mxu0 0.0
    %2253 = vmatpush1.msra.mxu0 0.0
    %2254 = vmatprep.subr.mxu0 0.0
    %2255 = vmatpush1.msra.mxu0 0.0
    %2256 = vmatprep.subr.mxu0 0.0
    %2257 = vmatpush1.msra.mxu0 0.0
    %2258 = vmatprep.subr.mxu0 0.0
    %2259 = vmatpush1.msra.mxu0 %v2226
    %2260 = vmatprep.subr.mxu0 0.0
    %2261 = vmatpush2.msra.mxu0 0.0
    %2262 = vmatprep.subr.mxu0 0.0
    %2263 = vmatpush2.msra.mxu0 0.0
    %2264 = vmatprep.subr.mxu0 0.0
    %2265 = vmatpush2.msra.mxu0 0.0
    %2266 = vmatprep.subr.mxu0 0.0
    %2267 = vmatpush2.msra.mxu0 0.0
    %2268 = vmatprep.subr.mxu0 0.0
    %2269 = vmatpush2.msra.mxu0 0.0
    %2270 = vmatprep.subr.mxu0 0.0
    %2271 = vmatpush2.msra.mxu0 0.0
    %2272 = vmatprep.subr.mxu0 0.0
    %2273 = vmatpush2.msra.mxu0 0.0
    %2274 = vmatprep.subr.mxu0 0.0
    %2275 = vmatpush2.msra.mxu0 0.0
    %2276 = vmatprep.subr.mxu0 0.0
    %2277 = vmatpush2.msra.mxu0 0.0
    %2278 = vmatprep.subr.mxu0 0.0
    %2279 = vmatpush2.msra.mxu0 0.0
    %2280 = vmatprep.subr.mxu0 0.0
    %2281 = vmatpush2.msra.mxu0 0.0
    %2282 = vmatprep.subr.mxu0 0.0
    %2283 = vmatpush2.msra.mxu0 0.0
    %2284 = vmatprep.subr.mxu0 0.0
    %2285 = vmatpush2.msra.mxu0 0.0
    %2286 = vmatprep.subr.mxu0 0.0
    %2287 = vmatpush2.msra.mxu0 0.0
    %2288 = vmatprep.subr.mxu0 0.0
    %2289 = vmatpush2.msra.mxu0 0.0
    %2290 = vmatprep.subr.mxu0 0.0
    %2291 = vmatpush2.msra.mxu0 0.0
    %2292 = vmatprep.mubr.f32.mxu0 0.0
    %2293 = vmatmul.mubr.f32.gmra.mxu0 %v2223
    %v2294 = vpop.f32.mrf.mxu0
    %v2295 = vadd.f32 0.0, %v2294
    %v2296 = vpop.f32.mrf.mxu0
    %2297 = vdwg.mxu0
    %v2299 = vsel %vm1459, %v2221, 0
    %v2302 = vsel %vm1463, %v2042, 0
    %2304 = vmatprep.subr.mxu0 0.0
    %2305 = vmatpush1.msra.mxu0 0.0
    %2306 = vmatprep.subr.mxu0 0.0
    %2307 = vmatpush1.msra.mxu0 0.0
    %2308 = vmatprep.subr.mxu0 0.0
    %2309 = vmatpush1.msra.mxu0 0.0
    %2310 = vmatprep.subr.mxu0 0.0
    %2311 = vmatpush1.msra.mxu0 0.0
    %2312 = vmatprep.subr.mxu0 0.0
    %2313 = vmatpush1.msra.mxu0 0.0
    %2314 = vmatprep.subr.mxu0 0.0
    %2315 = vmatpush1.msra.mxu0 0.0
    %2316 = vmatprep.subr.mxu0 0.0
    %2317 = vmatpush1.msra.mxu0 0.0
    %2318 = vmatprep.subr.mxu0 0.0
    %2319 = vmatpush1.msra.mxu0 0.0
    %2320 = vmatprep.subr.mxu0 0.0
    %2321 = vmatpush1.msra.mxu0 0.0
    %2322 = vmatprep.subr.mxu0 0.0
    %2323 = vmatpush1.msra.mxu0 0.0
    %2324 = vmatprep.subr.mxu0 0.0
    %2325 = vmatpush1.msra.mxu0 0.0
    %2326 = vmatprep.subr.mxu0 0.0
    %2327 = vmatpush1.msra.mxu0 0.0
    %2328 = vmatprep.subr.mxu0 0.0
    %2329 = vmatpush1.msra.mxu0 0.0
    %2330 = vmatprep.subr.mxu0 0.0
    %2331 = vmatpush1.msra.mxu0 0.0
    %2332 = vmatprep.subr.mxu0 0.0
    %2333 = vmatpush1.msra.mxu0 0.0
    %2334 = vmatprep.subr.mxu0 0.0
    %2335 = vmatpush1.msra.mxu0 %v2302
    %2336 = vmatprep.subr.mxu0 0.0
    %2337 = vmatpush2.msra.mxu0 0.0
    %2338 = vmatprep.subr.mxu0 0.0
    %2339 = vmatpush2.msra.mxu0 0.0
    %2340 = vmatprep.subr.mxu0 0.0
    %2341 = vmatpush2.msra.mxu0 0.0
    %2342 = vmatprep.subr.mxu0 0.0
    %2343 = vmatpush2.msra.mxu0 0.0
    %2344 = vmatprep.subr.mxu0 0.0
    %2345 = vmatpush2.msra.mxu0 0.0
    %2346 = vmatprep.subr.mxu0 0.0
    %2347 = vmatpush2.msra.mxu0 0.0
    %2348 = vmatprep.subr.mxu0 0.0
    %2349 = vmatpush2.msra.mxu0 0.0
    %2350 = vmatprep.subr.mxu0 0.0
    %2351 = vmatpush2.msra.mxu0 0.0
    %2352 = vmatprep.subr.mxu0 0.0
    %2353 = vmatpush2.msra.mxu0 0.0
    %2354 = vmatprep.subr.mxu0 0.0
    %2355 = vmatpush2.msra.mxu0 0.0
    %2356 = vmatprep.subr.mxu0 0.0
    %2357 = vmatpush2.msra.mxu0 0.0
    %2358 = vmatprep.subr.mxu0 0.0
    %2359 = vmatpush2.msra.mxu0 0.0
    %2360 = vmatprep.subr.mxu0 0.0
    %2361 = vmatpush2.msra.mxu0 0.0
    %2362 = vmatprep.subr.mxu0 0.0
    %2363 = vmatpush2.msra.mxu0 0.0
    %2364 = vmatprep.subr.mxu0 0.0
    %2365 = vmatpush2.msra.mxu0 0.0
    %2366 = vmatprep.subr.mxu0 0.0
    %2367 = vmatpush2.msra.mxu0 0.0
    %2368 = vmatprep.mubr.f32.mxu0 0.0
    %2369 = vmatmul.mubr.f32.gmra.mxu0 %v2299
    %v2370 = vpop.f32.mrf.mxu0
    %v2371 = vadd.f32 0.0, %v2370
    %v2372 = vpop.f32.mrf.mxu0
    %2373 = vdwg.mxu0
    %2374 = vrot.lane.b32.xlu0 %v1683, 125
    %v2375 = vpop.permute.xlu0 %2374
    %2376 = vrot.lane.b32.xlu0 %v1829, 125
    %v2377 = vpop.permute.xlu0 %2376
    %v2378 = vsel %vm725, %v2375, 0
    %v2380 = vsel %vm725, %v2377, 0
    %2382 = vmatprep.subr.mxu0 0.0
    %2383 = vmatpush1.xpose.msra.mxu0 0.0
    %2384 = vmatprep.subr.mxu0 0.0
    %2385 = vmatpush1.xpose.msra.mxu0 0.0
    %2386 = vmatprep.subr.mxu0 0.0
    %2387 = vmatpush1.xpose.msra.mxu0 0.0
    %2388 = vmatprep.subr.mxu0 0.0
    %2389 = vmatpush1.xpose.msra.mxu0 0.0
    %2390 = vmatprep.subr.mxu0 0.0
    %2391 = vmatpush1.xpose.msra.mxu0 0.0
    %2392 = vmatprep.subr.mxu0 0.0
    %2393 = vmatpush1.xpose.msra.mxu0 0.0
    %2394 = vmatprep.subr.mxu0 0.0
    %2395 = vmatpush1.xpose.msra.mxu0 0.0
    %2396 = vmatprep.subr.mxu0 0.0
    %2397 = vmatpush1.xpose.msra.mxu0 0.0
    %2398 = vmatprep.subr.mxu0 0.0
    %2399 = vmatpush1.xpose.msra.mxu0 0.0
    %2400 = vmatprep.subr.mxu0 0.0
    %2401 = vmatpush1.xpose.msra.mxu0 0.0
    %2402 = vmatprep.subr.mxu0 0.0
    %2403 = vmatpush1.xpose.msra.mxu0 0.0
    %2404 = vmatprep.subr.mxu0 0.0
    %2405 = vmatpush1.xpose.msra.mxu0 0.0
    %2406 = vmatprep.subr.mxu0 0.0
    %2407 = vmatpush1.xpose.msra.mxu0 0.0
    %2408 = vmatprep.subr.mxu0 0.0
    %2409 = vmatpush1.xpose.msra.mxu0 0.0
    %2410 = vmatprep.subr.mxu0 0.0
    %2411 = vmatpush1.xpose.msra.mxu0 0.0
    %2412 = vmatprep.subr.mxu0 0.0
    %2413 = vmatpush1.xpose.msra.mxu0 %v2380
    %2414 = vmatprep.subr.mxu0 0.0
    %2415 = vmatpush2.xpose.msra.mxu0 0.0
    %2416 = vmatprep.subr.mxu0 0.0
    %2417 = vmatpush2.xpose.msra.mxu0 0.0
    %2418 = vmatprep.subr.mxu0 0.0
    %2419 = vmatpush2.xpose.msra.mxu0 0.0
    %2420 = vmatprep.subr.mxu0 0.0
    %2421 = vmatpush2.xpose.msra.mxu0 0.0
    %2422 = vmatprep.subr.mxu0 0.0
    %2423 = vmatpush2.xpose.msra.mxu0 0.0
    %2424 = vmatprep.subr.mxu0 0.0
    %2425 = vmatpush2.xpose.msra.mxu0 0.0
    %2426 = vmatprep.subr.mxu0 0.0
    %2427 = vmatpush2.xpose.msra.mxu0 0.0
    %2428 = vmatprep.subr.mxu0 0.0
    %2429 = vmatpush2.xpose.msra.mxu0 0.0
    %2430 = vmatprep.subr.mxu0 0.0
    %2431 = vmatpush2.xpose.msra.mxu0 0.0
    %2432 = vmatprep.subr.mxu0 0.0
    %2433 = vmatpush2.xpose.msra.mxu0 0.0
    %2434 = vmatprep.subr.mxu0 0.0
    %2435 = vmatpush2.xpose.msra.mxu0 0.0
    %2436 = vmatprep.subr.mxu0 0.0
    %2437 = vmatpush2.xpose.msra.mxu0 0.0
    %2438 = vmatprep.subr.mxu0 0.0
    %2439 = vmatpush2.xpose.msra.mxu0 0.0
    %2440 = vmatprep.subr.mxu0 0.0
    %2441 = vmatpush2.xpose.msra.mxu0 0.0
    %2442 = vmatprep.subr.mxu0 0.0
    %2443 = vmatpush2.xpose.msra.mxu0 0.0
    %2444 = vmatprep.subr.mxu0 0.0
    %2445 = vmatpush2.xpose.msra.mxu0 0.0
    %2446 = vmatprep.mubr.f32.mxu0 0.0
    %2447 = vmatmul.mubr.f32.gmra.mxu0 %v2378
    %v2448 = vpop.f32.mrf.mxu0
    %v2449 = vadd.f32 0.0, %v2448
    %v2450 = vpop.f32.mrf.mxu0
    %2451 = vdwg.mxu0
    %2452 = vrot.lane.b32.xlu0 %v1756, 125
    %v2453 = vpop.permute.xlu0 %2452
    %2454 = vrot.lane.b32.xlu0 %v1899, 125
    %v2455 = vpop.permute.xlu0 %2454
    %v2456 = vsel %vm725, %v2453, 0
    %v2458 = vsel %vm725, %v2455, 0
    %2460 = vmatprep.subr.mxu0 0.0
    %2461 = vmatpush1.xpose.msra.mxu0 0.0
    %2462 = vmatprep.subr.mxu0 0.0
    %2463 = vmatpush1.xpose.msra.mxu0 0.0
    %2464 = vmatprep.subr.mxu0 0.0
    %2465 = vmatpush1.xpose.msra.mxu0 0.0
    %2466 = vmatprep.subr.mxu0 0.0
    %2467 = vmatpush1.xpose.msra.mxu0 0.0
    %2468 = vmatprep.subr.mxu0 0.0
    %2469 = vmatpush1.xpose.msra.mxu0 0.0
    %2470 = vmatprep.subr.mxu0 0.0
    %2471 = vmatpush1.xpose.msra.mxu0 0.0
    %2472 = vmatprep.subr.mxu0 0.0
    %2473 = vmatpush1.xpose.msra.mxu0 0.0
    %2474 = vmatprep.subr.mxu0 0.0
    %2475 = vmatpush1.xpose.msra.mxu0 0.0
    %2476 = vmatprep.subr.mxu0 0.0
    %2477 = vmatpush1.xpose.msra.mxu0 0.0
    %2478 = vmatprep.subr.mxu0 0.0
    %2479 = vmatpush1.xpose.msra.mxu0 0.0
    %2480 = vmatprep.subr.mxu0 0.0
    %2481 = vmatpush1.xpose.msra.mxu0 0.0
    %2482 = vmatprep.subr.mxu0 0.0
    %2483 = vmatpush1.xpose.msra.mxu0 0.0
    %2484 = vmatprep.subr.mxu0 0.0
    %2485 = vmatpush1.xpose.msra.mxu0 0.0
    %2486 = vmatprep.subr.mxu0 0.0
    %2487 = vmatpush1.xpose.msra.mxu0 0.0
    %2488 = vmatprep.subr.mxu0 0.0
    %2489 = vmatpush1.xpose.msra.mxu0 0.0
    %2490 = vmatprep.subr.mxu0 0.0
    %2491 = vmatpush1.xpose.msra.mxu0 %v2458
    %2492 = vmatprep.subr.mxu0 0.0
    %2493 = vmatpush2.xpose.msra.mxu0 0.0
    %2494 = vmatprep.subr.mxu0 0.0
    %2495 = vmatpush2.xpose.msra.mxu0 0.0
    %2496 = vmatprep.subr.mxu0 0.0
    %2497 = vmatpush2.xpose.msra.mxu0 0.0
    %2498 = vmatprep.subr.mxu0 0.0
    %2499 = vmatpush2.xpose.msra.mxu0 0.0
    %2500 = vmatprep.subr.mxu0 0.0
    %2501 = vmatpush2.xpose.msra.mxu0 0.0
    %2502 = vmatprep.subr.mxu0 0.0
    %2503 = vmatpush2.xpose.msra.mxu0 0.0
    %2504 = vmatprep.subr.mxu0 0.0
    %2505 = vmatpush2.xpose.msra.mxu0 0.0
    %2506 = vmatprep.subr.mxu0 0.0
    %2507 = vmatpush2.xpose.msra.mxu0 0.0
    %2508 = vmatprep.subr.mxu0 0.0
    %2509 = vmatpush2.xpose.msra.mxu0 0.0
    %2510 = vmatprep.subr.mxu0 0.0
    %2511 = vmatpush2.xpose.msra.mxu0 0.0
    %2512 = vmatprep.subr.mxu0 0.0
    %2513 = vmatpush2.xpose.msra.mxu0 0.0
    %2514 = vmatprep.subr.mxu0 0.0
    %2515 = vmatpush2.xpose.msra.mxu0 0.0
    %2516 = vmatprep.subr.mxu0 0.0
    %2517 = vmatpush2.xpose.msra.mxu0 0.0
    %2518 = vmatprep.subr.mxu0 0.0
    %2519 = vmatpush2.xpose.msra.mxu0 0.0
    %2520 = vmatprep.subr.mxu0 0.0
    %2521 = vmatpush2.xpose.msra.mxu0 0.0
    %2522 = vmatprep.subr.mxu0 0.0
    %2523 = vmatpush2.xpose.msra.mxu0 0.0
    %2524 = vmatprep.mubr.f32.mxu0 0.0
    %2525 = vmatmul.mubr.f32.gmra.mxu0 %v2456
    %v2526 = vpop.f32.mrf.mxu0
    %v2527 = vadd.f32 0.0, %v2526
    %v2528 = vpop.f32.mrf.mxu0
    %2529 = vdwg.mxu0
    %v2530 = vmul.f32 %v2449, 0.57735026
    %v2531 = vmul.f32 %v2527, 0.57735026
    %v2532 = vsel %vm2199, %v2530, -inf
    %2533 = vmax.xlane.f32.xlu0 %v2532
    %v2534 = vpop.xlane.xlu0 %2533
    %v2535 = vsel %vm2199, %v2531, -inf
    %2536 = vmax.xlane.f32.xlu0 %v2535
    %v2537 = vpop.xlane.xlu0 %2536
    %v2538 = vsub.f32 %v2530, %v2534
    %v2539 = vsub.f32 %v2531, %v2537
    %v2540 = vmul.f32 %v2538, 1.442695
    %v2541 = vpow.pop %v2540
    %v2542 = vmul.f32 %v2539, 1.442695
    %v2543 = vpow.pop %v2542
    %v2544 = vsel %vm2199, %v2541, 0.0
    %2545 = vadd.xlane.f32.xlu0 %v2544
    %v2546 = vpop.xlane.xlu0 %2545
    %v2547 = vsel %vm2199, %v2543, 0.0
    %2548 = vadd.xlane.f32.xlu0 %v2547
    %v2549 = vpop.xlane.xlu0 %2548
    %v2550 = vrcp.pop %v2546
    %v2551 = vrcp.pop %v2549
    %v2552 = vmul.f32 %v2541, %v2550
    %v2553 = vmul.f32 %v2543, %v2551
    %2554 = vrot.lane.b32.xlu0 %v1972, 125
    %v2555 = vpop.permute.xlu0 %2554
    %v2557 = vsel %vm1459, %v2552, 0
    %v2559 = vsel %vm1463, %v2555, 0
    %2561 = vmatprep.subr.mxu0 0.0
    %2562 = vmatpush1.msra.mxu0 0.0
    %2563 = vmatprep.subr.mxu0 0.0
    %2564 = vmatpush1.msra.mxu0 0.0
    %2565 = vmatprep.subr.mxu0 0.0
    %2566 = vmatpush1.msra.mxu0 0.0
    %2567 = vmatprep.subr.mxu0 0.0
    %2568 = vmatpush1.msra.mxu0 0.0
    %2569 = vmatprep.subr.mxu0 0.0
    %2570 = vmatpush1.msra.mxu0 0.0
    %2571 = vmatprep.subr.mxu0 0.0
    %2572 = vmatpush1.msra.mxu0 0.0
    %2573 = vmatprep.subr.mxu0 0.0
    %2574 = vmatpush1.msra.mxu0 0.0
    %2575 = vmatprep.subr.mxu0 0.0
    %2576 = vmatpush1.msra.mxu0 0.0
    %2577 = vmatprep.subr.mxu0 0.0
    %2578 = vmatpush1.msra.mxu0 0.0
    %2579 = vmatprep.subr.mxu0 0.0
    %2580 = vmatpush1.msra.mxu0 0.0
    %2581 = vmatprep.subr.mxu0 0.0
    %2582 = vmatpush1.msra.mxu0 0.0
    %2583 = vmatprep.subr.mxu0 0.0
    %2584 = vmatpush1.msra.mxu0 0.0
    %2585 = vmatprep.subr.mxu0 0.0
    %2586 = vmatpush1.msra.mxu0 0.0
    %2587 = vmatprep.subr.mxu0 0.0
    %2588 = vmatpush1.msra.mxu0 0.0
    %2589 = vmatprep.subr.mxu0 0.0
    %2590 = vmatpush1.msra.mxu0 0.0
    %2591 = vmatprep.subr.mxu0 0.0
    %2592 = vmatpush1.msra.mxu0 %v2559
    %2593 = vmatprep.subr.mxu0 0.0
    %2594 = vmatpush2.msra.mxu0 0.0
    %2595 = vmatprep.subr.mxu0 0.0
    %2596 = vmatpush2.msra.mxu0 0.0
    %2597 = vmatprep.subr.mxu0 0.0
    %2598 = vmatpush2.msra.mxu0 0.0
    %2599 = vmatprep.subr.mxu0 0.0
    %2600 = vmatpush2.msra.mxu0 0.0
    %2601 = vmatprep.subr.mxu0 0.0
    %2602 = vmatpush2.msra.mxu0 0.0
    %2603 = vmatprep.subr.mxu0 0.0
    %2604 = vmatpush2.msra.mxu0 0.0
    %2605 = vmatprep.subr.mxu0 0.0
    %2606 = vmatpush2.msra.mxu0 0.0
    %2607 = vmatprep.subr.mxu0 0.0
    %2608 = vmatpush2.msra.mxu0 0.0
    %2609 = vmatprep.subr.mxu0 0.0
    %2610 = vmatpush2.msra.mxu0 0.0
    %2611 = vmatprep.subr.mxu0 0.0
    %2612 = vmatpush2.msra.mxu0 0.0
    %2613 = vmatprep.subr.mxu0 0.0
    %2614 = vmatpush2.msra.mxu0 0.0
    %2615 = vmatprep.subr.mxu0 0.0
    %2616 = vmatpush2.msra.mxu0 0.0
    %2617 = vmatprep.subr.mxu0 0.0
    %2618 = vmatpush2.msra.mxu0 0.0
    %2619 = vmatprep.subr.mxu0 0.0
    %2620 = vmatpush2.msra.mxu0 0.0
    %2621 = vmatprep.subr.mxu0 0.0
    %2622 = vmatpush2.msra.mxu0 0.0
    %2623 = vmatprep.subr.mxu0 0.0
    %2624 = vmatpush2.msra.mxu0 0.0
    %2625 = vmatprep.mubr.f32.mxu0 0.0
    %2626 = vmatmul.mubr.f32.gmra.mxu0 %v2557
    %v2627 = vpop.f32.mrf.mxu0
    %v2628 = vadd.f32 0.0, %v2627
    %v2629 = vpop.f32.mrf.mxu0
    %2630 = vdwg.mxu0
    %2631 = vrot.lane.b32.xlu0 %v2042, 125
    %v2632 = vpop.permute.xlu0 %2631
    %v2634 = vsel %vm1459, %v2553, 0
    %v2636 = vsel %vm1463, %v2632, 0
    %2638 = vmatprep.subr.mxu0 0.0
    %2639 = vmatpush1.msra.mxu0 0.0
    %2640 = vmatprep.subr.mxu0 0.0
    %2641 = vmatpush1.msra.mxu0 0.0
    %2642 = vmatprep.subr.mxu0 0.0
    %2643 = vmatpush1.msra.mxu0 0.0
    %2644 = vmatprep.subr.mxu0 0.0
    %2645 = vmatpush1.msra.mxu0 0.0
    %2646 = vmatprep.subr.mxu0 0.0
    %2647 = vmatpush1.msra.mxu0 0.0
    %2648 = vmatprep.subr.mxu0 0.0
    %2649 = vmatpush1.msra.mxu0 0.0
    %2650 = vmatprep.subr.mxu0 0.0
    %2651 = vmatpush1.msra.mxu0 0.0
    %2652 = vmatprep.subr.mxu0 0.0
    %2653 = vmatpush1.msra.mxu0 0.0
    %2654 = vmatprep.subr.mxu0 0.0
    %2655 = vmatpush1.msra.mxu0 0.0
    %2656 = vmatprep.subr.mxu0 0.0
    %2657 = vmatpush1.msra.mxu0 0.0
    %2658 = vmatprep.subr.mxu0 0.0
    %2659 = vmatpush1.msra.mxu0 0.0
    %2660 = vmatprep.subr.mxu0 0.0
    %2661 = vmatpush1.msra.mxu0 0.0
    %2662 = vmatprep.subr.mxu0 0.0
    %2663 = vmatpush1.msra.mxu0 0.0
    %2664 = vmatprep.subr.mxu0 0.0
    %2665 = vmatpush1.msra.mxu0 0.0
    %2666 = vmatprep.subr.mxu0 0.0
    %2667 = vmatpush1.msra.mxu0 0.0
    %2668 = vmatprep.subr.mxu0 0.0
    %2669 = vmatpush1.msra.mxu0 %v2636
    %2670 = vmatprep.subr.mxu0 0.0
    %2671 = vmatpush2.msra.mxu0 0.0
    %2672 = vmatprep.subr.mxu0 0.0
    %2673 = vmatpush2.msra.mxu0 0.0
    %2674 = vmatprep.subr.mxu0 0.0
    %2675 = vmatpush2.msra.mxu0 0.0
    %2676 = vmatprep.subr.mxu0 0.0
    %2677 = vmatpush2.msra.mxu0 0.0
    %2678 = vmatprep.subr.mxu0 0.0
    %2679 = vmatpush2.msra.mxu0 0.0
    %2680 = vmatprep.subr.mxu0 0.0
    %2681 = vmatpush2.msra.mxu0 0.0
    %2682 = vmatprep.subr.mxu0 0.0
    %2683 = vmatpush2.msra.mxu0 0.0
    %2684 = vmatprep.subr.mxu0 0.0
    %2685 = vmatpush2.msra.mxu0 0.0
    %2686 = vmatprep.subr.mxu0 0.0
    %2687 = vmatpush2.msra.mxu0 0.0
    %2688 = vmatprep.subr.mxu0 0.0
    %2689 = vmatpush2.msra.mxu0 0.0
    %2690 = vmatprep.subr.mxu0 0.0
    %2691 = vmatpush2.msra.mxu0 0.0
    %2692 = vmatprep.subr.mxu0 0.0
    %2693 = vmatpush2.msra.mxu0 0.0
    %2694 = vmatprep.subr.mxu0 0.0
    %2695 = vmatpush2.msra.mxu0 0.0
    %2696 = vmatprep.subr.mxu0 0.0
    %2697 = vmatpush2.msra.mxu0 0.0
    %2698 = vmatprep.subr.mxu0 0.0
    %2699 = vmatpush2.msra.mxu0 0.0
    %2700 = vmatprep.subr.mxu0 0.0
    %2701 = vmatpush2.msra.mxu0 0.0
    %2702 = vmatprep.mubr.f32.mxu0 0.0
    %2703 = vmatmul.mubr.f32.gmra.mxu0 %v2634
    %v2704 = vpop.f32.mrf.mxu0
    %v2705 = vadd.f32 0.0, %v2704
    %v2706 = vpop.f32.mrf.mxu0
    %2707 = vdwg.mxu0
    %2710 = vrot.lane.b32.xlu0 %v2628, 3
    %v2711 = vpop.permute.xlu0 %2710
    %2712 = vrot.lane.b32.xlu0 %v2705, 3
    %v2713 = vpop.permute.xlu0 %2712
    %v2716 = vsel %vm725, %v2295, %v2711
    %v2717 = vsel %vm725, %v2371, %v2713
    %v2718 = vadd.f32 %v1534, %v2716
    %v2719 = vadd.f32 %v1607, %v2717
    %vm2720 = vcmask 45056
    %v2721 = vsel %vm2720, %v2718, 0.0
    %2722 = vadd.xlane.f32.xlu0 %v2721
    %v2723 = vpop.xlane.xlu0 %2722
    %v2724 = vsel %vm2720, %v2719, 0.0
    %2725 = vadd.xlane.f32.xlu0 %v2724
    %v2726 = vpop.xlane.xlu0 %2725
    %v2727 = vmul.f32 %v2723, %v1408
    %v2728 = vmul.f32 %v2726, %v1408
    %v2729 = vsub.f32 %v2718, %v2727
    %v2730 = vsub.f32 %v2719, %v2728
    %v2731 = vmul.f32 %v2729, %v2729
    %v2732 = vmul.f32 %v2730, %v2730
    %v2733 = vsel %vm2720, %v2731, 0.0
    %2734 = vadd.xlane.f32.xlu0 %v2733
    %v2735 = vpop.xlane.xlu0 %2734
    %v2736 = vsel %vm2720, %v2732, 0.0
    %2737 = vadd.xlane.f32.xlu0 %v2736
    %v2738 = vpop.xlane.xlu0 %2737
    %v2739 = vmul.f32 %v2735, %v1408
    %v2740 = vmul.f32 %v2738, %v1408
    %v2741 = vadd.f32 %v2739, 1e-05
    %v2742 = vadd.f32 %v2740, 1e-05
    %v2743 = vrsqrt.pop %v2741
    %v2744 = vrsqrt.pop %v2742
    %v2745 = vmul.f32 %v2729, %v2743
    %v2746 = vmul.f32 %v2730, %v2744
    %v2748 = vlaneseq
    %v2749 = vshrl.u32 %v2748, 7
    %v2750 = vsub.s32 0, %v2749
    %v2751 = vrot.slane %v119, %v2750
    %v2753 = vmul.f32 %v2745, %v2751
    %v2754 = vmul.f32 %v2746, %v2751
    %v2756 = vlaneseq
    %v2757 = vshrl.u32 %v2756, 7
    %v2758 = vsub.s32 0, %v2757
    %v2759 = vrot.slane %v120, %v2758
    %v2761 = vadd.f32 %v2753, %v2759
    %v2762 = vadd.f32 %v2754, %v2759
    %v2764 = vsel %vm288, %v2761, 0
    %2766 = vmatprep.subr.mxu0 0.0
    %2767 = vmatpush1.msra.mxu0 0.0
    %2768 = vmatprep.subr.mxu0 0.0
    %2769 = vmatpush1.msra.mxu0 0.0
    %2770 = vmatprep.subr.mxu0 0.0
    %2771 = vmatpush1.msra.mxu0 0.0
    %2772 = vmatprep.subr.mxu0 0.0
    %2773 = vmatpush1.msra.mxu0 0.0
    %2774 = vmatprep.subr.mxu0 0.0
    %2775 = vmatpush1.msra.mxu0 0.0
    %2776 = vmatprep.subr.mxu0 0.0
    %2777 = vmatpush1.msra.mxu0 0.0
    %2778 = vmatprep.subr.mxu0 0.0
    %2779 = vmatpush1.msra.mxu0 0.0
    %2780 = vmatprep.subr.mxu0 0.0
    %2781 = vmatpush1.msra.mxu0 0.0
    %2782 = vmatprep.subr.mxu0 0.0
    %2783 = vmatpush1.msra.mxu0 0.0
    %2784 = vmatprep.subr.mxu0 0.0
    %2785 = vmatpush1.msra.mxu0 0.0
    %2786 = vmatprep.subr.mxu0 0.0
    %2787 = vmatpush1.msra.mxu0 0.0
    %2788 = vmatprep.subr.mxu0 0.0
    %2789 = vmatpush1.msra.mxu0 0.0
    %2790 = vmatprep.subr.mxu0 0.0
    %2791 = vmatpush1.msra.mxu0 0.0
    %2792 = vmatprep.subr.mxu0 0.0
    %2793 = vmatpush1.msra.mxu0 0.0
    %2794 = vmatprep.subr.mxu0 0.0
    %2795 = vmatpush1.msra.mxu0 0.0
    %2796 = vmatprep.subr.mxu0 0.0
    %2797 = vmatpush1.msra.mxu0 %v1614
    %2798 = vmatprep.subr.mxu0 0.0
    %2799 = vmatpush2.msra.mxu0 0.0
    %2800 = vmatprep.subr.mxu0 0.0
    %2801 = vmatpush2.msra.mxu0 0.0
    %2802 = vmatprep.subr.mxu0 0.0
    %2803 = vmatpush2.msra.mxu0 0.0
    %2804 = vmatprep.subr.mxu0 0.0
    %2805 = vmatpush2.msra.mxu0 0.0
    %2806 = vmatprep.subr.mxu0 0.0
    %2807 = vmatpush2.msra.mxu0 0.0
    %2808 = vmatprep.subr.mxu0 0.0
    %2809 = vmatpush2.msra.mxu0 0.0
    %2810 = vmatprep.subr.mxu0 0.0
    %2811 = vmatpush2.msra.mxu0 0.0
    %2812 = vmatprep.subr.mxu0 0.0
    %2813 = vmatpush2.msra.mxu0 0.0
    %2814 = vmatprep.subr.mxu0 0.0
    %2815 = vmatpush2.msra.mxu0 0.0
    %2816 = vmatprep.subr.mxu0 0.0
    %2817 = vmatpush2.msra.mxu0 0.0
    %2818 = vmatprep.subr.mxu0 0.0
    %2819 = vmatpush2.msra.mxu0 0.0
    %2820 = vmatprep.subr.mxu0 0.0
    %2821 = vmatpush2.msra.mxu0 0.0
    %2822 = vmatprep.subr.mxu0 0.0
    %2823 = vmatpush2.msra.mxu0 0.0
    %2824 = vmatprep.subr.mxu0 0.0
    %2825 = vmatpush2.msra.mxu0 0.0
    %2826 = vmatprep.subr.mxu0 0.0
    %2827 = vmatpush2.msra.mxu0 0.0
    %2828 = vmatprep.subr.mxu0 0.0
    %2829 = vmatpush2.msra.mxu0 0.0
    %2830 = vmatprep.mubr.f32.mxu0 0.0
    %2831 = vmatmul.mubr.f32.gmra.mxu0 %v2764
    %v2832 = vpop.f32.mrf.mxu0
    %v2833 = vadd.f32 0.0, %v2832
    %v2834 = vpop.f32.mrf.mxu0
    %2835 = vdwg.mxu0
    %v2837 = vsel %vm288, %v2762, 0
    %2839 = vmatprep.subr.mxu0 0.0
    %2840 = vmatpush1.msra.mxu0 0.0
    %2841 = vmatprep.subr.mxu0 0.0
    %2842 = vmatpush1.msra.mxu0 0.0
    %2843 = vmatprep.subr.mxu0 0.0
    %2844 = vmatpush1.msra.mxu0 0.0
    %2845 = vmatprep.subr.mxu0 0.0
    %2846 = vmatpush1.msra.mxu0 0.0
    %2847 = vmatprep.subr.mxu0 0.0
    %2848 = vmatpush1.msra.mxu0 0.0
    %2849 = vmatprep.subr.mxu0 0.0
    %2850 = vmatpush1.msra.mxu0 0.0
    %2851 = vmatprep.subr.mxu0 0.0
    %2852 = vmatpush1.msra.mxu0 0.0
    %2853 = vmatprep.subr.mxu0 0.0
    %2854 = vmatpush1.msra.mxu0 0.0
    %2855 = vmatprep.subr.mxu0 0.0
    %2856 = vmatpush1.msra.mxu0 0.0
    %2857 = vmatprep.subr.mxu0 0.0
    %2858 = vmatpush1.msra.mxu0 0.0
    %2859 = vmatprep.subr.mxu0 0.0
    %2860 = vmatpush1.msra.mxu0 0.0
    %2861 = vmatprep.subr.mxu0 0.0
    %2862 = vmatpush1.msra.mxu0 0.0
    %2863 = vmatprep.subr.mxu0 0.0
    %2864 = vmatpush1.msra.mxu0 0.0
    %2865 = vmatprep.subr.mxu0 0.0
    %2866 = vmatpush1.msra.mxu0 0.0
    %2867 = vmatprep.subr.mxu0 0.0
    %2868 = vmatpush1.msra.mxu0 0.0
    %2869 = vmatprep.subr.mxu0 0.0
    %2870 = vmatpush1.msra.mxu0 %v1614
    %2871 = vmatprep.subr.mxu0 0.0
    %2872 = vmatpush2.msra.mxu0 0.0
    %2873 = vmatprep.subr.mxu0 0.0
    %2874 = vmatpush2.msra.mxu0 0.0
    %2875 = vmatprep.subr.mxu0 0.0
    %2876 = vmatpush2.msra.mxu0 0.0
    %2877 = vmatprep.subr.mxu0 0.0
    %2878 = vmatpush2.msra.mxu0 0.0
    %2879 = vmatprep.subr.mxu0 0.0
    %2880 = vmatpush2.msra.mxu0 0.0
    %2881 = vmatprep.subr.mxu0 0.0
    %2882 = vmatpush2.msra.mxu0 0.0
    %2883 = vmatprep.subr.mxu0 0.0
    %2884 = vmatpush2.msra.mxu0 0.0
    %2885 = vmatprep.subr.mxu0 0.0
    %2886 = vmatpush2.msra.mxu0 0.0
    %2887 = vmatprep.subr.mxu0 0.0
    %2888 = vmatpush2.msra.mxu0 0.0
    %2889 = vmatprep.subr.mxu0 0.0
    %2890 = vmatpush2.msra.mxu0 0.0
    %2891 = vmatprep.subr.mxu0 0.0
    %2892 = vmatpush2.msra.mxu0 0.0
    %2893 = vmatprep.subr.mxu0 0.0
    %2894 = vmatpush2.msra.mxu0 0.0
    %2895 = vmatprep.subr.mxu0 0.0
    %2896 = vmatpush2.msra.mxu0 0.0
    %2897 = vmatprep.subr.mxu0 0.0
    %2898 = vmatpush2.msra.mxu0 0.0
    %2899 = vmatprep.subr.mxu0 0.0
    %2900 = vmatpush2.msra.mxu0 0.0
    %2901 = vmatprep.subr.mxu0 0.0
    %2902 = vmatpush2.msra.mxu0 0.0
    %2903 = vmatprep.mubr.f32.mxu0 0.0
    %2904 = vmatmul.mubr.f32.gmra.mxu0 %v2837
    %v2905 = vpop.f32.mrf.mxu0
    %v2906 = vadd.f32 0.0, %v2905
    %v2907 = vpop.f32.mrf.mxu0
    %2908 = vdwg.mxu0
    %v2910 = vsel %vm288, %v1443, 0
    %2912 = vmatprep.subr.mxu0 0.0
    %2913 = vmatpush1.msra.mxu0 0.0
    %2914 = vmatprep.subr.mxu0 0.0
    %2915 = vmatpush1.msra.mxu0 0.0
    %2916 = vmatprep.subr.mxu0 0.0
    %2917 = vmatpush1.msra.mxu0 0.0
    %2918 = vmatprep.subr.mxu0 0.0
    %2919 = vmatpush1.msra.mxu0 0.0
    %2920 = vmatprep.subr.mxu0 0.0
    %2921 = vmatpush1.msra.mxu0 0.0
    %2922 = vmatprep.subr.mxu0 0.0
    %2923 = vmatpush1.msra.mxu0 0.0
    %2924 = vmatprep.subr.mxu0 0.0
    %2925 = vmatpush1.msra.mxu0 0.0
    %2926 = vmatprep.subr.mxu0 0.0
    %2927 = vmatpush1.msra.mxu0 0.0
    %2928 = vmatprep.subr.mxu0 0.0
    %2929 = vmatpush1.msra.mxu0 0.0
    %2930 = vmatprep.subr.mxu0 0.0
    %2931 = vmatpush1.msra.mxu0 0.0
    %2932 = vmatprep.subr.mxu0 0.0
    %2933 = vmatpush1.msra.mxu0 0.0
    %2934 = vmatprep.subr.mxu0 0.0
    %2935 = vmatpush1.msra.mxu0 0.0
    %2936 = vmatprep.subr.mxu0 0.0
    %2937 = vmatpush1.msra.mxu0 0.0
    %2938 = vmatprep.subr.mxu0 0.0
    %2939 = vmatpush1.msra.mxu0 0.0
    %2940 = vmatprep.subr.mxu0 0.0
    %2941 = vmatpush1.msra.mxu0 0.0
    %2942 = vmatprep.subr.mxu0 0.0
    %2943 = vmatpush1.msra.mxu0 %v1760
    %2944 = vmatprep.subr.mxu0 0.0
    %2945 = vmatpush2.msra.mxu0 0.0
    %2946 = vmatprep.subr.mxu0 0.0
    %2947 = vmatpush2.msra.mxu0 0.0
    %2948 = vmatprep.subr.mxu0 0.0
    %2949 = vmatpush2.msra.mxu0 0.0
    %2950 = vmatprep.subr.mxu0 0.0
    %2951 = vmatpush2.msra.mxu0 0.0
    %2952 = vmatprep.subr.mxu0 0.0
    %2953 = vmatpush2.msra.mxu0 0.0
    %2954 = vmatprep.subr.mxu0 0.0
    %2955 = vmatpush2.msra.mxu0 0.0
    %2956 = vmatprep.subr.mxu0 0.0
    %2957 = vmatpush2.msra.mxu0 0.0
    %2958 = vmatprep.subr.mxu0 0.0
    %2959 = vmatpush2.msra.mxu0 0.0
    %2960 = vmatprep.subr.mxu0 0.0
    %2961 = vmatpush2.msra.mxu0 0.0
    %2962 = vmatprep.subr.mxu0 0.0
    %2963 = vmatpush2.msra.mxu0 0.0
    %2964 = vmatprep.subr.mxu0 0.0
    %2965 = vmatpush2.msra.mxu0 0.0
    %2966 = vmatprep.subr.mxu0 0.0
    %2967 = vmatpush2.msra.mxu0 0.0
    %2968 = vmatprep.subr.mxu0 0.0
    %2969 = vmatpush2.msra.mxu0 0.0
    %2970 = vmatprep.subr.mxu0 0.0
    %2971 = vmatpush2.msra.mxu0 0.0
    %2972 = vmatprep.subr.mxu0 0.0
    %2973 = vmatpush2.msra.mxu0 0.0
    %2974 = vmatprep.subr.mxu0 0.0
    %2975 = vmatpush2.msra.mxu0 0.0
    %2976 = vmatprep.mubr.f32.mxu0 0.0
    %2977 = vmatmul.mubr.f32.gmra.mxu0 %v2910
    %v2978 = vpop.f32.mrf.mxu0
    %v2979 = vadd.f32 0.0, %v2978
    %v2980 = vpop.f32.mrf.mxu0
    %2981 = vdwg.mxu0
    %v2983 = vsel %vm288, %v1444, 0
    %2985 = vmatprep.subr.mxu0 0.0
    %2986 = vmatpush1.msra.mxu0 0.0
    %2987 = vmatprep.subr.mxu0 0.0
    %2988 = vmatpush1.msra.mxu0 0.0
    %2989 = vmatprep.subr.mxu0 0.0
    %2990 = vmatpush1.msra.mxu0 0.0
    %2991 = vmatprep.subr.mxu0 0.0
    %2992 = vmatpush1.msra.mxu0 0.0
    %2993 = vmatprep.subr.mxu0 0.0
    %2994 = vmatpush1.msra.mxu0 0.0
    %2995 = vmatprep.subr.mxu0 0.0
    %2996 = vmatpush1.msra.mxu0 0.0
    %2997 = vmatprep.subr.mxu0 0.0
    %2998 = vmatpush1.msra.mxu0 0.0
    %2999 = vmatprep.subr.mxu0 0.0
    %3000 = vmatpush1.msra.mxu0 0.0
    %3001 = vmatprep.subr.mxu0 0.0
    %3002 = vmatpush1.msra.mxu0 0.0
    %3003 = vmatprep.subr.mxu0 0.0
    %3004 = vmatpush1.msra.mxu0 0.0
    %3005 = vmatprep.subr.mxu0 0.0
    %3006 = vmatpush1.msra.mxu0 0.0
    %3007 = vmatprep.subr.mxu0 0.0
    %3008 = vmatpush1.msra.mxu0 0.0
    %3009 = vmatprep.subr.mxu0 0.0
    %3010 = vmatpush1.msra.mxu0 0.0
    %3011 = vmatprep.subr.mxu0 0.0
    %3012 = vmatpush1.msra.mxu0 0.0
    %3013 = vmatprep.subr.mxu0 0.0
    %3014 = vmatpush1.msra.mxu0 0.0
    %3015 = vmatprep.subr.mxu0 0.0
    %3016 = vmatpush1.msra.mxu0 %v1760
    %3017 = vmatprep.subr.mxu0 0.0
    %3018 = vmatpush2.msra.mxu0 0.0
    %3019 = vmatprep.subr.mxu0 0.0
    %3020 = vmatpush2.msra.mxu0 0.0
    %3021 = vmatprep.subr.mxu0 0.0
    %3022 = vmatpush2.msra.mxu0 0.0
    %3023 = vmatprep.subr.mxu0 0.0
    %3024 = vmatpush2.msra.mxu0 0.0
    %3025 = vmatprep.subr.mxu0 0.0
    %3026 = vmatpush2.msra.mxu0 0.0
    %3027 = vmatprep.subr.mxu0 0.0
    %3028 = vmatpush2.msra.mxu0 0.0
    %3029 = vmatprep.subr.mxu0 0.0
    %3030 = vmatpush2.msra.mxu0 0.0
    %3031 = vmatprep.subr.mxu0 0.0
    %3032 = vmatpush2.msra.mxu0 0.0
    %3033 = vmatprep.subr.mxu0 0.0
    %3034 = vmatpush2.msra.mxu0 0.0
    %3035 = vmatprep.subr.mxu0 0.0
    %3036 = vmatpush2.msra.mxu0 0.0
    %3037 = vmatprep.subr.mxu0 0.0
    %3038 = vmatpush2.msra.mxu0 0.0
    %3039 = vmatprep.subr.mxu0 0.0
    %3040 = vmatpush2.msra.mxu0 0.0
    %3041 = vmatprep.subr.mxu0 0.0
    %3042 = vmatpush2.msra.mxu0 0.0
    %3043 = vmatprep.subr.mxu0 0.0
    %3044 = vmatpush2.msra.mxu0 0.0
    %3045 = vmatprep.subr.mxu0 0.0
    %3046 = vmatpush2.msra.mxu0 0.0
    %3047 = vmatprep.subr.mxu0 0.0
    %3048 = vmatpush2.msra.mxu0 0.0
    %3049 = vmatprep.mubr.f32.mxu0 0.0
    %3050 = vmatmul.mubr.f32.gmra.mxu0 %v2983
    %v3051 = vpop.f32.mrf.mxu0
    %v3052 = vadd.f32 0.0, %v3051
    %v3053 = vpop.f32.mrf.mxu0
    %3054 = vdwg.mxu0
    %3055 = vmatprep.subr.mxu0 0.0
    %3056 = vmatpush1.msra.mxu0 0.0
    %3057 = vmatprep.subr.mxu0 0.0
    %3058 = vmatpush1.msra.mxu0 0.0
    %3059 = vmatprep.subr.mxu0 0.0
    %3060 = vmatpush1.msra.mxu0 0.0
    %3061 = vmatprep.subr.mxu0 0.0
    %3062 = vmatpush1.msra.mxu0 0.0
    %3063 = vmatprep.subr.mxu0 0.0
    %3064 = vmatpush1.msra.mxu0 0.0
    %3065 = vmatprep.subr.mxu0 0.0
    %3066 = vmatpush1.msra.mxu0 0.0
    %3067 = vmatprep.subr.mxu0 0.0
    %3068 = vmatpush1.msra.mxu0 0.0
    %3069 = vmatprep.subr.mxu0 0.0
    %3070 = vmatpush1.msra.mxu0 0.0
    %3071 = vmatprep.subr.mxu0 0.0
    %3072 = vmatpush1.msra.mxu0 0.0
    %3073 = vmatprep.subr.mxu0 0.0
    %3074 = vmatpush1.msra.mxu0 0.0
    %3075 = vmatprep.subr.mxu0 0.0
    %3076 = vmatpush1.msra.mxu0 0.0
    %3077 = vmatprep.subr.mxu0 0.0
    %3078 = vmatpush1.msra.mxu0 0.0
    %3079 = vmatprep.subr.mxu0 0.0
    %3080 = vmatpush1.msra.mxu0 0.0
    %3081 = vmatprep.subr.mxu0 0.0
    %3082 = vmatpush1.msra.mxu0 0.0
    %3083 = vmatprep.subr.mxu0 0.0
    %3084 = vmatpush1.msra.mxu0 0.0
    %3085 = vmatprep.subr.mxu0 0.0
    %3086 = vmatpush1.msra.mxu0 %v1903
    %3087 = vmatprep.subr.mxu0 0.0
    %3088 = vmatpush2.msra.mxu0 0.0
    %3089 = vmatprep.subr.mxu0 0.0
    %3090 = vmatpush2.msra.mxu0 0.0
    %3091 = vmatprep.subr.mxu0 0.0
    %3092 = vmatpush2.msra.mxu0 0.0
    %3093 = vmatprep.subr.mxu0 0.0
    %3094 = vmatpush2.msra.mxu0 0.0
    %3095 = vmatprep.subr.mxu0 0.0
    %3096 = vmatpush2.msra.mxu0 0.0
    %3097 = vmatprep.subr.mxu0 0.0
    %3098 = vmatpush2.msra.mxu0 0.0
    %3099 = vmatprep.subr.mxu0 0.0
    %3100 = vmatpush2.msra.mxu0 0.0
    %3101 = vmatprep.subr.mxu0 0.0
    %3102 = vmatpush2.msra.mxu0 0.0
    %3103 = vmatprep.subr.mxu0 0.0
    %3104 = vmatpush2.msra.mxu0 0.0
    %3105 = vmatprep.subr.mxu0 0.0
    %3106 = vmatpush2.msra.mxu0 0.0
    %3107 = vmatprep.subr.mxu0 0.0
    %3108 = vmatpush2.msra.mxu0 0.0
    %3109 = vmatprep.subr.mxu0 0.0
    %3110 = vmatpush2.msra.mxu0 0.0
    %3111 = vmatprep.subr.mxu0 0.0
    %3112 = vmatpush2.msra.mxu0 0.0
    %3113 = vmatprep.subr.mxu0 0.0
    %3114 = vmatpush2.msra.mxu0 0.0
    %3115 = vmatprep.subr.mxu0 0.0
    %3116 = vmatpush2.msra.mxu0 0.0
    %3117 = vmatprep.subr.mxu0 0.0
    %3118 = vmatpush2.msra.mxu0 0.0
    %3119 = vmatprep.mubr.f32.mxu0 0.0
    %3120 = vmatmul.mubr.f32.gmra.mxu0 %v2910
    %v3121 = vpop.f32.mrf.mxu0
    %v3122 = vadd.f32 0.0, %v3121
    %v3123 = vpop.f32.mrf.mxu0
    %3124 = vdwg.mxu0
    %3125 = vmatprep.subr.mxu0 0.0
    %3126 = vmatpush1.msra.mxu0 0.0
    %3127 = vmatprep.subr.mxu0 0.0
    %3128 = vmatpush1.msra.mxu0 0.0
    %3129 = vmatprep.subr.mxu0 0.0
    %3130 = vmatpush1.msra.mxu0 0.0
    %3131 = vmatprep.subr.mxu0 0.0
    %3132 = vmatpush1.msra.mxu0 0.0
    %3133 = vmatprep.subr.mxu0 0.0
    %3134 = vmatpush1.msra.mxu0 0.0
    %3135 = vmatprep.subr.mxu0 0.0
    %3136 = vmatpush1.msra.mxu0 0.0
    %3137 = vmatprep.subr.mxu0 0.0
    %3138 = vmatpush1.msra.mxu0 0.0
    %3139 = vmatprep.subr.mxu0 0.0
    %3140 = vmatpush1.msra.mxu0 0.0
    %3141 = vmatprep.subr.mxu0 0.0
    %3142 = vmatpush1.msra.mxu0 0.0
    %3143 = vmatprep.subr.mxu0 0.0
    %3144 = vmatpush1.msra.mxu0 0.0
    %3145 = vmatprep.subr.mxu0 0.0
    %3146 = vmatpush1.msra.mxu0 0.0
    %3147 = vmatprep.subr.mxu0 0.0
    %3148 = vmatpush1.msra.mxu0 0.0
    %3149 = vmatprep.subr.mxu0 0.0
    %3150 = vmatpush1.msra.mxu0 0.0
    %3151 = vmatprep.subr.mxu0 0.0
    %3152 = vmatpush1.msra.mxu0 0.0
    %3153 = vmatprep.subr.mxu0 0.0
    %3154 = vmatpush1.msra.mxu0 0.0
    %3155 = vmatprep.subr.mxu0 0.0
    %3156 = vmatpush1.msra.mxu0 %v1903
    %3157 = vmatprep.subr.mxu0 0.0
    %3158 = vmatpush2.msra.mxu0 0.0
    %3159 = vmatprep.subr.mxu0 0.0
    %3160 = vmatpush2.msra.mxu0 0.0
    %3161 = vmatprep.subr.mxu0 0.0
    %3162 = vmatpush2.msra.mxu0 0.0
    %3163 = vmatprep.subr.mxu0 0.0
    %3164 = vmatpush2.msra.mxu0 0.0
    %3165 = vmatprep.subr.mxu0 0.0
    %3166 = vmatpush2.msra.mxu0 0.0
    %3167 = vmatprep.subr.mxu0 0.0
    %3168 = vmatpush2.msra.mxu0 0.0
    %3169 = vmatprep.subr.mxu0 0.0
    %3170 = vmatpush2.msra.mxu0 0.0
    %3171 = vmatprep.subr.mxu0 0.0
    %3172 = vmatpush2.msra.mxu0 0.0
    %3173 = vmatprep.subr.mxu0 0.0
    %3174 = vmatpush2.msra.mxu0 0.0
    %3175 = vmatprep.subr.mxu0 0.0
    %3176 = vmatpush2.msra.mxu0 0.0
    %3177 = vmatprep.subr.mxu0 0.0
    %3178 = vmatpush2.msra.mxu0 0.0
    %3179 = vmatprep.subr.mxu0 0.0
    %3180 = vmatpush2.msra.mxu0 0.0
    %3181 = vmatprep.subr.mxu0 0.0
    %3182 = vmatpush2.msra.mxu0 0.0
    %3183 = vmatprep.subr.mxu0 0.0
    %3184 = vmatpush2.msra.mxu0 0.0
    %3185 = vmatprep.subr.mxu0 0.0
    %3186 = vmatpush2.msra.mxu0 0.0
    %3187 = vmatprep.subr.mxu0 0.0
    %3188 = vmatpush2.msra.mxu0 0.0
    %3189 = vmatprep.mubr.f32.mxu0 0.0
    %3190 = vmatmul.mubr.f32.gmra.mxu0 %v2983
    %v3191 = vpop.f32.mrf.mxu0
    %v3192 = vadd.f32 0.0, %v3191
    %v3193 = vpop.f32.mrf.mxu0
    %3194 = vdwg.mxu0
    %v3196 = vsel %vm725, %v2833, 0
    %v3199 = vsel %vm725, %v2979, 0
    %3201 = vmatprep.subr.mxu0 0.0
    %3202 = vmatpush1.xpose.msra.mxu0 0.0
    %3203 = vmatprep.subr.mxu0 0.0
    %3204 = vmatpush1.xpose.msra.mxu0 0.0
    %3205 = vmatprep.subr.mxu0 0.0
    %3206 = vmatpush1.xpose.msra.mxu0 0.0
    %3207 = vmatprep.subr.mxu0 0.0
    %3208 = vmatpush1.xpose.msra.mxu0 0.0
    %3209 = vmatprep.subr.mxu0 0.0
    %3210 = vmatpush1.xpose.msra.mxu0 0.0
    %3211 = vmatprep.subr.mxu0 0.0
    %3212 = vmatpush1.xpose.msra.mxu0 0.0
    %3213 = vmatprep.subr.mxu0 0.0
    %3214 = vmatpush1.xpose.msra.mxu0 0.0
    %3215 = vmatprep.subr.mxu0 0.0
    %3216 = vmatpush1.xpose.msra.mxu0 0.0
    %3217 = vmatprep.subr.mxu0 0.0
    %3218 = vmatpush1.xpose.msra.mxu0 0.0
    %3219 = vmatprep.subr.mxu0 0.0
    %3220 = vmatpush1.xpose.msra.mxu0 0.0
    %3221 = vmatprep.subr.mxu0 0.0
    %3222 = vmatpush1.xpose.msra.mxu0 0.0
    %3223 = vmatprep.subr.mxu0 0.0
    %3224 = vmatpush1.xpose.msra.mxu0 0.0
    %3225 = vmatprep.subr.mxu0 0.0
    %3226 = vmatpush1.xpose.msra.mxu0 0.0
    %3227 = vmatprep.subr.mxu0 0.0
    %3228 = vmatpush1.xpose.msra.mxu0 0.0
    %3229 = vmatprep.subr.mxu0 0.0
    %3230 = vmatpush1.xpose.msra.mxu0 0.0
    %3231 = vmatprep.subr.mxu0 0.0
    %3232 = vmatpush1.xpose.msra.mxu0 %v3199
    %3233 = vmatprep.subr.mxu0 0.0
    %3234 = vmatpush2.xpose.msra.mxu0 0.0
    %3235 = vmatprep.subr.mxu0 0.0
    %3236 = vmatpush2.xpose.msra.mxu0 0.0
    %3237 = vmatprep.subr.mxu0 0.0
    %3238 = vmatpush2.xpose.msra.mxu0 0.0
    %3239 = vmatprep.subr.mxu0 0.0
    %3240 = vmatpush2.xpose.msra.mxu0 0.0
    %3241 = vmatprep.subr.mxu0 0.0
    %3242 = vmatpush2.xpose.msra.mxu0 0.0
    %3243 = vmatprep.subr.mxu0 0.0
    %3244 = vmatpush2.xpose.msra.mxu0 0.0
    %3245 = vmatprep.subr.mxu0 0.0
    %3246 = vmatpush2.xpose.msra.mxu0 0.0
    %3247 = vmatprep.subr.mxu0 0.0
    %3248 = vmatpush2.xpose.msra.mxu0 0.0
    %3249 = vmatprep.subr.mxu0 0.0
    %3250 = vmatpush2.xpose.msra.mxu0 0.0
    %3251 = vmatprep.subr.mxu0 0.0
    %3252 = vmatpush2.xpose.msra.mxu0 0.0
    %3253 = vmatprep.subr.mxu0 0.0
    %3254 = vmatpush2.xpose.msra.mxu0 0.0
    %3255 = vmatprep.subr.mxu0 0.0
    %3256 = vmatpush2.xpose.msra.mxu0 0.0
    %3257 = vmatprep.subr.mxu0 0.0
    %3258 = vmatpush2.xpose.msra.mxu0 0.0
    %3259 = vmatprep.subr.mxu0 0.0
    %3260 = vmatpush2.xpose.msra.mxu0 0.0
    %3261 = vmatprep.subr.mxu0 0.0
    %3262 = vmatpush2.xpose.msra.mxu0 0.0
    %3263 = vmatprep.subr.mxu0 0.0
    %3264 = vmatpush2.xpose.msra.mxu0 0.0
    %3265 = vmatprep.mubr.f32.mxu0 0.0
    %3266 = vmatmul.mubr.f32.gmra.mxu0 %v3196
    %v3267 = vpop.f32.mrf.mxu0
    %v3268 = vadd.f32 0.0, %v3267
    %v3269 = vpop.f32.mrf.mxu0
    %3270 = vdwg.mxu0
    %v3272 = vsel %vm725, %v2906, 0
    %v3275 = vsel %vm725, %v3052, 0
    %3277 = vmatprep.subr.mxu0 0.0
    %3278 = vmatpush1.xpose.msra.mxu0 0.0
    %3279 = vmatprep.subr.mxu0 0.0
    %3280 = vmatpush1.xpose.msra.mxu0 0.0
    %3281 = vmatprep.subr.mxu0 0.0
    %3282 = vmatpush1.xpose.msra.mxu0 0.0
    %3283 = vmatprep.subr.mxu0 0.0
    %3284 = vmatpush1.xpose.msra.mxu0 0.0
    %3285 = vmatprep.subr.mxu0 0.0
    %3286 = vmatpush1.xpose.msra.mxu0 0.0
    %3287 = vmatprep.subr.mxu0 0.0
    %3288 = vmatpush1.xpose.msra.mxu0 0.0
    %3289 = vmatprep.subr.mxu0 0.0
    %3290 = vmatpush1.xpose.msra.mxu0 0.0
    %3291 = vmatprep.subr.mxu0 0.0
    %3292 = vmatpush1.xpose.msra.mxu0 0.0
    %3293 = vmatprep.subr.mxu0 0.0
    %3294 = vmatpush1.xpose.msra.mxu0 0.0
    %3295 = vmatprep.subr.mxu0 0.0
    %3296 = vmatpush1.xpose.msra.mxu0 0.0
    %3297 = vmatprep.subr.mxu0 0.0
    %3298 = vmatpush1.xpose.msra.mxu0 0.0
    %3299 = vmatprep.subr.mxu0 0.0
    %3300 = vmatpush1.xpose.msra.mxu0 0.0
    %3301 = vmatprep.subr.mxu0 0.0
    %3302 = vmatpush1.xpose.msra.mxu0 0.0
    %3303 = vmatprep.subr.mxu0 0.0
    %3304 = vmatpush1.xpose.msra.mxu0 0.0
    %3305 = vmatprep.subr.mxu0 0.0
    %3306 = vmatpush1.xpose.msra.mxu0 0.0
    %3307 = vmatprep.subr.mxu0 0.0
    %3308 = vmatpush1.xpose.msra.mxu0 %v3275
    %3309 = vmatprep.subr.mxu0 0.0
    %3310 = vmatpush2.xpose.msra.mxu0 0.0
    %3311 = vmatprep.subr.mxu0 0.0
    %3312 = vmatpush2.xpose.msra.mxu0 0.0
    %3313 = vmatprep.subr.mxu0 0.0
    %3314 = vmatpush2.xpose.msra.mxu0 0.0
    %3315 = vmatprep.subr.mxu0 0.0
    %3316 = vmatpush2.xpose.msra.mxu0 0.0
    %3317 = vmatprep.subr.mxu0 0.0
    %3318 = vmatpush2.xpose.msra.mxu0 0.0
    %3319 = vmatprep.subr.mxu0 0.0
    %3320 = vmatpush2.xpose.msra.mxu0 0.0
    %3321 = vmatprep.subr.mxu0 0.0
    %3322 = vmatpush2.xpose.msra.mxu0 0.0
    %3323 = vmatprep.subr.mxu0 0.0
    %3324 = vmatpush2.xpose.msra.mxu0 0.0
    %3325 = vmatprep.subr.mxu0 0.0
    %3326 = vmatpush2.xpose.msra.mxu0 0.0
    %3327 = vmatprep.subr.mxu0 0.0
    %3328 = vmatpush2.xpose.msra.mxu0 0.0
    %3329 = vmatprep.subr.mxu0 0.0
    %3330 = vmatpush2.xpose.msra.mxu0 0.0
    %3331 = vmatprep.subr.mxu0 0.0
    %3332 = vmatpush2.xpose.msra.mxu0 0.0
    %3333 = vmatprep.subr.mxu0 0.0
    %3334 = vmatpush2.xpose.msra.mxu0 0.0
    %3335 = vmatprep.subr.mxu0 0.0
    %3336 = vmatpush2.xpose.msra.mxu0 0.0
    %3337 = vmatprep.subr.mxu0 0.0
    %3338 = vmatpush2.xpose.msra.mxu0 0.0
    %3339 = vmatprep.subr.mxu0 0.0
    %3340 = vmatpush2.xpose.msra.mxu0 0.0
    %3341 = vmatprep.mubr.f32.mxu0 0.0
    %3342 = vmatmul.mubr.f32.gmra.mxu0 %v3272
    %v3343 = vpop.f32.mrf.mxu0
    %v3344 = vadd.f32 0.0, %v3343
    %v3345 = vpop.f32.mrf.mxu0
    %3346 = vdwg.mxu0
    %v3347 = vmul.f32 %v3268, 0.57735026
    %v3348 = vmul.f32 %v3344, 0.57735026
    %vm3349 = vcmask 28672
    %v3350 = vsel %vm3349, %v3347, -inf
    %3351 = vmax.xlane.f32.xlu0 %v3350
    %v3352 = vpop.xlane.xlu0 %3351
    %v3353 = vsel %vm3349, %v3348, -inf
    %3354 = vmax.xlane.f32.xlu0 %v3353
    %v3355 = vpop.xlane.xlu0 %3354
    %v3356 = vsub.f32 %v3347, %v3352
    %v3357 = vsub.f32 %v3348, %v3355
    %v3358 = vmul.f32 %v3356, 1.442695
    %v3359 = vpow.pop %v3358
    %v3360 = vmul.f32 %v3357, 1.442695
    %v3361 = vpow.pop %v3360
    %v3362 = vsel %vm3349, %v3359, 0.0
    %3363 = vadd.xlane.f32.xlu0 %v3362
    %v3364 = vpop.xlane.xlu0 %3363
    %v3365 = vsel %vm3349, %v3361, 0.0
    %3366 = vadd.xlane.f32.xlu0 %v3365
    %v3367 = vpop.xlane.xlu0 %3366
    %v3368 = vrcp.pop %v3364
    %v3369 = vrcp.pop %v3367
    %v3370 = vmul.f32 %v3359, %v3368
    %v3371 = vmul.f32 %v3361, %v3369
    %v3373 = vsel %vm137, %v3370, 0
    %v3376 = vsel %vm141, %v3122, 0
    %3378 = vmatprep.subr.mxu0 0.0
    %3379 = vmatpush1.msra.mxu0 0.0
    %3380 = vmatprep.subr.mxu0 0.0
    %3381 = vmatpush1.msra.mxu0 0.0
    %3382 = vmatprep.subr.mxu0 0.0
    %3383 = vmatpush1.msra.mxu0 0.0
    %3384 = vmatprep.subr.mxu0 0.0
    %3385 = vmatpush1.msra.mxu0 0.0
    %3386 = vmatprep.subr.mxu0 0.0
    %3387 = vmatpush1.msra.mxu0 0.0
    %3388 = vmatprep.subr.mxu0 0.0
    %3389 = vmatpush1.msra.mxu0 0.0
    %3390 = vmatprep.subr.mxu0 0.0
    %3391 = vmatpush1.msra.mxu0 0.0
    %3392 = vmatprep.subr.mxu0 0.0
    %3393 = vmatpush1.msra.mxu0 0.0
    %3394 = vmatprep.subr.mxu0 0.0
    %3395 = vmatpush1.msra.mxu0 0.0
    %3396 = vmatprep.subr.mxu0 0.0
    %3397 = vmatpush1.msra.mxu0 0.0
    %3398 = vmatprep.subr.mxu0 0.0
    %3399 = vmatpush1.msra.mxu0 0.0
    %3400 = vmatprep.subr.mxu0 0.0
    %3401 = vmatpush1.msra.mxu0 0.0
    %3402 = vmatprep.subr.mxu0 0.0
    %3403 = vmatpush1.msra.mxu0 0.0
    %3404 = vmatprep.subr.mxu0 0.0
    %3405 = vmatpush1.msra.mxu0 0.0
    %3406 = vmatprep.subr.mxu0 0.0
    %3407 = vmatpush1.msra.mxu0 0.0
    %3408 = vmatprep.subr.mxu0 0.0
    %3409 = vmatpush1.msra.mxu0 %v3376
    %3410 = vmatprep.subr.mxu0 0.0
    %3411 = vmatpush2.msra.mxu0 0.0
    %3412 = vmatprep.subr.mxu0 0.0
    %3413 = vmatpush2.msra.mxu0 0.0
    %3414 = vmatprep.subr.mxu0 0.0
    %3415 = vmatpush2.msra.mxu0 0.0
    %3416 = vmatprep.subr.mxu0 0.0
    %3417 = vmatpush2.msra.mxu0 0.0
    %3418 = vmatprep.subr.mxu0 0.0
    %3419 = vmatpush2.msra.mxu0 0.0
    %3420 = vmatprep.subr.mxu0 0.0
    %3421 = vmatpush2.msra.mxu0 0.0
    %3422 = vmatprep.subr.mxu0 0.0
    %3423 = vmatpush2.msra.mxu0 0.0
    %3424 = vmatprep.subr.mxu0 0.0
    %3425 = vmatpush2.msra.mxu0 0.0
    %3426 = vmatprep.subr.mxu0 0.0
    %3427 = vmatpush2.msra.mxu0 0.0
    %3428 = vmatprep.subr.mxu0 0.0
    %3429 = vmatpush2.msra.mxu0 0.0
    %3430 = vmatprep.subr.mxu0 0.0
    %3431 = vmatpush2.msra.mxu0 0.0
    %3432 = vmatprep.subr.mxu0 0.0
    %3433 = vmatpush2.msra.mxu0 0.0
    %3434 = vmatprep.subr.mxu0 0.0
    %3435 = vmatpush2.msra.mxu0 0.0
    %3436 = vmatprep.subr.mxu0 0.0
    %3437 = vmatpush2.msra.mxu0 0.0
    %3438 = vmatprep.subr.mxu0 0.0
    %3439 = vmatpush2.msra.mxu0 0.0
    %3440 = vmatprep.subr.mxu0 0.0
    %3441 = vmatpush2.msra.mxu0 0.0
    %3442 = vmatprep.mubr.f32.mxu0 0.0
    %3443 = vmatmul.mubr.f32.gmra.mxu0 %v3373
    %v3444 = vpop.f32.mrf.mxu0
    %v3445 = vadd.f32 0.0, %v3444
    %v3446 = vpop.f32.mrf.mxu0
    %3447 = vdwg.mxu0
    %v3449 = vsel %vm137, %v3371, 0
    %v3452 = vsel %vm141, %v3192, 0
    %3454 = vmatprep.subr.mxu0 0.0
    %3455 = vmatpush1.msra.mxu0 0.0
    %3456 = vmatprep.subr.mxu0 0.0
    %3457 = vmatpush1.msra.mxu0 0.0
    %3458 = vmatprep.subr.mxu0 0.0
    %3459 = vmatpush1.msra.mxu0 0.0
    %3460 = vmatprep.subr.mxu0 0.0
    %3461 = vmatpush1.msra.mxu0 0.0
    %3462 = vmatprep.subr.mxu0 0.0
    %3463 = vmatpush1.msra.mxu0 0.0
    %3464 = vmatprep.subr.mxu0 0.0
    %3465 = vmatpush1.msra.mxu0 0.0
    %3466 = vmatprep.subr.mxu0 0.0
    %3467 = vmatpush1.msra.mxu0 0.0
    %3468 = vmatprep.subr.mxu0 0.0
    %3469 = vmatpush1.msra.mxu0 0.0
    %3470 = vmatprep.subr.mxu0 0.0
    %3471 = vmatpush1.msra.mxu0 0.0
    %3472 = vmatprep.subr.mxu0 0.0
    %3473 = vmatpush1.msra.mxu0 0.0
    %3474 = vmatprep.subr.mxu0 0.0
    %3475 = vmatpush1.msra.mxu0 0.0
    %3476 = vmatprep.subr.mxu0 0.0
    %3477 = vmatpush1.msra.mxu0 0.0
    %3478 = vmatprep.subr.mxu0 0.0
    %3479 = vmatpush1.msra.mxu0 0.0
    %3480 = vmatprep.subr.mxu0 0.0
    %3481 = vmatpush1.msra.mxu0 0.0
    %3482 = vmatprep.subr.mxu0 0.0
    %3483 = vmatpush1.msra.mxu0 0.0
    %3484 = vmatprep.subr.mxu0 0.0
    %3485 = vmatpush1.msra.mxu0 %v3452
    %3486 = vmatprep.subr.mxu0 0.0
    %3487 = vmatpush2.msra.mxu0 0.0
    %3488 = vmatprep.subr.mxu0 0.0
    %3489 = vmatpush2.msra.mxu0 0.0
    %3490 = vmatprep.subr.mxu0 0.0
    %3491 = vmatpush2.msra.mxu0 0.0
    %3492 = vmatprep.subr.mxu0 0.0
    %3493 = vmatpush2.msra.mxu0 0.0
    %3494 = vmatprep.subr.mxu0 0.0
    %3495 = vmatpush2.msra.mxu0 0.0
    %3496 = vmatprep.subr.mxu0 0.0
    %3497 = vmatpush2.msra.mxu0 0.0
    %3498 = vmatprep.subr.mxu0 0.0
    %3499 = vmatpush2.msra.mxu0 0.0
    %3500 = vmatprep.subr.mxu0 0.0
    %3501 = vmatpush2.msra.mxu0 0.0
    %3502 = vmatprep.subr.mxu0 0.0
    %3503 = vmatpush2.msra.mxu0 0.0
    %3504 = vmatprep.subr.mxu0 0.0
    %3505 = vmatpush2.msra.mxu0 0.0
    %3506 = vmatprep.subr.mxu0 0.0
    %3507 = vmatpush2.msra.mxu0 0.0
    %3508 = vmatprep.subr.mxu0 0.0
    %3509 = vmatpush2.msra.mxu0 0.0
    %3510 = vmatprep.subr.mxu0 0.0
    %3511 = vmatpush2.msra.mxu0 0.0
    %3512 = vmatprep.subr.mxu0 0.0
    %3513 = vmatpush2.msra.mxu0 0.0
    %3514 = vmatprep.subr.mxu0 0.0
    %3515 = vmatpush2.msra.mxu0 0.0
    %3516 = vmatprep.subr.mxu0 0.0
    %3517 = vmatpush2.msra.mxu0 0.0
    %3518 = vmatprep.mubr.f32.mxu0 0.0
    %3519 = vmatmul.mubr.f32.gmra.mxu0 %v3449
    %v3520 = vpop.f32.mrf.mxu0
    %v3521 = vadd.f32 0.0, %v3520
    %v3522 = vpop.f32.mrf.mxu0
    %3523 = vdwg.mxu0
    %3524 = vrot.lane.b32.xlu0 %v2833, 125
    %v3525 = vpop.permute.xlu0 %3524
    %3526 = vrot.lane.b32.xlu0 %v2979, 125
    %v3527 = vpop.permute.xlu0 %3526
    %v3528 = vsel %vm725, %v3525, 0
    %v3530 = vsel %vm725, %v3527, 0
    %3532 = vmatprep.subr.mxu0 0.0
    %3533 = vmatpush1.xpose.msra.mxu0 0.0
    %3534 = vmatprep.subr.mxu0 0.0
    %3535 = vmatpush1.xpose.msra.mxu0 0.0
    %3536 = vmatprep.subr.mxu0 0.0
    %3537 = vmatpush1.xpose.msra.mxu0 0.0
    %3538 = vmatprep.subr.mxu0 0.0
    %3539 = vmatpush1.xpose.msra.mxu0 0.0
    %3540 = vmatprep.subr.mxu0 0.0
    %3541 = vmatpush1.xpose.msra.mxu0 0.0
    %3542 = vmatprep.subr.mxu0 0.0
    %3543 = vmatpush1.xpose.msra.mxu0 0.0
    %3544 = vmatprep.subr.mxu0 0.0
    %3545 = vmatpush1.xpose.msra.mxu0 0.0
    %3546 = vmatprep.subr.mxu0 0.0
    %3547 = vmatpush1.xpose.msra.mxu0 0.0
    %3548 = vmatprep.subr.mxu0 0.0
    %3549 = vmatpush1.xpose.msra.mxu0 0.0
    %3550 = vmatprep.subr.mxu0 0.0
    %3551 = vmatpush1.xpose.msra.mxu0 0.0
    %3552 = vmatprep.subr.mxu0 0.0
    %3553 = vmatpush1.xpose.msra.mxu0 0.0
    %3554 = vmatprep.subr.mxu0 0.0
    %3555 = vmatpush1.xpose.msra.mxu0 0.0
    %3556 = vmatprep.subr.mxu0 0.0
    %3557 = vmatpush1.xpose.msra.mxu0 0.0
    %3558 = vmatprep.subr.mxu0 0.0
    %3559 = vmatpush1.xpose.msra.mxu0 0.0
    %3560 = vmatprep.subr.mxu0 0.0
    %3561 = vmatpush1.xpose.msra.mxu0 0.0
    %3562 = vmatprep.subr.mxu0 0.0
    %3563 = vmatpush1.xpose.msra.mxu0 %v3530
    %3564 = vmatprep.subr.mxu0 0.0
    %3565 = vmatpush2.xpose.msra.mxu0 0.0
    %3566 = vmatprep.subr.mxu0 0.0
    %3567 = vmatpush2.xpose.msra.mxu0 0.0
    %3568 = vmatprep.subr.mxu0 0.0
    %3569 = vmatpush2.xpose.msra.mxu0 0.0
    %3570 = vmatprep.subr.mxu0 0.0
    %3571 = vmatpush2.xpose.msra.mxu0 0.0
    %3572 = vmatprep.subr.mxu0 0.0
    %3573 = vmatpush2.xpose.msra.mxu0 0.0
    %3574 = vmatprep.subr.mxu0 0.0
    %3575 = vmatpush2.xpose.msra.mxu0 0.0
    %3576 = vmatprep.subr.mxu0 0.0
    %3577 = vmatpush2.xpose.msra.mxu0 0.0
    %3578 = vmatprep.subr.mxu0 0.0
    %3579 = vmatpush2.xpose.msra.mxu0 0.0
    %3580 = vmatprep.subr.mxu0 0.0
    %3581 = vmatpush2.xpose.msra.mxu0 0.0
    %3582 = vmatprep.subr.mxu0 0.0
    %3583 = vmatpush2.xpose.msra.mxu0 0.0
    %3584 = vmatprep.subr.mxu0 0.0
    %3585 = vmatpush2.xpose.msra.mxu0 0.0
    %3586 = vmatprep.subr.mxu0 0.0
    %3587 = vmatpush2.xpose.msra.mxu0 0.0
    %3588 = vmatprep.subr.mxu0 0.0
    %3589 = vmatpush2.xpose.msra.mxu0 0.0
    %3590 = vmatprep.subr.mxu0 0.0
    %3591 = vmatpush2.xpose.msra.mxu0 0.0
    %3592 = vmatprep.subr.mxu0 0.0
    %3593 = vmatpush2.xpose.msra.mxu0 0.0
    %3594 = vmatprep.subr.mxu0 0.0
    %3595 = vmatpush2.xpose.msra.mxu0 0.0
    %3596 = vmatprep.mubr.f32.mxu0 0.0
    %3597 = vmatmul.mubr.f32.gmra.mxu0 %v3528
    %v3598 = vpop.f32.mrf.mxu0
    %v3599 = vadd.f32 0.0, %v3598
    %v3600 = vpop.f32.mrf.mxu0
    %3601 = vdwg.mxu0
    %3602 = vrot.lane.b32.xlu0 %v2906, 125
    %v3603 = vpop.permute.xlu0 %3602
    %3604 = vrot.lane.b32.xlu0 %v3052, 125
    %v3605 = vpop.permute.xlu0 %3604
    %v3606 = vsel %vm725, %v3603, 0
    %v3608 = vsel %vm725, %v3605, 0
    %3610 = vmatprep.subr.mxu0 0.0
    %3611 = vmatpush1.xpose.msra.mxu0 0.0
    %3612 = vmatprep.subr.mxu0 0.0
    %3613 = vmatpush1.xpose.msra.mxu0 0.0
    %3614 = vmatprep.subr.mxu0 0.0
    %3615 = vmatpush1.xpose.msra.mxu0 0.0
    %3616 = vmatprep.subr.mxu0 0.0
    %3617 = vmatpush1.xpose.msra.mxu0 0.0
    %3618 = vmatprep.subr.mxu0 0.0
    %3619 = vmatpush1.xpose.msra.mxu0 0.0
    %3620 = vmatprep.subr.mxu0 0.0
    %3621 = vmatpush1.xpose.msra.mxu0 0.0
    %3622 = vmatprep.subr.mxu0 0.0
    %3623 = vmatpush1.xpose.msra.mxu0 0.0
    %3624 = vmatprep.subr.mxu0 0.0
    %3625 = vmatpush1.xpose.msra.mxu0 0.0
    %3626 = vmatprep.subr.mxu0 0.0
    %3627 = vmatpush1.xpose.msra.mxu0 0.0
    %3628 = vmatprep.subr.mxu0 0.0
    %3629 = vmatpush1.xpose.msra.mxu0 0.0
    %3630 = vmatprep.subr.mxu0 0.0
    %3631 = vmatpush1.xpose.msra.mxu0 0.0
    %3632 = vmatprep.subr.mxu0 0.0
    %3633 = vmatpush1.xpose.msra.mxu0 0.0
    %3634 = vmatprep.subr.mxu0 0.0
    %3635 = vmatpush1.xpose.msra.mxu0 0.0
    %3636 = vmatprep.subr.mxu0 0.0
    %3637 = vmatpush1.xpose.msra.mxu0 0.0
    %3638 = vmatprep.subr.mxu0 0.0
    %3639 = vmatpush1.xpose.msra.mxu0 0.0
    %3640 = vmatprep.subr.mxu0 0.0
    %3641 = vmatpush1.xpose.msra.mxu0 %v3608
    %3642 = vmatprep.subr.mxu0 0.0
    %3643 = vmatpush2.xpose.msra.mxu0 0.0
    %3644 = vmatprep.subr.mxu0 0.0
    %3645 = vmatpush2.xpose.msra.mxu0 0.0
    %3646 = vmatprep.subr.mxu0 0.0
    %3647 = vmatpush2.xpose.msra.mxu0 0.0
    %3648 = vmatprep.subr.mxu0 0.0
    %3649 = vmatpush2.xpose.msra.mxu0 0.0
    %3650 = vmatprep.subr.mxu0 0.0
    %3651 = vmatpush2.xpose.msra.mxu0 0.0
    %3652 = vmatprep.subr.mxu0 0.0
    %3653 = vmatpush2.xpose.msra.mxu0 0.0
    %3654 = vmatprep.subr.mxu0 0.0
    %3655 = vmatpush2.xpose.msra.mxu0 0.0
    %3656 = vmatprep.subr.mxu0 0.0
    %3657 = vmatpush2.xpose.msra.mxu0 0.0
    %3658 = vmatprep.subr.mxu0 0.0
    %3659 = vmatpush2.xpose.msra.mxu0 0.0
    %3660 = vmatprep.subr.mxu0 0.0
    %3661 = vmatpush2.xpose.msra.mxu0 0.0
    %3662 = vmatprep.subr.mxu0 0.0
    %3663 = vmatpush2.xpose.msra.mxu0 0.0
    %3664 = vmatprep.subr.mxu0 0.0
    %3665 = vmatpush2.xpose.msra.mxu0 0.0
    %3666 = vmatprep.subr.mxu0 0.0
    %3667 = vmatpush2.xpose.msra.mxu0 0.0
    %3668 = vmatprep.subr.mxu0 0.0
    %3669 = vmatpush2.xpose.msra.mxu0 0.0
    %3670 = vmatprep.subr.mxu0 0.0
    %3671 = vmatpush2.xpose.msra.mxu0 0.0
    %3672 = vmatprep.subr.mxu0 0.0
    %3673 = vmatpush2.xpose.msra.mxu0 0.0
    %3674 = vmatprep.mubr.f32.mxu0 0.0
    %3675 = vmatmul.mubr.f32.gmra.mxu0 %v3606
    %v3676 = vpop.f32.mrf.mxu0
    %v3677 = vadd.f32 0.0, %v3676
    %v3678 = vpop.f32.mrf.mxu0
    %3679 = vdwg.mxu0
    %v3680 = vmul.f32 %v3599, 0.57735026
    %v3681 = vmul.f32 %v3677, 0.57735026
    %v3682 = vsel %vm3349, %v3680, -inf
    %3683 = vmax.xlane.f32.xlu0 %v3682
    %v3684 = vpop.xlane.xlu0 %3683
    %v3685 = vsel %vm3349, %v3681, -inf
    %3686 = vmax.xlane.f32.xlu0 %v3685
    %v3687 = vpop.xlane.xlu0 %3686
    %v3688 = vsub.f32 %v3680, %v3684
    %v3689 = vsub.f32 %v3681, %v3687
    %v3690 = vmul.f32 %v3688, 1.442695
    %v3691 = vpow.pop %v3690
    %v3692 = vmul.f32 %v3689, 1.442695
    %v3693 = vpow.pop %v3692
    %v3694 = vsel %vm3349, %v3691, 0.0
    %3695 = vadd.xlane.f32.xlu0 %v3694
    %v3696 = vpop.xlane.xlu0 %3695
    %v3697 = vsel %vm3349, %v3693, 0.0
    %3698 = vadd.xlane.f32.xlu0 %v3697
    %v3699 = vpop.xlane.xlu0 %3698
    %v3700 = vrcp.pop %v3696
    %v3701 = vrcp.pop %v3699
    %v3702 = vmul.f32 %v3691, %v3700
    %v3703 = vmul.f32 %v3693, %v3701
    %3704 = vrot.lane.b32.xlu0 %v3122, 125
    %v3705 = vpop.permute.xlu0 %3704
    %v3707 = vsel %vm137, %v3702, 0
    %v3709 = vsel %vm141, %v3705, 0
    %3711 = vmatprep.subr.mxu0 0.0
    %3712 = vmatpush1.msra.mxu0 0.0
    %3713 = vmatprep.subr.mxu0 0.0
    %3714 = vmatpush1.msra.mxu0 0.0
    %3715 = vmatprep.subr.mxu0 0.0
    %3716 = vmatpush1.msra.mxu0 0.0
    %3717 = vmatprep.subr.mxu0 0.0
    %3718 = vmatpush1.msra.mxu0 0.0
    %3719 = vmatprep.subr.mxu0 0.0
    %3720 = vmatpush1.msra.mxu0 0.0
    %3721 = vmatprep.subr.mxu0 0.0
    %3722 = vmatpush1.msra.mxu0 0.0
    %3723 = vmatprep.subr.mxu0 0.0
    %3724 = vmatpush1.msra.mxu0 0.0
    %3725 = vmatprep.subr.mxu0 0.0
    %3726 = vmatpush1.msra.mxu0 0.0
    %3727 = vmatprep.subr.mxu0 0.0
    %3728 = vmatpush1.msra.mxu0 0.0
    %3729 = vmatprep.subr.mxu0 0.0
    %3730 = vmatpush1.msra.mxu0 0.0
    %3731 = vmatprep.subr.mxu0 0.0
    %3732 = vmatpush1.msra.mxu0 0.0
    %3733 = vmatprep.subr.mxu0 0.0
    %3734 = vmatpush1.msra.mxu0 0.0
    %3735 = vmatprep.subr.mxu0 0.0
    %3736 = vmatpush1.msra.mxu0 0.0
    %3737 = vmatprep.subr.mxu0 0.0
    %3738 = vmatpush1.msra.mxu0 0.0
    %3739 = vmatprep.subr.mxu0 0.0
    %3740 = vmatpush1.msra.mxu0 0.0
    %3741 = vmatprep.subr.mxu0 0.0
    %3742 = vmatpush1.msra.mxu0 %v3709
    %3743 = vmatprep.subr.mxu0 0.0
    %3744 = vmatpush2.msra.mxu0 0.0
    %3745 = vmatprep.subr.mxu0 0.0
    %3746 = vmatpush2.msra.mxu0 0.0
    %3747 = vmatprep.subr.mxu0 0.0
    %3748 = vmatpush2.msra.mxu0 0.0
    %3749 = vmatprep.subr.mxu0 0.0
    %3750 = vmatpush2.msra.mxu0 0.0
    %3751 = vmatprep.subr.mxu0 0.0
    %3752 = vmatpush2.msra.mxu0 0.0
    %3753 = vmatprep.subr.mxu0 0.0
    %3754 = vmatpush2.msra.mxu0 0.0
    %3755 = vmatprep.subr.mxu0 0.0
    %3756 = vmatpush2.msra.mxu0 0.0
    %3757 = vmatprep.subr.mxu0 0.0
    %3758 = vmatpush2.msra.mxu0 0.0
    %3759 = vmatprep.subr.mxu0 0.0
    %3760 = vmatpush2.msra.mxu0 0.0
    %3761 = vmatprep.subr.mxu0 0.0
    %3762 = vmatpush2.msra.mxu0 0.0
    %3763 = vmatprep.subr.mxu0 0.0
    %3764 = vmatpush2.msra.mxu0 0.0
    %3765 = vmatprep.subr.mxu0 0.0
    %3766 = vmatpush2.msra.mxu0 0.0
    %3767 = vmatprep.subr.mxu0 0.0
    %3768 = vmatpush2.msra.mxu0 0.0
    %3769 = vmatprep.subr.mxu0 0.0
    %3770 = vmatpush2.msra.mxu0 0.0
    %3771 = vmatprep.subr.mxu0 0.0
    %3772 = vmatpush2.msra.mxu0 0.0
    %3773 = vmatprep.subr.mxu0 0.0
    %3774 = vmatpush2.msra.mxu0 0.0
    %3775 = vmatprep.mubr.f32.mxu0 0.0
    %3776 = vmatmul.mubr.f32.gmra.mxu0 %v3707
    %v3777 = vpop.f32.mrf.mxu0
    %v3778 = vadd.f32 0.0, %v3777
    %v3779 = vpop.f32.mrf.mxu0
    %3780 = vdwg.mxu0
    %3781 = vrot.lane.b32.xlu0 %v3192, 125
    %v3782 = vpop.permute.xlu0 %3781
    %v3784 = vsel %vm137, %v3703, 0
    %v3786 = vsel %vm141, %v3782, 0
    %3788 = vmatprep.subr.mxu0 0.0
    %3789 = vmatpush1.msra.mxu0 0.0
    %3790 = vmatprep.subr.mxu0 0.0
    %3791 = vmatpush1.msra.mxu0 0.0
    %3792 = vmatprep.subr.mxu0 0.0
    %3793 = vmatpush1.msra.mxu0 0.0
    %3794 = vmatprep.subr.mxu0 0.0
    %3795 = vmatpush1.msra.mxu0 0.0
    %3796 = vmatprep.subr.mxu0 0.0
    %3797 = vmatpush1.msra.mxu0 0.0
    %3798 = vmatprep.subr.mxu0 0.0
    %3799 = vmatpush1.msra.mxu0 0.0
    %3800 = vmatprep.subr.mxu0 0.0
    %3801 = vmatpush1.msra.mxu0 0.0
    %3802 = vmatprep.subr.mxu0 0.0
    %3803 = vmatpush1.msra.mxu0 0.0
    %3804 = vmatprep.subr.mxu0 0.0
    %3805 = vmatpush1.msra.mxu0 0.0
    %3806 = vmatprep.subr.mxu0 0.0
    %3807 = vmatpush1.msra.mxu0 0.0
    %3808 = vmatprep.subr.mxu0 0.0
    %3809 = vmatpush1.msra.mxu0 0.0
    %3810 = vmatprep.subr.mxu0 0.0
    %3811 = vmatpush1.msra.mxu0 0.0
    %3812 = vmatprep.subr.mxu0 0.0
    %3813 = vmatpush1.msra.mxu0 0.0
    %3814 = vmatprep.subr.mxu0 0.0
    %3815 = vmatpush1.msra.mxu0 0.0
    %3816 = vmatprep.subr.mxu0 0.0
    %3817 = vmatpush1.msra.mxu0 0.0
    %3818 = vmatprep.subr.mxu0 0.0
    %3819 = vmatpush1.msra.mxu0 %v3786
    %3820 = vmatprep.subr.mxu0 0.0
    %3821 = vmatpush2.msra.mxu0 0.0
    %3822 = vmatprep.subr.mxu0 0.0
    %3823 = vmatpush2.msra.mxu0 0.0
    %3824 = vmatprep.subr.mxu0 0.0
    %3825 = vmatpush2.msra.mxu0 0.0
    %3826 = vmatprep.subr.mxu0 0.0
    %3827 = vmatpush2.msra.mxu0 0.0
    %3828 = vmatprep.subr.mxu0 0.0
    %3829 = vmatpush2.msra.mxu0 0.0
    %3830 = vmatprep.subr.mxu0 0.0
    %3831 = vmatpush2.msra.mxu0 0.0
    %3832 = vmatprep.subr.mxu0 0.0
    %3833 = vmatpush2.msra.mxu0 0.0
    %3834 = vmatprep.subr.mxu0 0.0
    %3835 = vmatpush2.msra.mxu0 0.0
    %3836 = vmatprep.subr.mxu0 0.0
    %3837 = vmatpush2.msra.mxu0 0.0
    %3838 = vmatprep.subr.mxu0 0.0
    %3839 = vmatpush2.msra.mxu0 0.0
    %3840 = vmatprep.subr.mxu0 0.0
    %3841 = vmatpush2.msra.mxu0 0.0
    %3842 = vmatprep.subr.mxu0 0.0
    %3843 = vmatpush2.msra.mxu0 0.0
    %3844 = vmatprep.subr.mxu0 0.0
    %3845 = vmatpush2.msra.mxu0 0.0
    %3846 = vmatprep.subr.mxu0 0.0
    %3847 = vmatpush2.msra.mxu0 0.0
    %3848 = vmatprep.subr.mxu0 0.0
    %3849 = vmatpush2.msra.mxu0 0.0
    %3850 = vmatprep.subr.mxu0 0.0
    %3851 = vmatpush2.msra.mxu0 0.0
    %3852 = vmatprep.mubr.f32.mxu0 0.0
    %3853 = vmatmul.mubr.f32.gmra.mxu0 %v3784
    %v3854 = vpop.f32.mrf.mxu0
    %v3855 = vadd.f32 0.0, %v3854
    %v3856 = vpop.f32.mrf.mxu0
    %3857 = vdwg.mxu0
    %3860 = vrot.lane.b32.xlu0 %v3778, 3
    %v3861 = vpop.permute.xlu0 %3860
    %3862 = vrot.lane.b32.xlu0 %v3855, 3
    %v3863 = vpop.permute.xlu0 %3862
    %v3866 = vsel %vm725, %v3445, %v3861
    %v3867 = vsel %vm725, %v3521, %v3863
    %v3868 = vadd.f32 %v2761, %v3866
    %v3869 = vadd.f32 %v2762, %v3867
    %v3870 = vsel %vm2720, %v3868, 0.0
    %3871 = vadd.xlane.f32.xlu0 %v3870
    %v3872 = vpop.xlane.xlu0 %3871
    %v3873 = vsel %vm2720, %v3869, 0.0
    %3874 = vadd.xlane.f32.xlu0 %v3873
    %v3875 = vpop.xlane.xlu0 %3874
    %v3876 = vmul.f32 %v3872, %v1408
    %v3877 = vmul.f32 %v3875, %v1408
    %v3878 = vsub.f32 %v3868, %v3876
    %v3879 = vsub.f32 %v3869, %v3877
    %v3880 = vmul.f32 %v3878, %v3878
    %v3881 = vmul.f32 %v3879, %v3879
    %v3882 = vsel %vm2720, %v3880, 0.0
    %3883 = vadd.xlane.f32.xlu0 %v3882
    %v3884 = vpop.xlane.xlu0 %3883
    %v3885 = vsel %vm2720, %v3881, 0.0
    %3886 = vadd.xlane.f32.xlu0 %v3885
    %v3887 = vpop.xlane.xlu0 %3886
    %v3888 = vmul.f32 %v3884, %v1408
    %v3889 = vmul.f32 %v3887, %v1408
    %v3890 = vadd.f32 %v3888, 1e-05
    %v3891 = vadd.f32 %v3889, 1e-05
    %v3892 = vrsqrt.pop %v3890
    %v3893 = vrsqrt.pop %v3891
    %v3894 = vmul.f32 %v3878, %v3892
    %v3895 = vmul.f32 %v3879, %v3893
    %v3896 = vmul.f32 %v3894, %v2751
    %v3897 = vmul.f32 %v3895, %v2751
    %v3898 = vadd.f32 %v3896, %v2759
    %v3899 = vadd.f32 %v3897, %v2759
    %v3901 = vsel %vm288, %v3898, 0
    %v3904 = vsel %vm292, %v116, 0
    %3906 = vmatprep.subr.mxu0 0.0
    %3907 = vmatpush1.msra.mxu0 0.0
    %3908 = vmatprep.subr.mxu0 0.0
    %3909 = vmatpush1.msra.mxu0 0.0
    %3910 = vmatprep.subr.mxu0 0.0
    %3911 = vmatpush1.msra.mxu0 0.0
    %3912 = vmatprep.subr.mxu0 0.0
    %3913 = vmatpush1.msra.mxu0 0.0
    %3914 = vmatprep.subr.mxu0 0.0
    %3915 = vmatpush1.msra.mxu0 0.0
    %3916 = vmatprep.subr.mxu0 0.0
    %3917 = vmatpush1.msra.mxu0 0.0
    %3918 = vmatprep.subr.mxu0 0.0
    %3919 = vmatpush1.msra.mxu0 0.0
    %3920 = vmatprep.subr.mxu0 0.0
    %3921 = vmatpush1.msra.mxu0 0.0
    %3922 = vmatprep.subr.mxu0 0.0
    %3923 = vmatpush1.msra.mxu0 0.0
    %3924 = vmatprep.subr.mxu0 0.0
    %3925 = vmatpush1.msra.mxu0 0.0
    %3926 = vmatprep.subr.mxu0 0.0
    %3927 = vmatpush1.msra.mxu0 0.0
    %3928 = vmatprep.subr.mxu0 0.0
    %3929 = vmatpush1.msra.mxu0 0.0
    %3930 = vmatprep.subr.mxu0 0.0
    %3931 = vmatpush1.msra.mxu0 0.0
    %3932 = vmatprep.subr.mxu0 0.0
    %3933 = vmatpush1.msra.mxu0 0.0
    %3934 = vmatprep.subr.mxu0 0.0
    %3935 = vmatpush1.msra.mxu0 0.0
    %3936 = vmatprep.subr.mxu0 0.0
    %3937 = vmatpush1.msra.mxu0 %v3904
    %3938 = vmatprep.subr.mxu0 0.0
    %3939 = vmatpush2.msra.mxu0 0.0
    %3940 = vmatprep.subr.mxu0 0.0
    %3941 = vmatpush2.msra.mxu0 0.0
    %3942 = vmatprep.subr.mxu0 0.0
    %3943 = vmatpush2.msra.mxu0 0.0
    %3944 = vmatprep.subr.mxu0 0.0
    %3945 = vmatpush2.msra.mxu0 0.0
    %3946 = vmatprep.subr.mxu0 0.0
    %3947 = vmatpush2.msra.mxu0 0.0
    %3948 = vmatprep.subr.mxu0 0.0
    %3949 = vmatpush2.msra.mxu0 0.0
    %3950 = vmatprep.subr.mxu0 0.0
    %3951 = vmatpush2.msra.mxu0 0.0
    %3952 = vmatprep.subr.mxu0 0.0
    %3953 = vmatpush2.msra.mxu0 0.0
    %3954 = vmatprep.subr.mxu0 0.0
    %3955 = vmatpush2.msra.mxu0 0.0
    %3956 = vmatprep.subr.mxu0 0.0
    %3957 = vmatpush2.msra.mxu0 0.0
    %3958 = vmatprep.subr.mxu0 0.0
    %3959 = vmatpush2.msra.mxu0 0.0
    %3960 = vmatprep.subr.mxu0 0.0
    %3961 = vmatpush2.msra.mxu0 0.0
    %3962 = vmatprep.subr.mxu0 0.0
    %3963 = vmatpush2.msra.mxu0 0.0
    %3964 = vmatprep.subr.mxu0 0.0
    %3965 = vmatpush2.msra.mxu0 0.0
    %3966 = vmatprep.subr.mxu0 0.0
    %3967 = vmatpush2.msra.mxu0 0.0
    %3968 = vmatprep.subr.mxu0 0.0
    %3969 = vmatpush2.msra.mxu0 0.0
    %3970 = vmatprep.mubr.f32.mxu0 0.0
    %3971 = vmatmul.mubr.f32.gmra.mxu0 %v3901
    %v3972 = vpop.f32.mrf.mxu0
    %v3973 = vadd.f32 0.0, %v3972
    %v3974 = vpop.f32.mrf.mxu0
    %3975 = vdwg.mxu0
    %v3977 = vsel %vm288, %v3899, 0
    %3979 = vmatprep.subr.mxu0 0.0
    %3980 = vmatpush1.msra.mxu0 0.0
    %3981 = vmatprep.subr.mxu0 0.0
    %3982 = vmatpush1.msra.mxu0 0.0
    %3983 = vmatprep.subr.mxu0 0.0
    %3984 = vmatpush1.msra.mxu0 0.0
    %3985 = vmatprep.subr.mxu0 0.0
    %3986 = vmatpush1.msra.mxu0 0.0
    %3987 = vmatprep.subr.mxu0 0.0
    %3988 = vmatpush1.msra.mxu0 0.0
    %3989 = vmatprep.subr.mxu0 0.0
    %3990 = vmatpush1.msra.mxu0 0.0
    %3991 = vmatprep.subr.mxu0 0.0
    %3992 = vmatpush1.msra.mxu0 0.0
    %3993 = vmatprep.subr.mxu0 0.0
    %3994 = vmatpush1.msra.mxu0 0.0
    %3995 = vmatprep.subr.mxu0 0.0
    %3996 = vmatpush1.msra.mxu0 0.0
    %3997 = vmatprep.subr.mxu0 0.0
    %3998 = vmatpush1.msra.mxu0 0.0
    %3999 = vmatprep.subr.mxu0 0.0
    %4000 = vmatpush1.msra.mxu0 0.0
    %4001 = vmatprep.subr.mxu0 0.0
    %4002 = vmatpush1.msra.mxu0 0.0
    %4003 = vmatprep.subr.mxu0 0.0
    %4004 = vmatpush1.msra.mxu0 0.0
    %4005 = vmatprep.subr.mxu0 0.0
    %4006 = vmatpush1.msra.mxu0 0.0
    %4007 = vmatprep.subr.mxu0 0.0
    %4008 = vmatpush1.msra.mxu0 0.0
    %4009 = vmatprep.subr.mxu0 0.0
    %4010 = vmatpush1.msra.mxu0 %v3904
    %4011 = vmatprep.subr.mxu0 0.0
    %4012 = vmatpush2.msra.mxu0 0.0
    %4013 = vmatprep.subr.mxu0 0.0
    %4014 = vmatpush2.msra.mxu0 0.0
    %4015 = vmatprep.subr.mxu0 0.0
    %4016 = vmatpush2.msra.mxu0 0.0
    %4017 = vmatprep.subr.mxu0 0.0
    %4018 = vmatpush2.msra.mxu0 0.0
    %4019 = vmatprep.subr.mxu0 0.0
    %4020 = vmatpush2.msra.mxu0 0.0
    %4021 = vmatprep.subr.mxu0 0.0
    %4022 = vmatpush2.msra.mxu0 0.0
    %4023 = vmatprep.subr.mxu0 0.0
    %4024 = vmatpush2.msra.mxu0 0.0
    %4025 = vmatprep.subr.mxu0 0.0
    %4026 = vmatpush2.msra.mxu0 0.0
    %4027 = vmatprep.subr.mxu0 0.0
    %4028 = vmatpush2.msra.mxu0 0.0
    %4029 = vmatprep.subr.mxu0 0.0
    %4030 = vmatpush2.msra.mxu0 0.0
    %4031 = vmatprep.subr.mxu0 0.0
    %4032 = vmatpush2.msra.mxu0 0.0
    %4033 = vmatprep.subr.mxu0 0.0
    %4034 = vmatpush2.msra.mxu0 0.0
    %4035 = vmatprep.subr.mxu0 0.0
    %4036 = vmatpush2.msra.mxu0 0.0
    %4037 = vmatprep.subr.mxu0 0.0
    %4038 = vmatpush2.msra.mxu0 0.0
    %4039 = vmatprep.subr.mxu0 0.0
    %4040 = vmatpush2.msra.mxu0 0.0
    %4041 = vmatprep.subr.mxu0 0.0
    %4042 = vmatpush2.msra.mxu0 0.0
    %4043 = vmatprep.mubr.f32.mxu0 0.0
    %4044 = vmatmul.mubr.f32.gmra.mxu0 %v3977
    %v4045 = vpop.f32.mrf.mxu0
    %v4046 = vadd.f32 0.0, %v4045
    %v4047 = vpop.f32.mrf.mxu0
    %4048 = vdwg.mxu0
    %4049 = vst.msk [vmem:[%s15] sm:$0x1f] %vm2199, %v3973
    %4050 = vst.msk [vmem:[%s15 + $0x8] sm:$0x1f] %vm2199, %v4046
    // Predicated region
    $region82: #{transformer_forward_pallas.1} parent=1 // pred_check
      _
    $region83: #{transformer_forward_pallas.1} parent=1 // pred_check_branch
      %4052 = sbr.rel (0) target = $region85
    $region84: #{transformer_forward_pallas.1} parent=1 // pred_region
      _
    $region85: #{transformer_forward_pallas.1} parent=1 // pred_fallthru
      _
    // Predicated region
    $region86: #{transformer_forward_pallas.1} parent=1 // pred_check
      _
    $region87: #{transformer_forward_pallas.1} parent=1 // pred_check_branch
      %4054 = sbr.rel (0) target = $region89
    $region88: #{transformer_forward_pallas.1} parent=1 // pred_region
      _
    $region89: #{transformer_forward_pallas.1} parent=1 // pred_fallthru
      _
    %4055 = vsyncpa [#allocation3], 1
    %4056 = vsyncpa [#allocation5], 1
    %4057 = vsyncpa [#allocation8], 1

</llo_original>
